<compile_context>
chip_gen: v5e
topology: v5e:2x2
jax: 0.10.0
libtpu: 0.0.40
codegen_flags: <defaults>
</compile_context>

<pallas_src>
import functools

import jax
import jax.numpy as jnp
from jax.experimental import pallas as pl
from jax.experimental.pallas import tpu as pltpu

EPS = 1e-5      # nn.BatchNorm2d default
LANE = 128      # TPU lane width
OFF = 8         # 8-aligned sublane offset of the conv-scratch interior


def _round_up(x, m):
    return (x + m - 1) // m * m


# ---------------------------------------------------------------------------
# Kernel A (used for both conv blocks):
#   (BN affine + PReLU of the *previous* block; identity on the first call)
#   -> 3x3 conv on the MXU -> per-tile BN partial statistics.
# One grid step == one image of the batch.
# ---------------------------------------------------------------------------
def _affine_prelu_conv_kernel(x_ref, aff_ref, alpha_ref, w_ref,
                              y_ref, st_ref, pad_ref):
    # x_ref:     (1, H, W, Cp) f32   activation tile (lane-dense channels)
    # aff_ref:   (2, Cp)      f32    rows = [scale, shift] of preceding BN
    # alpha_ref: (1, Cp)      f32    PReLU slope (ones => identity)
    # w_ref:     (3, 3*Cp, Cp)       kw-folded conv weights (K = kw*Cp + cin)
    # y_ref:     (1, H, W, Cp) f32   pre-BN conv output
    # st_ref:    (1, 2, Cp)   f32    per-tile [sum, sum_sq] over H*W pixels
    # pad_ref:   (H+2, Wp, Cp)       zero-halo staging scratch (MXU dtype)
    _, H, W, Cp = x_ref.shape
    Wp = pad_ref.shape[1]
    cdt = pad_ref.dtype

    # ---- preceding BN affine + PReLU (identity constants on the 1st conv) --
    scale = aff_ref[0:1, :].reshape(1, 1, Cp)
    shift = aff_ref[1:2, :].reshape(1, 1, Cp)
    alpha = alpha_ref[...].reshape(1, 1, Cp)
    v = x_ref[0] * scale + shift                       # (H, W, Cp), f32
    v = jnp.where(v > 0, v, alpha * v)

    # ---- stage into the zero-halo scratch (cast to the MXU dtype).  The halo
    # strips are re-zeroed every grid step: the scratch persists across steps
    # and with a "parallel" batch axis a core may start at any step, so we
    # never rely on step-0 initialization.  OFF and W are multiples of 8, so
    # every store below is sublane/lane aligned (unmasked). ----
    zrow = jnp.zeros((1, Wp, Cp), cdt)
    pad_ref[0:1, :, :] = zrow                              # top halo row
    pad_ref[H + 1:H + 2, :, :] = zrow                      # bottom halo row
    zcol = jnp.zeros((H, OFF, Cp), cdt)
    pad_ref[1:H + 1, 0:OFF, :] = zcol                      # left strip (halo col)
    pad_ref[1:H + 1, W + OFF:W + 2 * OFF, :] = zcol        # right strip (halo col)
    pad_ref[1:H + 1, OFF:W + OFF, :] = v.astype(cdt)       # interior

    # ---- 3x3 conv: per output-row chunk, 3 MXU matmuls with K = 3*Cp (the
    # kw taps are folded into the contraction), accumulated as a value and
    # written once -- no per-tap round-trips through a VMEM accumulator. ----
    TH = 8 if H % 8 == 0 else H                        # rows per chunk (tunable)
    s_tot = jnp.zeros((1, Cp), jnp.float32)
    ss_tot = jnp.zeros((1, Cp), jnp.float32)
    for r0 in range(0, H, TH):
        acc = None
        for kh in range(3):
            # (TH, W, 3*Cp): three horizontally shifted neighbours along lanes.
            op = jnp.concatenate(
                [pad_ref[r0 + kh:r0 + kh + TH, kw + OFF - 1:kw + OFF - 1 + W, :]
                 for kw in range(3)],
                axis=-1).reshape(TH * W, 3 * Cp)
            part = jnp.dot(op, w_ref[kh], preferred_element_type=jnp.float32)
            acc = part if acc is None else acc + part
        y_ref[:, r0:r0 + TH, :, :] = acc.reshape(1, TH, W, Cp)
        s_tot = s_tot + jnp.sum(acc, axis=0, keepdims=True)
        ss_tot = ss_tot + jnp.sum(acc * acc, axis=0, keepdims=True)

    st_ref[...] = jnp.concatenate([s_tot, ss_tot], axis=0).reshape(1, 2, Cp)


# ---------------------------------------------------------------------------
# Kernel B: apply BN2 (precomputed full-batch scale/shift) + residual add.
# ---------------------------------------------------------------------------
def _bn_residual_kernel(y_ref, aff_ref, x_ref, o_ref):
    Cp = y_ref.shape[-1]
    scale = aff_ref[0:1, :].reshape(1, 1, 1, Cp)
    shift = aff_ref[1:2, :].reshape(1, 1, 1, Cp)
    o_ref[...] = y_ref[...] * scale + shift + x_ref[...]


# ---------------------------------------------------------------------------
# Host-side helpers.
# ---------------------------------------------------------------------------
def _prep_conv_weight(w_oihw, cp, dtype):
    """(Cout, Cin, 3, 3) PyTorch layout -> kw-folded (3, 3*Cp, Cp).

    Row index of the contraction = kw*Cp + cin (matches the in-kernel concat
    order).  Zero padding stays exactly zero after the dtype cast, which keeps
    the padded output lanes exactly zero.
    """
    w = jnp.transpose(w_oihw, (2, 3, 1, 0)).astype(jnp.float32)   # HWIO
    kh, kw, ci, co = w.shape
    w = jnp.pad(w, ((0, 0), (0, 0), (0, cp - ci), (0, cp - co)))
    return w.reshape(kh, kw * cp, cp).astype(dtype)


def _prep_vec(v, cp, pad_value=0.0):
    v = v.astype(jnp.float32).reshape(1, -1)
    return jnp.pad(v, ((0, 0), (0, cp - v.shape[1])), constant_values=pad_value)


def _bn_affine(stats, gamma_p, beta_p, count):
    """(grid, 2, Cp) partial [sum, sum_sq] -> (2, Cp) [scale, shift] (f32)."""
    s = jnp.sum(stats[:, 0, :], axis=0)
    ss = jnp.sum(stats[:, 1, :], axis=0)
    mean = s / count
    # TODO(synk): one-pass E[y^2]-E[y]^2 can cancel catastrophically for very
    # large counts / large mean-to-std ratios; use a centered second pass if
    # tighter tolerances are ever required.
    var = jnp.maximum(ss / count - mean * mean, 0.0)       # biased variance
    scale = gamma_p[0] * jax.lax.rsqrt(var + EPS)
    shift = beta_p[0] - mean * scale
    return jnp.stack([scale, shift], axis=0)               # (2, Cp)


def _vmem_limit_bytes():
    cap = 64 * 1024 * 1024                    # conservative default (v7x/core)
    try:
        cap = int(getattr(pltpu.get_tpu_info(), "vmem_capacity_bytes", cap))
    except Exception:
        pass
    # Headroom for the implicit tap-staging / reshape temporaries.
    return max(32 * 1024 * 1024, int(cap * 0.85))


# ---------------------------------------------------------------------------
# Full residual block.
# ---------------------------------------------------------------------------
@functools.partial(jax.jit, static_argnames=("mxu_dtype",))
def residual_block(x_nchw, w1_oihw, g1, b1, a1, w2_oihw, g2, b2,
                   mxu_dtype=jnp.bfloat16):
    """x_nchw: (N, C, H, W) float32.  Returns (N, C, H, W) float32."""
    N, C, H, W = x_nchw.shape
    assert W % 8 == 0, "W must be a multiple of 8 (sublane-aligned layout)"
    Cp = max(LANE, _round_up(C, LANE))
    Wp = W + 2 * OFF                              # 8-aligned padded scratch width
    M = N * H * W

    # NCHW -> lane-dense NHWC (channels zero-padded to 128 lanes).
    x = jnp.transpose(x_nchw, (0, 2, 3, 1)).astype(jnp.float32)
    x = jnp.pad(x, ((0, 0), (0, 0), (0, 0), (0, Cp - C)))

    w1p = _prep_conv_weight(w1_oihw, Cp, mxu_dtype)
    w2p = _prep_conv_weight(w2_oihw, Cp, mxu_dtype)
    g1p, b1p = _prep_vec(g1, Cp, 1.0), _prep_vec(b1, Cp, 0.0)
    g2p, b2p = _prep_vec(g2, Cp, 1.0), _prep_vec(b2, Cp, 0.0)
    alpha1 = _prep_vec(a1, Cp, 0.0)
    id_aff = jnp.concatenate([jnp.ones((1, Cp), jnp.float32),
                              jnp.zeros((1, Cp), jnp.float32)], axis=0)
    id_alpha = jnp.ones((1, Cp), jnp.float32)

    vmem_limit = _vmem_limit_bytes()

    # Block specs: activations tiled one image per grid step; weights and the
    # small BN/PReLU vectors use a constant index_map so they are DMA'd once
    # and stay VMEM-resident across grid steps.
    act_spec = pl.BlockSpec((1, H, W, Cp), lambda n: (n, 0, 0, 0))
    aff_spec = pl.BlockSpec((2, Cp), lambda n: (0, 0))
    alpha_spec = pl.BlockSpec((1, Cp), lambda n: (0, 0))
    w_spec = pl.BlockSpec((3, 3 * Cp, Cp), lambda n: (0, 0, 0))
    st_spec = pl.BlockSpec((1, 2, Cp), lambda n: (n, 0, 0))

    conv_cost = pl.CostEstimate(
        flops=2 * M * 9 * Cp * Cp + 12 * M * Cp,
        transcendentals=0,
        bytes_accessed=4 * 2 * M * Cp
        + 2 * 9 * Cp * Cp * jnp.dtype(mxu_dtype).itemsize)

    conv_pass = pl.pallas_call(
        _affine_prelu_conv_kernel,
        grid=(N,),
        in_specs=[act_spec, aff_spec, alpha_spec, w_spec],
        out_specs=(act_spec, st_spec),
        out_shape=(jax.ShapeDtypeStruct((N, H, W, Cp), jnp.float32),
                   jax.ShapeDtypeStruct((N, 2, Cp), jnp.float32)),
        scratch_shapes=[pltpu.VMEM((H + 2, Wp, Cp), mxu_dtype)],
        compiler_params=pltpu.CompilerParams(
            dimension_semantics=("parallel",),
            vmem_limit_bytes=vmem_limit),
        cost_estimate=conv_cost,
    )

    # Pass 1: conv1 + BN1 partial stats (identity pre-activation).
    y1, st1 = conv_pass(x, id_aff, id_alpha, w1p)
    aff1 = _bn_affine(st1, g1p, b1p, M)
    # Pass 2: BN1-apply + PReLU + conv2 + BN2 partial stats.
    y2, st2 = conv_pass(y1, aff1, alpha1, w2p)
    aff2 = _bn_affine(st2, g2p, b2p, M)

    # Pass 3: BN2-apply + residual add (lane-dense elementwise).
    out = pl.pallas_call(
        _bn_residual_kernel,
        grid=(N,),
        in_specs=[act_spec, aff_spec, act_spec],
        out_specs=act_spec,
        out_shape=jax.ShapeDtypeStruct((N, H, W, Cp), jnp.float32),
        compiler_params=pltpu.CompilerParams(
            dimension_semantics=("parallel",),
            vmem_limit_bytes=vmem_limit),
        cost_estimate=pl.CostEstimate(flops=3 * M * Cp, transcendentals=0,
                                      bytes_accessed=4 * 4 * M * Cp),
    )(y2, aff2, x)

    out = out[:, :, :, :C]
    return jnp.transpose(out, (0, 3, 1, 2))                 # NHWC -> NCHW


# ---------------- pure-JAX reference (for correctness check) ----------------
def residual_block_ref(x_nchw, w1_oihw, g1, b1, a1, w2_oihw, g2, b2):
    x = jnp.transpose(x_nchw, (0, 2, 3, 1))
    w1 = jnp.transpose(w1_oihw, (2, 3, 1, 0))
    w2 = jnp.transpose(w2_oihw, (2, 3, 1, 0))

    def conv(v, w):
        return jax.lax.conv_general_dilated(
            v, w, (1, 1), 'SAME', dimension_numbers=('NHWC', 'HWIO', 'NHWC'))

    def bn(y, g, b):
        m = jnp.mean(y, axis=(0, 1, 2), keepdims=True)
        v = jnp.mean((y - m) ** 2, axis=(0, 1, 2), keepdims=True)
        return (y - m) * jax.lax.rsqrt(v + EPS) * g.reshape(1, 1, 1, -1) \
            + b.reshape(1, 1, 1, -1)

    y = bn(conv(x, w1), g1, b1)
    y = jnp.where(y > 0, y, a1.reshape(1, 1, 1, -1) * y)
    y = bn(conv(y, w2), g2, b2)
    return jnp.transpose(y + x, (0, 3, 1, 2))


if __name__ == "__main__":
    key = jax.random.PRNGKey(0)
    N, C, H, W = 2, 4, 16, 16
    ks = jax.random.split(key, 8)

    x = jax.random.normal(ks[0], (N, C, H, W), jnp.float32)

    # Conv weights in PyTorch (Cout, Cin, kh, kw) layout (bias=False: BN on).
    w1 = 0.1 * jax.random.normal(ks[1], (C, C, 3, 3), jnp.float32)
    w2 = 0.1 * jax.random.normal(ks[2], (C, C, 3, 3), jnp.float32)

    # BatchNorm affine params (non-trivial) and PReLU alpha (default 0.25/chan).
    g1 = 1.0 + 0.1 * jax.random.normal(ks[3], (C,), jnp.float32)
    b1 = 0.1 * jax.random.normal(ks[4], (C,), jnp.float32)
    g2 = 1.0 + 0.1 * jax.random.normal(ks[5], (C,), jnp.float32)
    b2 = 0.1 * jax.random.normal(ks[6], (C,), jnp.float32)
    a1 = jnp.full((C,), 0.25, jnp.float32)

    ref = residual_block_ref(x, w1, g1, b1, a1, w2, g2, b2)

    # Strict numeric check: f32 MXU operands must match the f32 reference.
    out_f32 = jax.block_until_ready(
        residual_block(x, w1, g1, b1, a1, w2, g2, b2, mxu_dtype=jnp.float32))
    assert out_f32.shape == (N, C, H, W)
    err32 = float(jnp.max(jnp.abs(out_f32 - ref)))
    assert jnp.allclose(out_f32, ref, rtol=1e-4, atol=1e-4), err32

    # Fast path: bf16 MXU operands with f32 accumulation (production default);
    # tolerance reflects bf16 rounding through two convs + two BNs.
    out_bf16 = jax.block_until_ready(
        residual_block(x, w1, g1, b1, a1, w2, g2, b2, mxu_dtype=jnp.bfloat16))
    assert out_bf16.shape == (N, C, H, W)
    err16 = float(jnp.max(jnp.abs(out_bf16 - ref)))
    assert jnp.allclose(out_bf16, ref, rtol=5e-2, atol=5e-2), err16

    print("KERNEL_OK")
</pallas_src>

<mosaic_0001>
module attributes {stable_mosaic.version = 11 : i64} {
  func.func @_affine_prelu_conv_kernel(%arg0: i32, %arg1: memref<1x16x16x128xf32, #tpu.memory_space<vmem>>, %arg2: memref<2x128xf32, #tpu.memory_space<vmem>>, %arg3: memref<1x128xf32, #tpu.memory_space<vmem>>, %arg4: memref<3x384x128xf32, #tpu.memory_space<vmem>>, %arg5: memref<1x16x16x128xf32, #tpu.memory_space<vmem>>, %arg6: memref<1x2x128xf32, #tpu.memory_space<vmem>>, %arg7: memref<18x32x128xf32, #tpu.memory_space<vmem>>) attributes {dimension_semantics = [#tpu.dimension_semantics<parallel>], iteration_bounds = array<i64: 2>, scalar_prefetch = 0 : i64, scratch_operands = 1 : i64, tpu.core_type = #tpu.core_type<tc>, window_params = [{transform_indices = @transform_0, window_bounds = array<i64: 1, 16, 16, 128>}, {pipeline_mode = #tpu.pipeline_mode<synchronous>, transform_indices = @transform_1, window_bounds = array<i64: 2, 128>}, {pipeline_mode = #tpu.pipeline_mode<synchronous>, transform_indices = @transform_2, window_bounds = array<i64: 1, 128>}, {pipeline_mode = #tpu.pipeline_mode<synchronous>, transform_indices = @transform_3, window_bounds = array<i64: 3, 384, 128>}, {transform_indices = @transform_4, window_bounds = array<i64: 1, 16, 16, 128>}, {transform_indices = @transform_5, window_bounds = array<i64: 1, 2, 128>}]} {
    %c0 = arith.constant 0 : index
    %c0_0 = arith.constant 0 : index
    %0 = vector.load %arg2[%c0, %c0_0] : memref<2x128xf32, #tpu.memory_space<vmem>>, vector<1x128xf32>
    %1 = vector.shape_cast %0 : vector<1x128xf32> to vector<1x1x128xf32>
    %c1 = arith.constant 1 : index
    %c0_1 = arith.constant 0 : index
    %2 = vector.load %arg2[%c1, %c0_1] : memref<2x128xf32, #tpu.memory_space<vmem>>, vector<1x128xf32>
    %3 = vector.shape_cast %2 : vector<1x128xf32> to vector<1x1x128xf32>
    %c0_2 = arith.constant 0 : index
    %c0_3 = arith.constant 0 : index
    %4 = vector.load %arg3[%c0_2, %c0_3] : memref<1x128xf32, #tpu.memory_space<vmem>>, vector<1x128xf32>
    %5 = vector.shape_cast %4 : vector<1x128xf32> to vector<1x1x128xf32>
    %c0_4 = arith.constant 0 : index
    %c0_5 = arith.constant 0 : index
    %c0_6 = arith.constant 0 : index
    %c0_7 = arith.constant 0 : index
    %6 = vector.load %arg1[%c0_4, %c0_5, %c0_6, %c0_7] : memref<1x16x16x128xf32, #tpu.memory_space<vmem>>, vector<1x16x16x128xf32>
    %7 = vector.shape_cast %6 : vector<1x16x16x128xf32> to vector<16x16x128xf32>
    %8 = vector.broadcast %1 : vector<1x1x128xf32> to vector<16x16x128xf32>
    %9 = arith.mulf %7, %8 : vector<16x16x128xf32>
    %10 = vector.broadcast %3 : vector<1x1x128xf32> to vector<16x16x128xf32>
    %11 = arith.addf %9, %10 : vector<16x16x128xf32>
    %cst = arith.constant 0.000000e+00 : f32
    %12 = vector.broadcast %cst : f32 to vector<16x16x128xf32>
    %13 = arith.cmpf ogt, %11, %12 : vector<16x16x128xf32>
    %14 = vector.broadcast %5 : vector<1x1x128xf32> to vector<16x16x128xf32>
    %15 = arith.mulf %14, %11 : vector<16x16x128xf32>
    %16 = arith.select %13, %11, %15 : vector<16x16x128xi1>, vector<16x16x128xf32>
    %cst_8 = arith.constant 0.000000e+00 : f32
    %17 = vector.broadcast %cst_8 : f32 to vector<1x32x128xf32>
    %c0_9 = arith.constant 0 : index
    %c0_10 = arith.constant 0 : index
    %c0_11 = arith.constant 0 : index
    %18 = vector.load %arg7[%c0_9, %c0_10, %c0_11] : memref<18x32x128xf32, #tpu.memory_space<vmem>>, vector<1x32x128xf32>
    tpu.vector_store %arg7[%c0_9, %c0_10, %c0_11], %17 {strides = array<i32>} : memref<18x32x128xf32, #tpu.memory_space<vmem>>, vector<1x32x128xf32>,
    %c17 = arith.constant 17 : index
    %c0_12 = arith.constant 0 : index
    %c0_13 = arith.constant 0 : index
    %19 = vector.load %arg7[%c17, %c0_12, %c0_13] : memref<18x32x128xf32, #tpu.memory_space<vmem>>, vector<1x32x128xf32>
    tpu.vector_store %arg7[%c17, %c0_12, %c0_13], %17 {strides = array<i32>} : memref<18x32x128xf32, #tpu.memory_space<vmem>>, vector<1x32x128xf32>,
    %cst_14 = arith.constant 0.000000e+00 : f32
    %20 = vector.broadcast %cst_14 : f32 to vector<16x8x128xf32>
    %c1_15 = arith.constant 1 : index
    %c0_16 = arith.constant 0 : index
    %c0_17 = arith.constant 0 : index
    %21 = vector.load %arg7[%c1_15, %c0_16, %c0_17] : memref<18x32x128xf32, #tpu.memory_space<vmem>>, vector<16x8x128xf32>
    tpu.vector_store %arg7[%c1_15, %c0_16, %c0_17], %20 {strides = array<i32>} : memref<18x32x128xf32, #tpu.memory_space<vmem>>, vector<16x8x128xf32>,
    %c1_18 = arith.constant 1 : index
    %c24 = arith.constant 24 : index
    %c0_19 = arith.constant 0 : index
    %22 = vector.load %arg7[%c1_18, %c24, %c0_19] : memref<18x32x128xf32, #tpu.memory_space<vmem>>, vector<16x8x128xf32>
    tpu.vector_store %arg7[%c1_18, %c24, %c0_19], %20 {strides = array<i32>} : memref<18x32x128xf32, #tpu.memory_space<vmem>>, vector<16x8x128xf32>,
    %c1_20 = arith.constant 1 : index
    %c8 = arith.constant 8 : index
    %c0_21 = arith.constant 0 : index
    %23 = vector.load %arg7[%c1_20, %c8, %c0_21] : memref<18x32x128xf32, #tpu.memory_space<vmem>>, vector<16x16x128xf32>
    tpu.vector_store %arg7[%c1_20, %c8, %c0_21], %16 {strides = array<i32>} : memref<18x32x128xf32, #tpu.memory_space<vmem>>, vector<16x16x128xf32>,
    %cst_22 = arith.constant 0.000000e+00 : f32
    %24 = vector.broadcast %cst_22 : f32 to vector<1x128xf32>
    %cst_23 = arith.constant 0.000000e+00 : f32
    %25 = vector.broadcast %cst_23 : f32 to vector<1x128xf32>
    %c0_24 = arith.constant 0 : index
    %c7 = arith.constant 7 : index
    %c0_25 = arith.constant 0 : index
    %26 = vector.load %arg7[%c0_24, %c7, %c0_25] : memref<18x32x128xf32, #tpu.memory_space<vmem>>, vector<8x16x128xf32>
    %c0_26 = arith.constant 0 : index
    %c8_27 = arith.constant 8 : index
    %c0_28 = arith.constant 0 : index
    %27 = vector.load %arg7[%c0_26, %c8_27, %c0_28] : memref<18x32x128xf32, #tpu.memory_space<vmem>>, vector<8x16x128xf32>
    %c0_29 = arith.constant 0 : index
    %c9 = arith.constant 9 : index
    %c0_30 = arith.constant 0 : index
    %28 = vector.load %arg7[%c0_29, %c9, %c0_30] : memref<18x32x128xf32, #tpu.memory_space<vmem>>, vector<8x16x128xf32>
    %29 = tpu.concatenate %26, %27, %28 in 2 : vector<8x16x128xf32>, vector<8x16x128xf32>, vector<8x16x128xf32> -> vector<8x16x384xf32>
    %30 = vector.shape_cast %29 : vector<8x16x384xf32> to vector<128x384xf32>
    %c0_31 = arith.constant 0 : index
    %c0_32 = arith.constant 0 : index
    %c0_33 = arith.constant 0 : index
    %31 = vector.load %arg4[%c0_31, %c0_32, %c0_33] : memref<3x384x128xf32, #tpu.memory_space<vmem>>, vector<1x384x128xf32>
    %32 = vector.shape_cast %31 : vector<1x384x128xf32> to vector<384x128xf32>
    %cst_34 = arith.constant dense<0.000000e+00> : vector<128x128xf32>
    %33 = tpu.matmul %30, %32, %cst_34 {dimension_numbers = #tpu.dot_dimension_numbers<[1], [0], [0], [1], [0, 0, 1, 1], [], []>} : vector<128x384xf32>, vector<384x128xf32>, vector<128x128xf32> -> vector<128x128xf32>
    %c1_35 = arith.constant 1 : index
    %c7_36 = arith.constant 7 : index
    %c0_37 = arith.constant 0 : index
    %34 = vector.load %arg7[%c1_35, %c7_36, %c0_37] : memref<18x32x128xf32, #tpu.memory_space<vmem>>, vector<8x16x128xf32>
    %c1_38 = arith.constant 1 : index
    %c8_39 = arith.constant 8 : index
    %c0_40 = arith.constant 0 : index
    %35 = vector.load %arg7[%c1_38, %c8_39, %c0_40] : memref<18x32x128xf32, #tpu.memory_space<vmem>>, vector<8x16x128xf32>
    %c1_41 = arith.constant 1 : index
    %c9_42 = arith.constant 9 : index
    %c0_43 = arith.constant 0 : index
    %36 = vector.load %arg7[%c1_41, %c9_42, %c0_43] : memref<18x32x128xf32, #tpu.memory_space<vmem>>, vector<8x16x128xf32>
    %37 = tpu.concatenate %34, %35, %36 in 2 : vector<8x16x128xf32>, vector<8x16x128xf32>, vector<8x16x128xf32> -> vector<8x16x384xf32>
    %38 = vector.shape_cast %37 : vector<8x16x384xf32> to vector<128x384xf32>
    %c1_44 = arith.constant 1 : index
    %c0_45 = arith.constant 0 : index
    %c0_46 = arith.constant 0 : index
    %39 = vector.load %arg4[%c1_44, %c0_45, %c0_46] : memref<3x384x128xf32, #tpu.memory_space<vmem>>, vector<1x384x128xf32>
    %40 = vector.shape_cast %39 : vector<1x384x128xf32> to vector<384x128xf32>
    %cst_47 = arith.constant dense<0.000000e+00> : vector<128x128xf32>
    %41 = tpu.matmul %38, %40, %cst_47 {dimension_numbers = #tpu.dot_dimension_numbers<[1], [0], [0], [1], [0, 0, 1, 1], [], []>} : vector<128x384xf32>, vector<384x128xf32>, vector<128x128xf32> -> vector<128x128xf32>
    %42 = arith.addf %33, %41 : vector<128x128xf32>
    %c2 = arith.constant 2 : index
    %c7_48 = arith.constant 7 : index
    %c0_49 = arith.constant 0 : index
    %43 = vector.load %arg7[%c2, %c7_48, %c0_49] : memref<18x32x128xf32, #tpu.memory_space<vmem>>, vector<8x16x128xf32>
    %c2_50 = arith.constant 2 : index
    %c8_51 = arith.constant 8 : index
    %c0_52 = arith.constant 0 : index
    %44 = vector.load %arg7[%c2_50, %c8_51, %c0_52] : memref<18x32x128xf32, #tpu.memory_space<vmem>>, vector<8x16x128xf32>
    %c2_53 = arith.constant 2 : index
    %c9_54 = arith.constant 9 : index
    %c0_55 = arith.constant 0 : index
    %45 = vector.load %arg7[%c2_53, %c9_54, %c0_55] : memref<18x32x128xf32, #tpu.memory_space<vmem>>, vector<8x16x128xf32>
    %46 = tpu.concatenate %43, %44, %45 in 2 : vector<8x16x128xf32>, vector<8x16x128xf32>, vector<8x16x128xf32> -> vector<8x16x384xf32>
    %47 = vector.shape_cast %46 : vector<8x16x384xf32> to vector<128x384xf32>
    %c2_56 = arith.constant 2 : index
    %c0_57 = arith.constant 0 : index
    %c0_58 = arith.constant 0 : index
    %48 = vector.load %arg4[%c2_56, %c0_57, %c0_58] : memref<3x384x128xf32, #tpu.memory_space<vmem>>, vector<1x384x128xf32>
    %49 = vector.shape_cast %48 : vector<1x384x128xf32> to vector<384x128xf32>
    %cst_59 = arith.constant dense<0.000000e+00> : vector<128x128xf32>
    %50 = tpu.matmul %47, %49, %cst_59 {dimension_numbers = #tpu.dot_dimension_numbers<[1], [0], [0], [1], [0, 0, 1, 1], [], []>} : vector<128x384xf32>, vector<384x128xf32>, vector<128x128xf32> -> vector<128x128xf32>
    %51 = arith.addf %42, %50 : vector<128x128xf32>
    %52 = vector.shape_cast %51 : vector<128x128xf32> to vector<1x8x16x128xf32>
    %c0_60 = arith.constant 0 : index
    %c0_61 = arith.constant 0 : index
    %c0_62 = arith.constant 0 : index
    %c0_63 = arith.constant 0 : index
    %53 = vector.load %arg5[%c0_60, %c0_61, %c0_62, %c0_63] : memref<1x16x16x128xf32, #tpu.memory_space<vmem>>, vector<1x8x16x128xf32>
    tpu.vector_store %arg5[%c0_60, %c0_61, %c0_62, %c0_63], %52 {strides = array<i32>} : memref<1x16x16x128xf32, #tpu.memory_space<vmem>>, vector<1x8x16x128xf32>,
    %cst_64 = arith.constant dense<0.000000e+00> : vector<128xf32>
    %54 = vector.multi_reduction <add>, %51, %cst_64 [0] : vector<128x128xf32> to vector<128xf32>
    %55 = vector.shape_cast %54 : vector<128xf32> to vector<1x128xf32>
    %56 = arith.addf %24, %55 : vector<1x128xf32>
    %57 = arith.mulf %51, %51 : vector<128x128xf32>
    %cst_65 = arith.constant dense<0.000000e+00> : vector<128xf32>
    %58 = vector.multi_reduction <add>, %57, %cst_65 [0] : vector<128x128xf32> to vector<128xf32>
    %59 = vector.shape_cast %58 : vector<128xf32> to vector<1x128xf32>
    %60 = arith.addf %25, %59 : vector<1x128xf32>
    %c8_66 = arith.constant 8 : index
    %c7_67 = arith.constant 7 : index
    %c0_68 = arith.constant 0 : index
    %61 = vector.load %arg7[%c8_66, %c7_67, %c0_68] : memref<18x32x128xf32, #tpu.memory_space<vmem>>, vector<8x16x128xf32>
    %c8_69 = arith.constant 8 : index
    %c8_70 = arith.constant 8 : index
    %c0_71 = arith.constant 0 : index
    %62 = vector.load %arg7[%c8_69, %c8_70, %c0_71] : memref<18x32x128xf32, #tpu.memory_space<vmem>>, vector<8x16x128xf32>
    %c8_72 = arith.constant 8 : index
    %c9_73 = arith.constant 9 : index
    %c0_74 = arith.constant 0 : index
    %63 = vector.load %arg7[%c8_72, %c9_73, %c0_74] : memref<18x32x128xf32, #tpu.memory_space<vmem>>, vector<8x16x128xf32>
    %64 = tpu.concatenate %61, %62, %63 in 2 : vector<8x16x128xf32>, vector<8x16x128xf32>, vector<8x16x128xf32> -> vector<8x16x384xf32>
    %65 = vector.shape_cast %64 : vector<8x16x384xf32> to vector<128x384xf32>
    %c0_75 = arith.constant 0 : index
    %c0_76 = arith.constant 0 : index
    %c0_77 = arith.constant 0 : index
    %66 = vector.load %arg4[%c0_75, %c0_76, %c0_77] : memref<3x384x128xf32, #tpu.memory_space<vmem>>, vector<1x384x128xf32>
    %67 = vector.shape_cast %66 : vector<1x384x128xf32> to vector<384x128xf32>
    %cst_78 = arith.constant dense<0.000000e+00> : vector<128x128xf32>
    %68 = tpu.matmul %65, %67, %cst_78 {dimension_numbers = #tpu.dot_dimension_numbers<[1], [0], [0], [1], [0, 0, 1, 1], [], []>} : vector<128x384xf32>, vector<384x128xf32>, vector<128x128xf32> -> vector<128x128xf32>
    %c9_79 = arith.constant 9 : index
    %c7_80 = arith.constant 7 : index
    %c0_81 = arith.constant 0 : index
    %69 = vector.load %arg7[%c9_79, %c7_80, %c0_81] : memref<18x32x128xf32, #tpu.memory_space<vmem>>, vector<8x16x128xf32>
    %c9_82 = arith.constant 9 : index
    %c8_83 = arith.constant 8 : index
    %c0_84 = arith.constant 0 : index
    %70 = vector.load %arg7[%c9_82, %c8_83, %c0_84] : memref<18x32x128xf32, #tpu.memory_space<vmem>>, vector<8x16x128xf32>
    %c9_85 = arith.constant 9 : index
    %c9_86 = arith.constant 9 : index
    %c0_87 = arith.constant 0 : index
    %71 = vector.load %arg7[%c9_85, %c9_86, %c0_87] : memref<18x32x128xf32, #tpu.memory_space<vmem>>, vector<8x16x128xf32>
    %72 = tpu.concatenate %69, %70, %71 in 2 : vector<8x16x128xf32>, vector<8x16x128xf32>, vector<8x16x128xf32> -> vector<8x16x384xf32>
    %73 = vector.shape_cast %72 : vector<8x16x384xf32> to vector<128x384xf32>
    %c1_88 = arith.constant 1 : index
    %c0_89 = arith.constant 0 : index
    %c0_90 = arith.constant 0 : index
    %74 = vector.load %arg4[%c1_88, %c0_89, %c0_90] : memref<3x384x128xf32, #tpu.memory_space<vmem>>, vector<1x384x128xf32>
    %75 = vector.shape_cast %74 : vector<1x384x128xf32> to vector<384x128xf32>
    %cst_91 = arith.constant dense<0.000000e+00> : vector<128x128xf32>
    %76 = tpu.matmul %73, %75, %cst_91 {dimension_numbers = #tpu.dot_dimension_numbers<[1], [0], [0], [1], [0, 0, 1, 1], [], []>} : vector<128x384xf32>, vector<384x128xf32>, vector<128x128xf32> -> vector<128x128xf32>
    %77 = arith.addf %68, %76 : vector<128x128xf32>
    %c10 = arith.constant 10 : index
    %c7_92 = arith.constant 7 : index
    %c0_93 = arith.constant 0 : index
    %78 = vector.load %arg7[%c10, %c7_92, %c0_93] : memref<18x32x128xf32, #tpu.memory_space<vmem>>, vector<8x16x128xf32>
    %c10_94 = arith.constant 10 : index
    %c8_95 = arith.constant 8 : index
    %c0_96 = arith.constant 0 : index
    %79 = vector.load %arg7[%c10_94, %c8_95, %c0_96] : memref<18x32x128xf32, #tpu.memory_space<vmem>>, vector<8x16x128xf32>
    %c10_97 = arith.constant 10 : index
    %c9_98 = arith.constant 9 : index
    %c0_99 = arith.constant 0 : index
    %80 = vector.load %arg7[%c10_97, %c9_98, %c0_99] : memref<18x32x128xf32, #tpu.memory_space<vmem>>, vector<8x16x128xf32>
    %81 = tpu.concatenate %78, %79, %80 in 2 : vector<8x16x128xf32>, vector<8x16x128xf32>, vector<8x16x128xf32> -> vector<8x16x384xf32>
    %82 = vector.shape_cast %81 : vector<8x16x384xf32> to vector<128x384xf32>
    %c2_100 = arith.constant 2 : index
    %c0_101 = arith.constant 0 : index
    %c0_102 = arith.constant 0 : index
    %83 = vector.load %arg4[%c2_100, %c0_101, %c0_102] : memref<3x384x128xf32, #tpu.memory_space<vmem>>, vector<1x384x128xf32>
    %84 = vector.shape_cast %83 : vector<1x384x128xf32> to vector<384x128xf32>
    %cst_103 = arith.constant dense<0.000000e+00> : vector<128x128xf32>
    %85 = tpu.matmul %82, %84, %cst_103 {dimension_numbers = #tpu.dot_dimension_numbers<[1], [0], [0], [1], [0, 0, 1, 1], [], []>} : vector<128x384xf32>, vector<384x128xf32>, vector<128x128xf32> -> vector<128x128xf32>
    %86 = arith.addf %77, %85 : vector<128x128xf32>
    %87 = vector.shape_cast %86 : vector<128x128xf32> to vector<1x8x16x128xf32>
    %c0_104 = arith.constant 0 : index
    %c8_105 = arith.constant 8 : index
    %c0_106 = arith.constant 0 : index
    %c0_107 = arith.constant 0 : index
    %88 = vector.load %arg5[%c0_104, %c8_105, %c0_106, %c0_107] : memref<1x16x16x128xf32, #tpu.memory_space<vmem>>, vector<1x8x16x128xf32>
    tpu.vector_store %arg5[%c0_104, %c8_105, %c0_106, %c0_107], %87 {strides = array<i32>} : memref<1x16x16x128xf32, #tpu.memory_space<vmem>>, vector<1x8x16x128xf32>,
    %cst_108 = arith.constant dense<0.000000e+00> : vector<128xf32>
    %89 = vector.multi_reduction <add>, %86, %cst_108 [0] : vector<128x128xf32> to vector<128xf32>
    %90 = vector.shape_cast %89 : vector<128xf32> to vector<1x128xf32>
    %91 = arith.addf %56, %90 : vector<1x128xf32>
    %92 = arith.mulf %86, %86 : vector<128x128xf32>
    %cst_109 = arith.constant dense<0.000000e+00> : vector<128xf32>
    %93 = vector.multi_reduction <add>, %92, %cst_109 [0] : vector<128x128xf32> to vector<128xf32>
    %94 = vector.shape_cast %93 : vector<128xf32> to vector<1x128xf32>
    %95 = arith.addf %60, %94 : vector<1x128xf32>
    %96 = tpu.concatenate %91, %95 in 0 : vector<1x128xf32>, vector<1x128xf32> -> vector<2x128xf32>
    %97 = vector.shape_cast %96 : vector<2x128xf32> to vector<1x2x128xf32>
    %c0_110 = arith.constant 0 : index
    %c0_111 = arith.constant 0 : index
    %c0_112 = arith.constant 0 : index
    %98 = vector.load %arg6[%c0_110, %c0_111, %c0_112] : memref<1x2x128xf32, #tpu.memory_space<vmem>>, vector<1x2x128xf32>
    tpu.vector_store %arg6[%c0_110, %c0_111, %c0_112], %97 {strides = array<i32>} : memref<1x2x128xf32, #tpu.memory_space<vmem>>, vector<1x2x128xf32>,
    return
  }
  func.func @transform_0(%arg0: i32) -> (i32, i32, i32, i32) {
    %c0_i32 = arith.constant 0 : i32
    %c0_i32_0 = arith.constant 0 : i32
    %c0_i32_1 = arith.constant 0 : i32
    %c0_i32_2 = arith.constant 0 : i32
    return %arg0, %c0_i32, %c0_i32_0, %c0_i32_1 : i32, i32, i32, i32
  }
  func.func @transform_1(%arg0: i32) -> (i32, i32) {
    %c0_i32 = arith.constant 0 : i32
    %c0_i32_0 = arith.constant 0 : i32
    %c0_i32_1 = arith.constant 0 : i32
    return %c0_i32, %c0_i32_0 : i32, i32
  }
  func.func @transform_2(%arg0: i32) -> (i32, i32) {
    %c0_i32 = arith.constant 0 : i32
    %c0_i32_0 = arith.constant 0 : i32
    %c0_i32_1 = arith.constant 0 : i32
    return %c0_i32, %c0_i32_0 : i32, i32
  }
  func.func @transform_3(%arg0: i32) -> (i32, i32, i32) {
    %c0_i32 = arith.constant 0 : i32
    %c0_i32_0 = arith.constant 0 : i32
    %c0_i32_1 = arith.constant 0 : i32
    %c0_i32_2 = arith.constant 0 : i32
    return %c0_i32, %c0_i32_0, %c0_i32_1 : i32, i32, i32
  }
  func.func @transform_4(%arg0: i32) -> (i32, i32, i32, i32) {
    %c0_i32 = arith.constant 0 : i32
    %c0_i32_0 = arith.constant 0 : i32
    %c0_i32_1 = arith.constant 0 : i32
    %c0_i32_2 = arith.constant 0 : i32
    return %arg0, %c0_i32, %c0_i32_0, %c0_i32_1 : i32, i32, i32, i32
  }
  func.func @transform_5(%arg0: i32) -> (i32, i32, i32) {
    %c0_i32 = arith.constant 0 : i32
    %c0_i32_0 = arith.constant 0 : i32
    %c0_i32_1 = arith.constant 0 : i32
    return %arg0, %c0_i32, %c0_i32_0 : i32, i32, i32
  }
}

module attributes {stable_mosaic.version = 11 : i64} {
  func.func @_bn_residual_kernel(%arg0: i32, %arg1: memref<1x16x16x128xf32, #tpu.memory_space<vmem>>, %arg2: memref<2x128xf32, #tpu.memory_space<vmem>>, %arg3: memref<1x16x16x128xf32, #tpu.memory_space<vmem>>, %arg4: memref<1x16x16x128xf32, #tpu.memory_space<vmem>>) attributes {dimension_semantics = [#tpu.dimension_semantics<parallel>], iteration_bounds = array<i64: 2>, scalar_prefetch = 0 : i64, scratch_operands = 0 : i64, tpu.core_type = #tpu.core_type<tc>, window_params = [{transform_indices = @transform_0, window_bounds = array<i64: 1, 16, 16, 128>}, {pipeline_mode = #tpu.pipeline_mode<synchronous>, transform_indices = @transform_1, window_bounds = array<i64: 2, 128>}, {transform_indices = @transform_2, window_bounds = array<i64: 1, 16, 16, 128>}, {transform_indices = @transform_3, window_bounds = array<i64: 1, 16, 16, 128>}]} {
    %c0 = arith.constant 0 : index
    %c0_0 = arith.constant 0 : index
    %0 = vector.load %arg2[%c0, %c0_0] : memref<2x128xf32, #tpu.memory_space<vmem>>, vector<1x128xf32>
    %1 = vector.shape_cast %0 : vector<1x128xf32> to vector<1x1x1x128xf32>
    %c1 = arith.constant 1 : index
    %c0_1 = arith.constant 0 : index
    %2 = vector.load %arg2[%c1, %c0_1] : memref<2x128xf32, #tpu.memory_space<vmem>>, vector<1x128xf32>
    %3 = vector.shape_cast %2 : vector<1x128xf32> to vector<1x1x1x128xf32>
    %c0_2 = arith.constant 0 : index
    %c0_3 = arith.constant 0 : index
    %c0_4 = arith.constant 0 : index
    %c0_5 = arith.constant 0 : index
    %4 = vector.load %arg1[%c0_2, %c0_3, %c0_4, %c0_5] : memref<1x16x16x128xf32, #tpu.memory_space<vmem>>, vector<1x16x16x128xf32>
    %5 = vector.broadcast %1 : vector<1x1x1x128xf32> to vector<1x16x16x128xf32>
    %6 = arith.mulf %4, %5 : vector<1x16x16x128xf32>
    %7 = vector.broadcast %3 : vector<1x1x1x128xf32> to vector<1x16x16x128xf32>
    %8 = arith.addf %6, %7 : vector<1x16x16x128xf32>
    %c0_6 = arith.constant 0 : index
    %c0_7 = arith.constant 0 : index
    %c0_8 = arith.constant 0 : index
    %c0_9 = arith.constant 0 : index
    %9 = vector.load %arg3[%c0_6, %c0_7, %c0_8, %c0_9] : memref<1x16x16x128xf32, #tpu.memory_space<vmem>>, vector<1x16x16x128xf32>
    %10 = arith.addf %8, %9 : vector<1x16x16x128xf32>
    %c0_10 = arith.constant 0 : index
    %c0_11 = arith.constant 0 : index
    %c0_12 = arith.constant 0 : index
    %c0_13 = arith.constant 0 : index
    %11 = vector.load %arg4[%c0_10, %c0_11, %c0_12, %c0_13] : memref<1x16x16x128xf32, #tpu.memory_space<vmem>>, vector<1x16x16x128xf32>
    tpu.vector_store %arg4[%c0_10, %c0_11, %c0_12, %c0_13], %10 {strides = array<i32>} : memref<1x16x16x128xf32, #tpu.memory_space<vmem>>, vector<1x16x16x128xf32>,
    return
  }
  func.func @transform_0(%arg0: i32) -> (i32, i32, i32, i32) {
    %c0_i32 = arith.constant 0 : i32
    %c0_i32_0 = arith.constant 0 : i32
    %c0_i32_1 = arith.constant 0 : i32
    %c0_i32_2 = arith.constant 0 : i32
    return %arg0, %c0_i32, %c0_i32_0, %c0_i32_1 : i32, i32, i32, i32
  }
  func.func @transform_1(%arg0: i32) -> (i32, i32) {
    %c0_i32 = arith.constant 0 : i32
    %c0_i32_0 = arith.constant 0 : i32
    %c0_i32_1 = arith.constant 0 : i32
    return %c0_i32, %c0_i32_0 : i32, i32
  }
  func.func @transform_2(%arg0: i32) -> (i32, i32, i32, i32) {
    %c0_i32 = arith.constant 0 : i32
    %c0_i32_0 = arith.constant 0 : i32
    %c0_i32_1 = arith.constant 0 : i32
    %c0_i32_2 = arith.constant 0 : i32
    return %arg0, %c0_i32, %c0_i32_0, %c0_i32_1 : i32, i32, i32, i32
  }
  func.func @transform_3(%arg0: i32) -> (i32, i32, i32, i32) {
    %c0_i32 = arith.constant 0 : i32
    %c0_i32_0 = arith.constant 0 : i32
    %c0_i32_1 = arith.constant 0 : i32
    %c0_i32_2 = arith.constant 0 : i32
    return %arg0, %c0_i32, %c0_i32_0, %c0_i32_1 : i32, i32, i32, i32
  }
}

</mosaic_0001>

<llo_original>
// kernel: residual_block.5
$region0: #{residual_block.5}
  #allocation0 [shape = 'u32[]', space=smem, size = 0x4, offset = 0x4, fixed_abs, tag = 'smem constant byte address 0x4 - core index']
  #allocation1 [shape = 'u32[72,128]{1,0:T(1,128)}', space=vmem, size = 0x9000, scoped, tag = 'internal scratch']
  %s0 = inlined_call_operand.vmem [shape: f32[2,16,16,128], index: 0, kind: input, shape index: {}]
  %s1 = inlined_call_operand.vmem [shape: f32[2,128], index: 1, kind: input, shape index: {}]
  %s2 = inlined_call_operand.vmem [shape: f32[2,16,16,128], index: 2, kind: input, shape index: {}]
  %s3 = inlined_call_operand.vmem [shape: f32[2,16,16,128], index: 3, kind: output, shape index: {}]
  %s4 = sld [smem:[#allocation0]]
  $region45: #{residual_block.5} parent=0
    _
  %s6 = ssub.s32 1, %s4
  %s7 = scalar_select 0, %s6, %s4
  loop: start=0, step=1, limit=4
  $region2: #{residual_block.5} parent=0 // loop_pre_header
    _
  $region3: #{residual_block.5} parent=0 // loop_header
    %s9 = sphi 0, %s13
    %p10 = scmp.ge.s32.totalorder %s9, 4
    %s19 = sphi 0, %s21
    %s22 = sphi 0, %s19
    %s23 = sphi 0, %s22
    %s39 = sphi 0, %s23
    %s43 = sphi 0, %s43
    %s45 = sphi 0, %s43
    %s46 = sphi 0, %s45
    %s60 = sphi 0, %s46
    %s66 = sphi 0, %s68
    %s69 = sphi 0, %s66
    %s70 = sphi 0, %s69
    %s86 = sphi 0, %s70
    %s92 = sphi 0, %s94
    %s95 = sphi 0, %s92
    %s96 = sphi 0, %s95
    %s112 = sphi 0, %s96
  $region4: #{residual_block.5} parent=0 // loop_header_branch
    %12 = sbr.rel (%p10) target = $region8
  $region5: #{residual_block.5} parent=0 // loop_body
    %s14 = ssub.s32 %s9, 1
    %s15 = ssub.s32 %s9, 2
    %s16 = sadd.s32 %s9, 1
    %s17 = ssub.s32 %s9, %s16
    %p18 = scmp.eq.s32.totalorder %s17, 0
    %s20 = sadd.s32 %s19, 1
    %s21 = scalar_select %p18, %s19, %s20
    %p24 = pneg %p18
    %p25 = scmp.eq.s32.totalorder %s9, 1
    %p26 = por %p24, %p25
    %p27 = scmp.ne.s32.totalorder %s19, %s22
    %p28 = scmp.eq.s32.totalorder %s9, 0
    %p29 = por %p27, %p28
    %p30 = scmp.ne.s32.totalorder %s19, %s22
    %p31 = scmp.eq.s32.totalorder %s14, 1
    %p32 = por %p30, %p31
    %p33 = scmp.ne.s32.totalorder %s22, %s23
    %p34 = scmp.eq.s32.totalorder %s14, 0
    %p35 = por %p33, %p34
    %p36 = scmp.ne.s32.totalorder %s22, %s23
    %p37 = scmp.eq.s32.totalorder %s15, 1
    %p38 = por %p36, %p37
    %p40 = scmp.ne.s32.totalorder %s23, %s39
    %p41 = scmp.eq.s32.totalorder %s15, 0
    %p42 = por %p40, %p41
    %s44 = sadd.s32 %s43, 1
    %p47 = scmp.eq.s32.totalorder %s9, 1
    %p48 = scmp.ne.s32.totalorder %s43, %s45
    %p49 = scmp.eq.s32.totalorder %s9, 0
    %p50 = por %p48, %p49
    %p51 = scmp.ne.s32.totalorder %s43, %s45
    %p52 = scmp.eq.s32.totalorder %s14, 1
    %p53 = por %p51, %p52
    %p54 = scmp.ne.s32.totalorder %s45, %s46
    %p55 = scmp.eq.s32.totalorder %s14, 0
    %p56 = por %p54, %p55
    %p57 = scmp.ne.s32.totalorder %s45, %s46
    %p58 = scmp.eq.s32.totalorder %s15, 1
    %p59 = por %p57, %p58
    %p61 = scmp.ne.s32.totalorder %s46, %s60
    %p62 = scmp.eq.s32.totalorder %s15, 0
    %p63 = por %p61, %p62
    %s64 = ssub.s32 %s9, %s16
    %p65 = scmp.eq.s32.totalorder %s64, 0
    %s67 = sadd.s32 %s66, 1
    %s68 = scalar_select %p65, %s66, %s67
    %p71 = pneg %p65
    %p72 = scmp.eq.s32.totalorder %s9, 1
    %p73 = por %p71, %p72
    %p74 = scmp.ne.s32.totalorder %s66, %s69
    %p75 = scmp.eq.s32.totalorder %s9, 0
    %p76 = por %p74, %p75
    %p77 = scmp.ne.s32.totalorder %s66, %s69
    %p78 = scmp.eq.s32.totalorder %s14, 1
    %p79 = por %p77, %p78
    %p80 = scmp.ne.s32.totalorder %s69, %s70
    %p81 = scmp.eq.s32.totalorder %s14, 0
    %p82 = por %p80, %p81
    %p83 = scmp.ne.s32.totalorder %s69, %s70
    %p84 = scmp.eq.s32.totalorder %s15, 1
    %p85 = por %p83, %p84
    %p87 = scmp.ne.s32.totalorder %s70, %s86
    %p88 = scmp.eq.s32.totalorder %s15, 0
    %p89 = por %p87, %p88
    %s90 = ssub.s32 %s9, %s16
    %p91 = scmp.eq.s32.totalorder %s90, 0
    %s93 = sadd.s32 %s92, 1
    %s94 = scalar_select %p91, %s92, %s93
    %p97 = pneg %p91
    %p98 = scmp.eq.s32.totalorder %s9, 1
    %p99 = por %p97, %p98
    %p100 = scmp.ne.s32.totalorder %s92, %s95
    %p101 = scmp.eq.s32.totalorder %s9, 0
    %p102 = por %p100, %p101
    %p103 = scmp.ne.s32.totalorder %s92, %s95
    %p104 = scmp.eq.s32.totalorder %s14, 1
    %p105 = por %p103, %p104
    %p106 = scmp.ne.s32.totalorder %s95, %s96
    %p107 = scmp.eq.s32.totalorder %s14, 0
    %p108 = por %p106, %p107
    %p109 = scmp.ne.s32.totalorder %s95, %s96
    %p110 = scmp.eq.s32.totalorder %s15, 1
    %p111 = por %p109, %p110
    %p113 = scmp.ne.s32.totalorder %s96, %s112
    %p114 = scmp.eq.s32.totalorder %s15, 0
    %p115 = por %p113, %p114
    %p116 = scmp.le.s32.totalorder 1, %s9
    %p117 = scmp.lt.s32.totalorder %s9, 3
    %p118 = pnand %p116, %p117
    %p119 = pneg %p118
    // Predicated region
    $region9: #{residual_block.5} parent=5 // pred_check
      _
    $region10: #{residual_block.5} parent=5 // pred_check_branch
      %121 = sbr.rel (%p118) target = $region12
    $region11: #{residual_block.5} parent=5 // pred_region
      %s122 = ssub.s32 %s9, 1
      // Predicated region
      $region13: #{residual_block.5} parent=11 // pred_check
        %p123 = pneg %p56
      $region14: #{residual_block.5} parent=11 // pred_check_branch
        %125 = sbr.rel (%p123) target = $region16
      $region15: #{residual_block.5} parent=11 // pred_region
        _
      $region16: #{residual_block.5} parent=11 // pred_fallthru
        _
    $region12: #{residual_block.5} parent=5 // pred_fallthru
      _
    %p126 = scmp.lt.s32.totalorder %s9, 2
    // Predicated region
    $region17: #{residual_block.5} parent=5 // pred_check
      %p127 = pneg %p126
    $region18: #{residual_block.5} parent=5 // pred_check_branch
      %129 = sbr.rel (%p127) target = $region20
    $region19: #{residual_block.5} parent=5 // pred_region
      // Predicated region
      $region21: #{residual_block.5} parent=19 // pred_check
        %p130 = pneg %p29
      $region22: #{residual_block.5} parent=19 // pred_check_branch
        %132 = sbr.rel (%p130) target = $region24
      $region23: #{residual_block.5} parent=19 // pred_region
        %p133 = scmp.lt.s32.totalorder %s9, 1
        %s134 = scalar_select %p133, %s9, 1
        %s135 = smul.addr %s134, 32
        %s136 = smul.addr %s135, 8
        %s137 = scalar_lea.vmem %s0, %s136
      $region24: #{residual_block.5} parent=19 // pred_fallthru
        _
      // Predicated region
      $region25: #{residual_block.5} parent=19 // pred_check
        %p138 = pneg %p76
      $region26: #{residual_block.5} parent=19 // pred_check_branch
        %140 = sbr.rel (%p138) target = $region28
      $region27: #{residual_block.5} parent=19 // pred_region
        %p141 = scmp.lt.s32.totalorder %s9, 1
        %s142 = scalar_select %p141, %s9, 1
        %s143 = smul.addr %s142, 32
        %s144 = smul.addr %s143, 8
        %s145 = scalar_lea.vmem %s2, %s144
      $region28: #{residual_block.5} parent=19 // pred_fallthru
        _
    $region20: #{residual_block.5} parent=5 // pred_fallthru
      _
    %p146 = scmp.le.s32.totalorder 1, %s9
    %p147 = scmp.lt.s32.totalorder %s9, 3
    %p148 = pnand %p146, %p147
    %p149 = pneg %p148
    // Predicated region
    $region29: #{residual_block.5} parent=5 // pred_check
      _
    $region30: #{residual_block.5} parent=5 // pred_check_branch
      %151 = sbr.rel (%p148) target = $region32
    $region31: #{residual_block.5} parent=5 // pred_region
      %s152 = ssub.s32 %s9, 1
      %p153 = scmp.lt.s32.totalorder %s14, 1
      %s154 = scalar_select %p153, %s14, 1
      %s155 = smul.addr %s154, 32
      %s156 = smul.addr %s155, 8
      %s157 = scalar_lea.vmem %s0, %s156
      %p158 = pneg %p35
      %p159 = pneg %p32
      %p160 = pneg %p56
      %p161 = pneg %p53
      %p162 = scmp.lt.s32.totalorder %s14, 1
      %s163 = scalar_select %p162, %s14, 1
      %s164 = smul.addr %s163, 32
      %s165 = smul.addr %s164, 8
      %s166 = scalar_lea.vmem %s2, %s165
      %p167 = pneg %p82
      %p168 = pneg %p79
      %p169 = pneg %p108
      %p170 = pneg %p105
      %p171 = scmp.lt.s32.totalorder %s14, 1
      %s172 = scalar_select %p171, %s14, 1
      %s173 = smul.addr %s172, 32
      %s174 = smul.addr %s173, 8
      %s175 = scalar_lea.vmem %s3, %s174
      %p176 = scmp.lt.s32.totalorder %s14, 1
      %s177 = scalar_select %p176, %s14, 1
      %s178 = smul.addr %s177, 32
      %s179 = smul.addr %s178, 8
      %s180 = scalar_lea.vmem %s0, %s179
      %p181 = scmp.lt.s32.totalorder %s14, 1
      %s182 = scalar_select %p181, %s14, 1
      %s183 = smul.addr %s182, 32
      %s184 = smul.addr %s183, 8
      %s185 = scalar_lea.vmem %s2, %s184
      %p186 = scmp.lt.s32.totalorder %s14, 1
      %s187 = scalar_select %p186, %s14, 1
      %s188 = smul.addr %s187, 32
      %s189 = smul.addr %s188, 8
      %s190 = scalar_lea.vmem %s3, %s189
      %v191 = vld [vmem:[%s1] sm:$0x1]
      %v192 = vld [vmem:[%s1 + $0x1] sm:$0x1]
      %v193 = vld [vmem:[%s180] sm:$0xff]
      %v194 = vld [vmem:[%s180 + $0x8] sm:$0xff]
      %v195 = vld [vmem:[%s180 + $0x10] sm:$0xff]
      %v196 = vld [vmem:[%s180 + $0x18] sm:$0xff]
      %v197 = vld [vmem:[%s180 + $0x20] sm:$0xff]
      %v198 = vld [vmem:[%s180 + $0x28] sm:$0xff]
      %v199 = vld [vmem:[%s180 + $0x30] sm:$0xff]
      %v200 = vld [vmem:[%s180 + $0x38] sm:$0xff]
      %v201 = vld [vmem:[%s180 + $0x40] sm:$0xff]
      %v202 = vld [vmem:[%s180 + $0x48] sm:$0xff]
      %v203 = vld [vmem:[%s180 + $0x50] sm:$0xff]
      %v204 = vld [vmem:[%s180 + $0x58] sm:$0xff]
      %v205 = vld [vmem:[%s180 + $0x60] sm:$0xff]
      %v206 = vld [vmem:[%s180 + $0x68] sm:$0xff]
      %v207 = vld [vmem:[%s180 + $0x70] sm:$0xff]
      %v208 = vld [vmem:[%s180 + $0x78] sm:$0xff]
      %v209 = vld [vmem:[%s180 + $0x80] sm:$0xff]
      %v210 = vld [vmem:[%s180 + $0x88] sm:$0xff]
      %v211 = vld [vmem:[%s180 + $0x90] sm:$0xff]
      %v212 = vld [vmem:[%s180 + $0x98] sm:$0xff]
      %v213 = vld [vmem:[%s180 + $0xa0] sm:$0xff]
      %v214 = vld [vmem:[%s180 + $0xa8] sm:$0xff]
      %v215 = vld [vmem:[%s180 + $0xb0] sm:$0xff]
      %v216 = vld [vmem:[%s180 + $0xb8] sm:$0xff]
      %v217 = vld [vmem:[%s180 + $0xc0] sm:$0xff]
      %v218 = vld [vmem:[%s180 + $0xc8] sm:$0xff]
      %v219 = vld [vmem:[%s180 + $0xd0] sm:$0xff]
      %v220 = vld [vmem:[%s180 + $0xd8] sm:$0xff]
      %v221 = vld [vmem:[%s180 + $0xe0] sm:$0xff]
      %v222 = vld [vmem:[%s180 + $0xe8] sm:$0xff]
      %v223 = vld [vmem:[%s180 + $0xf0] sm:$0xff]
      %v224 = vld [vmem:[%s180 + $0xf8] sm:$0xff]
      %v225 = vperm.slane %v191, 0
      %v226 = vmul.f32 %v193, %v225
      %v227 = vmul.f32 %v194, %v225
      %v228 = vmul.f32 %v195, %v225
      %v229 = vmul.f32 %v196, %v225
      %v230 = vmul.f32 %v197, %v225
      %v231 = vmul.f32 %v198, %v225
      %v232 = vmul.f32 %v199, %v225
      %v233 = vmul.f32 %v200, %v225
      %v234 = vmul.f32 %v201, %v225
      %v235 = vmul.f32 %v202, %v225
      %v236 = vmul.f32 %v203, %v225
      %v237 = vmul.f32 %v204, %v225
      %v238 = vmul.f32 %v205, %v225
      %v239 = vmul.f32 %v206, %v225
      %v240 = vmul.f32 %v207, %v225
      %v241 = vmul.f32 %v208, %v225
      %v242 = vmul.f32 %v209, %v225
      %v243 = vmul.f32 %v210, %v225
      %v244 = vmul.f32 %v211, %v225
      %v245 = vmul.f32 %v212, %v225
      %v246 = vmul.f32 %v213, %v225
      %v247 = vmul.f32 %v214, %v225
      %v248 = vmul.f32 %v215, %v225
      %v249 = vmul.f32 %v216, %v225
      %v250 = vmul.f32 %v217, %v225
      %v251 = vmul.f32 %v218, %v225
      %v252 = vmul.f32 %v219, %v225
      %v253 = vmul.f32 %v220, %v225
      %v254 = vmul.f32 %v221, %v225
      %v255 = vmul.f32 %v222, %v225
      %v256 = vmul.f32 %v223, %v225
      %v257 = vmul.f32 %v224, %v225
      %v258 = vperm.slane %v192, 0
      %v259 = vadd.f32 %v226, %v258
      %v260 = vadd.f32 %v227, %v258
      %v261 = vadd.f32 %v228, %v258
      %v262 = vadd.f32 %v229, %v258
      %v263 = vadd.f32 %v230, %v258
      %v264 = vadd.f32 %v231, %v258
      %v265 = vadd.f32 %v232, %v258
      %v266 = vadd.f32 %v233, %v258
      %v267 = vadd.f32 %v234, %v258
      %v268 = vadd.f32 %v235, %v258
      %v269 = vadd.f32 %v236, %v258
      %v270 = vadd.f32 %v237, %v258
      %v271 = vadd.f32 %v238, %v258
      %v272 = vadd.f32 %v239, %v258
      %v273 = vadd.f32 %v240, %v258
      %v274 = vadd.f32 %v241, %v258
      %v275 = vadd.f32 %v242, %v258
      %v276 = vadd.f32 %v243, %v258
      %v277 = vadd.f32 %v244, %v258
      %v278 = vadd.f32 %v245, %v258
      %v279 = vadd.f32 %v246, %v258
      %v280 = vadd.f32 %v247, %v258
      %v281 = vadd.f32 %v248, %v258
      %v282 = vadd.f32 %v249, %v258
      %v283 = vadd.f32 %v250, %v258
      %v284 = vadd.f32 %v251, %v258
      %v285 = vadd.f32 %v252, %v258
      %v286 = vadd.f32 %v253, %v258
      %v287 = vadd.f32 %v254, %v258
      %v288 = vadd.f32 %v255, %v258
      %v289 = vadd.f32 %v256, %v258
      %v290 = vadd.f32 %v257, %v258
      %v291 = vld [vmem:[%s185] sm:$0xff]
      %v292 = vld [vmem:[%s185 + $0x8] sm:$0xff]
      %v293 = vld [vmem:[%s185 + $0x10] sm:$0xff]
      %v294 = vld [vmem:[%s185 + $0x18] sm:$0xff]
      %v295 = vld [vmem:[%s185 + $0x20] sm:$0xff]
      %v296 = vld [vmem:[%s185 + $0x28] sm:$0xff]
      %v297 = vld [vmem:[%s185 + $0x30] sm:$0xff]
      %v298 = vld [vmem:[%s185 + $0x38] sm:$0xff]
      %v299 = vld [vmem:[%s185 + $0x40] sm:$0xff]
      %v300 = vld [vmem:[%s185 + $0x48] sm:$0xff]
      %v301 = vld [vmem:[%s185 + $0x50] sm:$0xff]
      %v302 = vld [vmem:[%s185 + $0x58] sm:$0xff]
      %v303 = vld [vmem:[%s185 + $0x60] sm:$0xff]
      %v304 = vld [vmem:[%s185 + $0x68] sm:$0xff]
      %v305 = vld [vmem:[%s185 + $0x70] sm:$0xff]
      %v306 = vld [vmem:[%s185 + $0x78] sm:$0xff]
      %v307 = vld [vmem:[%s185 + $0x80] sm:$0xff]
      %v308 = vld [vmem:[%s185 + $0x88] sm:$0xff]
      %v309 = vld [vmem:[%s185 + $0x90] sm:$0xff]
      %v310 = vld [vmem:[%s185 + $0x98] sm:$0xff]
      %v311 = vld [vmem:[%s185 + $0xa0] sm:$0xff]
      %v312 = vld [vmem:[%s185 + $0xa8] sm:$0xff]
      %v313 = vld [vmem:[%s185 + $0xb0] sm:$0xff]
      %v314 = vld [vmem:[%s185 + $0xb8] sm:$0xff]
      %v315 = vld [vmem:[%s185 + $0xc0] sm:$0xff]
      %v316 = vld [vmem:[%s185 + $0xc8] sm:$0xff]
      %v317 = vld [vmem:[%s185 + $0xd0] sm:$0xff]
      %v318 = vld [vmem:[%s185 + $0xd8] sm:$0xff]
      %v319 = vld [vmem:[%s185 + $0xe0] sm:$0xff]
      %v320 = vld [vmem:[%s185 + $0xe8] sm:$0xff]
      %v321 = vld [vmem:[%s185 + $0xf0] sm:$0xff]
      %v322 = vld [vmem:[%s185 + $0xf8] sm:$0xff]
      %v323 = vadd.f32 %v259, %v291
      %v324 = vadd.f32 %v260, %v292
      %v325 = vadd.f32 %v261, %v293
      %v326 = vadd.f32 %v262, %v294
      %v327 = vadd.f32 %v263, %v295
      %v328 = vadd.f32 %v264, %v296
      %v329 = vadd.f32 %v265, %v297
      %v330 = vadd.f32 %v266, %v298
      %v331 = vadd.f32 %v267, %v299
      %v332 = vadd.f32 %v268, %v300
      %v333 = vadd.f32 %v269, %v301
      %v334 = vadd.f32 %v270, %v302
      %v335 = vadd.f32 %v271, %v303
      %v336 = vadd.f32 %v272, %v304
      %v337 = vadd.f32 %v273, %v305
      %v338 = vadd.f32 %v274, %v306
      %v339 = vadd.f32 %v275, %v307
      %v340 = vadd.f32 %v276, %v308
      %v341 = vadd.f32 %v277, %v309
      %v342 = vadd.f32 %v278, %v310
      %v343 = vadd.f32 %v279, %v311
      %v344 = vadd.f32 %v280, %v312
      %v345 = vadd.f32 %v281, %v313
      %v346 = vadd.f32 %v282, %v314
      %v347 = vadd.f32 %v283, %v315
      %v348 = vadd.f32 %v284, %v316
      %v349 = vadd.f32 %v285, %v317
      %v350 = vadd.f32 %v286, %v318
      %v351 = vadd.f32 %v287, %v319
      %v352 = vadd.f32 %v288, %v320
      %v353 = vadd.f32 %v289, %v321
      %v354 = vadd.f32 %v290, %v322
      %355 = vst [vmem:[%s190] sm:$0xff] %v323
      %356 = vst [vmem:[%s190 + $0x8] sm:$0xff] %v324
      %357 = vst [vmem:[%s190 + $0x10] sm:$0xff] %v325
      %358 = vst [vmem:[%s190 + $0x18] sm:$0xff] %v326
      %359 = vst [vmem:[%s190 + $0x20] sm:$0xff] %v327
      %360 = vst [vmem:[%s190 + $0x28] sm:$0xff] %v328
      %361 = vst [vmem:[%s190 + $0x30] sm:$0xff] %v329
      %362 = vst [vmem:[%s190 + $0x38] sm:$0xff] %v330
      %363 = vst [vmem:[%s190 + $0x40] sm:$0xff] %v331
      %364 = vst [vmem:[%s190 + $0x48] sm:$0xff] %v332
      %365 = vst [vmem:[%s190 + $0x50] sm:$0xff] %v333
      %366 = vst [vmem:[%s190 + $0x58] sm:$0xff] %v334
      %367 = vst [vmem:[%s190 + $0x60] sm:$0xff] %v335
      %368 = vst [vmem:[%s190 + $0x68] sm:$0xff] %v336
      %369 = vst [vmem:[%s190 + $0x70] sm:$0xff] %v337
      %370 = vst [vmem:[%s190 + $0x78] sm:$0xff] %v338
      %371 = vst [vmem:[%s190 + $0x80] sm:$0xff] %v339
      %372 = vst [vmem:[%s190 + $0x88] sm:$0xff] %v340
      %373 = vst [vmem:[%s190 + $0x90] sm:$0xff] %v341
      %374 = vst [vmem:[%s190 + $0x98] sm:$0xff] %v342
      %375 = vst [vmem:[%s190 + $0xa0] sm:$0xff] %v343
      %376 = vst [vmem:[%s190 + $0xa8] sm:$0xff] %v344
      %377 = vst [vmem:[%s190 + $0xb0] sm:$0xff] %v345
      %378 = vst [vmem:[%s190 + $0xb8] sm:$0xff] %v346
      %379 = vst [vmem:[%s190 + $0xc0] sm:$0xff] %v347
      %380 = vst [vmem:[%s190 + $0xc8] sm:$0xff] %v348
      %381 = vst [vmem:[%s190 + $0xd0] sm:$0xff] %v349
      %382 = vst [vmem:[%s190 + $0xd8] sm:$0xff] %v350
      %383 = vst [vmem:[%s190 + $0xe0] sm:$0xff] %v351
      %384 = vst [vmem:[%s190 + $0xe8] sm:$0xff] %v352
      %385 = vst [vmem:[%s190 + $0xf0] sm:$0xff] %v353
      %386 = vst [vmem:[%s190 + $0xf8] sm:$0xff] %v354
      %p387 = scmp.lt.s32.totalorder %s14, 1
      %s388 = scalar_select %p387, %s14, 1
      %s389 = smul.addr %s388, 32
      %s390 = smul.addr %s389, 8
      %s391 = scalar_lea.vmem %s3, %s390
      // Predicated region
      $region33: #{residual_block.5} parent=31 // pred_check
        %p392 = pneg %p105
      $region34: #{residual_block.5} parent=31 // pred_check_branch
        %394 = sbr.rel (%p392) target = $region36
      $region35: #{residual_block.5} parent=31 // pred_region
        _
      $region36: #{residual_block.5} parent=31 // pred_fallthru
        _
    $region32: #{residual_block.5} parent=5 // pred_fallthru
      _
    %p395 = scmp.le.s32.totalorder 2, %s9
    // Predicated region
    $region37: #{residual_block.5} parent=5 // pred_check
      %p396 = pneg %p395
    $region38: #{residual_block.5} parent=5 // pred_check_branch
      %398 = sbr.rel (%p396) target = $region40
    $region39: #{residual_block.5} parent=5 // pred_region
      %s399 = ssub.s32 %s9, 2
      // Predicated region
      $region41: #{residual_block.5} parent=39 // pred_check
        %p400 = pneg %p111
      $region42: #{residual_block.5} parent=39 // pred_check_branch
        %402 = sbr.rel (%p400) target = $region44
      $region43: #{residual_block.5} parent=39 // pred_region
        %p403 = scmp.lt.s32.totalorder %s15, 1
        %s404 = scalar_select %p403, %s15, 1
        %s405 = smul.addr %s404, 32
        %s406 = smul.addr %s405, 8
        %s407 = scalar_lea.vmem %s3, %s406
      $region44: #{residual_block.5} parent=39 // pred_fallthru
        _
    $region40: #{residual_block.5} parent=5 // pred_fallthru
      _
  $region6: #{residual_block.5} parent=0 // loop_footer
    %s13 = sadd.s32 1, %s9
  $region7: #{residual_block.5} parent=0 // loop_footer_branch
    %8 = sbr.rel target = $region3
  $region8: #{residual_block.5} parent=0 // loop_exit
    _

// kernel: residual_block.3
$region0: #{residual_block.3}
  #allocation0 [shape = 'u32[]', space=smem, size = 0x4, offset = 0x4, fixed_abs, tag = 'smem constant byte address 0x4 - core index']
  #allocation1 [shape = 'u32[72,128]{1,0:T(1,128)}', space=vmem, size = 0x9000, scoped, tag = 'internal scratch']
  #allocation2 [shape = 'f32[18,32,128]{2,1,0:T(8,128)}', space=vmem, size = 0x48000, scoped, tag = 'scratch operand']
  %s0 = inlined_call_operand.vmem [shape: f32[2,16,16,128], index: 0, kind: input, shape index: {}]
  %s1 = inlined_call_operand.vmem [shape: f32[2,128], index: 1, kind: input, shape index: {}]
  %s2 = inlined_call_operand.vmem [shape: f32[1,128], index: 2, kind: input, shape index: {}]
  %s3 = inlined_call_operand.vmem [shape: f32[3,384,128], index: 3, kind: input, shape index: {}]
  %s4 = inlined_call_operand.vmem [shape: f32[2,16,16,128], index: 4, kind: output, shape index: {0}]
  %s5 = inlined_call_operand.vmem [shape: f32[2,2,128], index: 5, kind: output, shape index: {1}]
  %6 = xla_tuple %s4, %s5
  %s7 = sld [smem:[#allocation0]]
  $region57: #{residual_block.3} parent=0
    _
  %s9 = ssub.s32 1, %s7
  %s10 = scalar_select 0, %s9, %s7
  loop: start=0, step=1, limit=4
  $region2: #{residual_block.3} parent=0 // loop_pre_header
    _
  $region3: #{residual_block.3} parent=0 // loop_header
    %s12 = sphi 0, %s16
    %p13 = scmp.ge.s32.totalorder %s12, 4
    %s22 = sphi 0, %s24
    %s25 = sphi 0, %s22
    %s26 = sphi 0, %s25
    %s42 = sphi 0, %s26
    %s46 = sphi 0, %s46
    %s48 = sphi 0, %s46
    %s49 = sphi 0, %s48
    %s63 = sphi 0, %s49
    %s67 = sphi 0, %s67
    %s69 = sphi 0, %s67
    %s70 = sphi 0, %s69
    %s84 = sphi 0, %s70
    %s88 = sphi 0, %s88
    %s90 = sphi 0, %s88
    %s91 = sphi 0, %s90
    %s105 = sphi 0, %s91
    %s111 = sphi 0, %s113
    %s114 = sphi 0, %s111
    %s115 = sphi 0, %s114
    %s131 = sphi 0, %s115
    %s137 = sphi 0, %s139
    %s140 = sphi 0, %s137
    %s141 = sphi 0, %s140
    %s157 = sphi 0, %s141
  $region4: #{residual_block.3} parent=0 // loop_header_branch
    %15 = sbr.rel (%p13) target = $region8
  $region5: #{residual_block.3} parent=0 // loop_body
    %s17 = ssub.s32 %s12, 1
    %s18 = ssub.s32 %s12, 2
    %s19 = sadd.s32 %s12, 1
    %s20 = ssub.s32 %s12, %s19
    %p21 = scmp.eq.s32.totalorder %s20, 0
    %s23 = sadd.s32 %s22, 1
    %s24 = scalar_select %p21, %s22, %s23
    %p27 = pneg %p21
    %p28 = scmp.eq.s32.totalorder %s12, 1
    %p29 = por %p27, %p28
    %p30 = scmp.ne.s32.totalorder %s22, %s25
    %p31 = scmp.eq.s32.totalorder %s12, 0
    %p32 = por %p30, %p31
    %p33 = scmp.ne.s32.totalorder %s22, %s25
    %p34 = scmp.eq.s32.totalorder %s17, 1
    %p35 = por %p33, %p34
    %p36 = scmp.ne.s32.totalorder %s25, %s26
    %p37 = scmp.eq.s32.totalorder %s17, 0
    %p38 = por %p36, %p37
    %p39 = scmp.ne.s32.totalorder %s25, %s26
    %p40 = scmp.eq.s32.totalorder %s18, 1
    %p41 = por %p39, %p40
    %p43 = scmp.ne.s32.totalorder %s26, %s42
    %p44 = scmp.eq.s32.totalorder %s18, 0
    %p45 = por %p43, %p44
    %s47 = sadd.s32 %s46, 1
    %p50 = scmp.eq.s32.totalorder %s12, 1
    %p51 = scmp.ne.s32.totalorder %s46, %s48
    %p52 = scmp.eq.s32.totalorder %s12, 0
    %p53 = por %p51, %p52
    %p54 = scmp.ne.s32.totalorder %s46, %s48
    %p55 = scmp.eq.s32.totalorder %s17, 1
    %p56 = por %p54, %p55
    %p57 = scmp.ne.s32.totalorder %s48, %s49
    %p58 = scmp.eq.s32.totalorder %s17, 0
    %p59 = por %p57, %p58
    %p60 = scmp.ne.s32.totalorder %s48, %s49
    %p61 = scmp.eq.s32.totalorder %s18, 1
    %p62 = por %p60, %p61
    %p64 = scmp.ne.s32.totalorder %s49, %s63
    %p65 = scmp.eq.s32.totalorder %s18, 0
    %p66 = por %p64, %p65
    %s68 = sadd.s32 %s67, 1
    %p71 = scmp.eq.s32.totalorder %s12, 1
    %p72 = scmp.ne.s32.totalorder %s67, %s69
    %p73 = scmp.eq.s32.totalorder %s12, 0
    %p74 = por %p72, %p73
    %p75 = scmp.ne.s32.totalorder %s67, %s69
    %p76 = scmp.eq.s32.totalorder %s17, 1
    %p77 = por %p75, %p76
    %p78 = scmp.ne.s32.totalorder %s69, %s70
    %p79 = scmp.eq.s32.totalorder %s17, 0
    %p80 = por %p78, %p79
    %p81 = scmp.ne.s32.totalorder %s69, %s70
    %p82 = scmp.eq.s32.totalorder %s18, 1
    %p83 = por %p81, %p82
    %p85 = scmp.ne.s32.totalorder %s70, %s84
    %p86 = scmp.eq.s32.totalorder %s18, 0
    %p87 = por %p85, %p86
    %s89 = sadd.s32 %s88, 1
    %p92 = scmp.eq.s32.totalorder %s12, 1
    %p93 = scmp.ne.s32.totalorder %s88, %s90
    %p94 = scmp.eq.s32.totalorder %s12, 0
    %p95 = por %p93, %p94
    %p96 = scmp.ne.s32.totalorder %s88, %s90
    %p97 = scmp.eq.s32.totalorder %s17, 1
    %p98 = por %p96, %p97
    %p99 = scmp.ne.s32.totalorder %s90, %s91
    %p100 = scmp.eq.s32.totalorder %s17, 0
    %p101 = por %p99, %p100
    %p102 = scmp.ne.s32.totalorder %s90, %s91
    %p103 = scmp.eq.s32.totalorder %s18, 1
    %p104 = por %p102, %p103
    %p106 = scmp.ne.s32.totalorder %s91, %s105
    %p107 = scmp.eq.s32.totalorder %s18, 0
    %p108 = por %p106, %p107
    %s109 = ssub.s32 %s12, %s19
    %p110 = scmp.eq.s32.totalorder %s109, 0
    %s112 = sadd.s32 %s111, 1
    %s113 = scalar_select %p110, %s111, %s112
    %p116 = pneg %p110
    %p117 = scmp.eq.s32.totalorder %s12, 1
    %p118 = por %p116, %p117
    %p119 = scmp.ne.s32.totalorder %s111, %s114
    %p120 = scmp.eq.s32.totalorder %s12, 0
    %p121 = por %p119, %p120
    %p122 = scmp.ne.s32.totalorder %s111, %s114
    %p123 = scmp.eq.s32.totalorder %s17, 1
    %p124 = por %p122, %p123
    %p125 = scmp.ne.s32.totalorder %s114, %s115
    %p126 = scmp.eq.s32.totalorder %s17, 0
    %p127 = por %p125, %p126
    %p128 = scmp.ne.s32.totalorder %s114, %s115
    %p129 = scmp.eq.s32.totalorder %s18, 1
    %p130 = por %p128, %p129
    %p132 = scmp.ne.s32.totalorder %s115, %s131
    %p133 = scmp.eq.s32.totalorder %s18, 0
    %p134 = por %p132, %p133
    %s135 = ssub.s32 %s12, %s19
    %p136 = scmp.eq.s32.totalorder %s135, 0
    %s138 = sadd.s32 %s137, 1
    %s139 = scalar_select %p136, %s137, %s138
    %p142 = pneg %p136
    %p143 = scmp.eq.s32.totalorder %s12, 1
    %p144 = por %p142, %p143
    %p145 = scmp.ne.s32.totalorder %s137, %s140
    %p146 = scmp.eq.s32.totalorder %s12, 0
    %p147 = por %p145, %p146
    %p148 = scmp.ne.s32.totalorder %s137, %s140
    %p149 = scmp.eq.s32.totalorder %s17, 1
    %p150 = por %p148, %p149
    %p151 = scmp.ne.s32.totalorder %s140, %s141
    %p152 = scmp.eq.s32.totalorder %s17, 0
    %p153 = por %p151, %p152
    %p154 = scmp.ne.s32.totalorder %s140, %s141
    %p155 = scmp.eq.s32.totalorder %s18, 1
    %p156 = por %p154, %p155
    %p158 = scmp.ne.s32.totalorder %s141, %s157
    %p159 = scmp.eq.s32.totalorder %s18, 0
    %p160 = por %p158, %p159
    %p161 = scmp.le.s32.totalorder 1, %s12
    %p162 = scmp.lt.s32.totalorder %s12, 3
    %p163 = pnand %p161, %p162
    %p164 = pneg %p163
    // Predicated region
    $region9: #{residual_block.3} parent=5 // pred_check
      _
    $region10: #{residual_block.3} parent=5 // pred_check_branch
      %166 = sbr.rel (%p163) target = $region12
    $region11: #{residual_block.3} parent=5 // pred_region
      %s167 = ssub.s32 %s12, 1
      // Predicated region
      $region13: #{residual_block.3} parent=11 // pred_check
        %p168 = pneg %p59
      $region14: #{residual_block.3} parent=11 // pred_check_branch
        %170 = sbr.rel (%p168) target = $region16
      $region15: #{residual_block.3} parent=11 // pred_region
        _
      $region16: #{residual_block.3} parent=11 // pred_fallthru
        _
      // Predicated region
      $region17: #{residual_block.3} parent=11 // pred_check
        %p171 = pneg %p80
      $region18: #{residual_block.3} parent=11 // pred_check_branch
        %173 = sbr.rel (%p171) target = $region20
      $region19: #{residual_block.3} parent=11 // pred_region
        _
      $region20: #{residual_block.3} parent=11 // pred_fallthru
        _
      // Predicated region
      $region21: #{residual_block.3} parent=11 // pred_check
        %p174 = pneg %p101
      $region22: #{residual_block.3} parent=11 // pred_check_branch
        %176 = sbr.rel (%p174) target = $region24
      $region23: #{residual_block.3} parent=11 // pred_region
        _
      $region24: #{residual_block.3} parent=11 // pred_fallthru
        _
    $region12: #{residual_block.3} parent=5 // pred_fallthru
      _
    %p177 = scmp.lt.s32.totalorder %s12, 2
    // Predicated region
    $region25: #{residual_block.3} parent=5 // pred_check
      %p178 = pneg %p177
    $region26: #{residual_block.3} parent=5 // pred_check_branch
      %180 = sbr.rel (%p178) target = $region28
    $region27: #{residual_block.3} parent=5 // pred_region
      // Predicated region
      $region29: #{residual_block.3} parent=27 // pred_check
        %p181 = pneg %p32
      $region30: #{residual_block.3} parent=27 // pred_check_branch
        %183 = sbr.rel (%p181) target = $region32
      $region31: #{residual_block.3} parent=27 // pred_region
        %p184 = scmp.lt.s32.totalorder %s12, 1
        %s185 = scalar_select %p184, %s12, 1
        %s186 = smul.addr %s185, 32
        %s187 = smul.addr %s186, 8
        %s188 = scalar_lea.vmem %s0, %s187
      $region32: #{residual_block.3} parent=27 // pred_fallthru
        _
    $region28: #{residual_block.3} parent=5 // pred_fallthru
      _
    %p189 = scmp.le.s32.totalorder 1, %s12
    %p190 = scmp.lt.s32.totalorder %s12, 3
    %p191 = pnand %p189, %p190
    %p192 = pneg %p191
    // Predicated region
    $region33: #{residual_block.3} parent=5 // pred_check
      _
    $region34: #{residual_block.3} parent=5 // pred_check_branch
      %194 = sbr.rel (%p191) target = $region36
    $region35: #{residual_block.3} parent=5 // pred_region
      %s195 = ssub.s32 %s12, 1
      %p196 = scmp.lt.s32.totalorder %s17, 1
      %s197 = scalar_select %p196, %s17, 1
      %s198 = smul.addr %s197, 32
      %s199 = smul.addr %s198, 8
      %s200 = scalar_lea.vmem %s0, %s199
      %p201 = pneg %p38
      %p202 = pneg %p35
      %p203 = pneg %p59
      %p204 = pneg %p56
      %p205 = pneg %p80
      %p206 = pneg %p77
      %p207 = pneg %p101
      %p208 = pneg %p98
      %p209 = pneg %p127
      %p210 = pneg %p124
      %p211 = scmp.lt.s32.totalorder %s17, 1
      %s212 = scalar_select %p211, %s17, 1
      %s213 = smul.addr %s212, 32
      %s214 = smul.addr %s213, 8
      %s215 = scalar_lea.vmem %s4, %s214
      %p216 = pneg %p153
      %p217 = pneg %p150
      %p218 = scmp.lt.s32.totalorder %s17, 1
      %s219 = scalar_select %p218, %s17, 1
      %s220 = smul.addr %s219, 2
      %s221 = scalar_lea.vmem %s5, %s220
      %p222 = scmp.lt.s32.totalorder %s17, 1
      %s223 = scalar_select %p222, %s17, 1
      %s224 = smul.addr %s223, 32
      %s225 = smul.addr %s224, 8
      %s226 = scalar_lea.vmem %s0, %s225
      %p227 = scmp.lt.s32.totalorder %s17, 1
      %s228 = scalar_select %p227, %s17, 1
      %s229 = smul.addr %s228, 32
      %s230 = smul.addr %s229, 8
      %s231 = scalar_lea.vmem %s4, %s230
      %p232 = scmp.lt.s32.totalorder %s17, 1
      %s233 = scalar_select %p232, %s17, 1
      %s234 = smul.addr %s233, 2
      %s235 = scalar_lea.vmem %s5, %s234
      %v236 = vld [vmem:[%s1] sm:$0x1]
      %v237 = vld [vmem:[%s1 + $0x1] sm:$0x1]
      %v238 = vld [vmem:[%s2] sm:$0x1]
      %v239 = vld [vmem:[%s226] sm:$0xff]
      %v240 = vld [vmem:[%s226 + $0x8] sm:$0xff]
      %v241 = vld [vmem:[%s226 + $0x10] sm:$0xff]
      %v242 = vld [vmem:[%s226 + $0x18] sm:$0xff]
      %v243 = vld [vmem:[%s226 + $0x20] sm:$0xff]
      %v244 = vld [vmem:[%s226 + $0x28] sm:$0xff]
      %v245 = vld [vmem:[%s226 + $0x30] sm:$0xff]
      %v246 = vld [vmem:[%s226 + $0x38] sm:$0xff]
      %v247 = vld [vmem:[%s226 + $0x40] sm:$0xff]
      %v248 = vld [vmem:[%s226 + $0x48] sm:$0xff]
      %v249 = vld [vmem:[%s226 + $0x50] sm:$0xff]
      %v250 = vld [vmem:[%s226 + $0x58] sm:$0xff]
      %v251 = vld [vmem:[%s226 + $0x60] sm:$0xff]
      %v252 = vld [vmem:[%s226 + $0x68] sm:$0xff]
      %v253 = vld [vmem:[%s226 + $0x70] sm:$0xff]
      %v254 = vld [vmem:[%s226 + $0x78] sm:$0xff]
      %v255 = vld [vmem:[%s226 + $0x80] sm:$0xff]
      %v256 = vld [vmem:[%s226 + $0x88] sm:$0xff]
      %v257 = vld [vmem:[%s226 + $0x90] sm:$0xff]
      %v258 = vld [vmem:[%s226 + $0x98] sm:$0xff]
      %v259 = vld [vmem:[%s226 + $0xa0] sm:$0xff]
      %v260 = vld [vmem:[%s226 + $0xa8] sm:$0xff]
      %v261 = vld [vmem:[%s226 + $0xb0] sm:$0xff]
      %v262 = vld [vmem:[%s226 + $0xb8] sm:$0xff]
      %v263 = vld [vmem:[%s226 + $0xc0] sm:$0xff]
      %v264 = vld [vmem:[%s226 + $0xc8] sm:$0xff]
      %v265 = vld [vmem:[%s226 + $0xd0] sm:$0xff]
      %v266 = vld [vmem:[%s226 + $0xd8] sm:$0xff]
      %v267 = vld [vmem:[%s226 + $0xe0] sm:$0xff]
      %v268 = vld [vmem:[%s226 + $0xe8] sm:$0xff]
      %v269 = vld [vmem:[%s226 + $0xf0] sm:$0xff]
      %v270 = vld [vmem:[%s226 + $0xf8] sm:$0xff]
      %v271 = vperm.slane %v236, 0
      %v272 = vmul.f32 %v239, %v271
      %v273 = vmul.f32 %v240, %v271
      %v274 = vmul.f32 %v241, %v271
      %v275 = vmul.f32 %v242, %v271
      %v276 = vmul.f32 %v243, %v271
      %v277 = vmul.f32 %v244, %v271
      %v278 = vmul.f32 %v245, %v271
      %v279 = vmul.f32 %v246, %v271
      %v280 = vmul.f32 %v247, %v271
      %v281 = vmul.f32 %v248, %v271
      %v282 = vmul.f32 %v249, %v271
      %v283 = vmul.f32 %v250, %v271
      %v284 = vmul.f32 %v251, %v271
      %v285 = vmul.f32 %v252, %v271
      %v286 = vmul.f32 %v253, %v271
      %v287 = vmul.f32 %v254, %v271
      %v288 = vmul.f32 %v255, %v271
      %v289 = vmul.f32 %v256, %v271
      %v290 = vmul.f32 %v257, %v271
      %v291 = vmul.f32 %v258, %v271
      %v292 = vmul.f32 %v259, %v271
      %v293 = vmul.f32 %v260, %v271
      %v294 = vmul.f32 %v261, %v271
      %v295 = vmul.f32 %v262, %v271
      %v296 = vmul.f32 %v263, %v271
      %v297 = vmul.f32 %v264, %v271
      %v298 = vmul.f32 %v265, %v271
      %v299 = vmul.f32 %v266, %v271
      %v300 = vmul.f32 %v267, %v271
      %v301 = vmul.f32 %v268, %v271
      %v302 = vmul.f32 %v269, %v271
      %v303 = vmul.f32 %v270, %v271
      %v304 = vperm.slane %v237, 0
      %v305 = vadd.f32 %v272, %v304
      %v306 = vadd.f32 %v273, %v304
      %v307 = vadd.f32 %v274, %v304
      %v308 = vadd.f32 %v275, %v304
      %v309 = vadd.f32 %v276, %v304
      %v310 = vadd.f32 %v277, %v304
      %v311 = vadd.f32 %v278, %v304
      %v312 = vadd.f32 %v279, %v304
      %v313 = vadd.f32 %v280, %v304
      %v314 = vadd.f32 %v281, %v304
      %v315 = vadd.f32 %v282, %v304
      %v316 = vadd.f32 %v283, %v304
      %v317 = vadd.f32 %v284, %v304
      %v318 = vadd.f32 %v285, %v304
      %v319 = vadd.f32 %v286, %v304
      %v320 = vadd.f32 %v287, %v304
      %v321 = vadd.f32 %v288, %v304
      %v322 = vadd.f32 %v289, %v304
      %v323 = vadd.f32 %v290, %v304
      %v324 = vadd.f32 %v291, %v304
      %v325 = vadd.f32 %v292, %v304
      %v326 = vadd.f32 %v293, %v304
      %v327 = vadd.f32 %v294, %v304
      %v328 = vadd.f32 %v295, %v304
      %v329 = vadd.f32 %v296, %v304
      %v330 = vadd.f32 %v297, %v304
      %v331 = vadd.f32 %v298, %v304
      %v332 = vadd.f32 %v299, %v304
      %v333 = vadd.f32 %v300, %v304
      %v334 = vadd.f32 %v301, %v304
      %v335 = vadd.f32 %v302, %v304
      %v336 = vadd.f32 %v303, %v304
      %vm337 = vcmp.gt.f32.partialorder %v305, 0.0
      %vm338 = vcmp.gt.f32.partialorder %v306, 0.0
      %vm339 = vcmp.gt.f32.partialorder %v307, 0.0
      %vm340 = vcmp.gt.f32.partialorder %v308, 0.0
      %vm341 = vcmp.gt.f32.partialorder %v309, 0.0
      %vm342 = vcmp.gt.f32.partialorder %v310, 0.0
      %vm343 = vcmp.gt.f32.partialorder %v311, 0.0
      %vm344 = vcmp.gt.f32.partialorder %v312, 0.0
      %vm345 = vcmp.gt.f32.partialorder %v313, 0.0
      %vm346 = vcmp.gt.f32.partialorder %v314, 0.0
      %vm347 = vcmp.gt.f32.partialorder %v315, 0.0
      %vm348 = vcmp.gt.f32.partialorder %v316, 0.0
      %vm349 = vcmp.gt.f32.partialorder %v317, 0.0
      %vm350 = vcmp.gt.f32.partialorder %v318, 0.0
      %vm351 = vcmp.gt.f32.partialorder %v319, 0.0
      %vm352 = vcmp.gt.f32.partialorder %v320, 0.0
      %vm353 = vcmp.gt.f32.partialorder %v321, 0.0
      %vm354 = vcmp.gt.f32.partialorder %v322, 0.0
      %vm355 = vcmp.gt.f32.partialorder %v323, 0.0
      %vm356 = vcmp.gt.f32.partialorder %v324, 0.0
      %vm357 = vcmp.gt.f32.partialorder %v325, 0.0
      %vm358 = vcmp.gt.f32.partialorder %v326, 0.0
      %vm359 = vcmp.gt.f32.partialorder %v327, 0.0
      %vm360 = vcmp.gt.f32.partialorder %v328, 0.0
      %vm361 = vcmp.gt.f32.partialorder %v329, 0.0
      %vm362 = vcmp.gt.f32.partialorder %v330, 0.0
      %vm363 = vcmp.gt.f32.partialorder %v331, 0.0
      %vm364 = vcmp.gt.f32.partialorder %v332, 0.0
      %vm365 = vcmp.gt.f32.partialorder %v333, 0.0
      %vm366 = vcmp.gt.f32.partialorder %v334, 0.0
      %vm367 = vcmp.gt.f32.partialorder %v335, 0.0
      %vm368 = vcmp.gt.f32.partialorder %v336, 0.0
      %v370 = vperm.slane %v238, 0
      %v372 = vmul.f32 %v370, %v305
      %v373 = vmul.f32 %v370, %v306
      %v374 = vmul.f32 %v370, %v307
      %v375 = vmul.f32 %v370, %v308
      %v376 = vmul.f32 %v370, %v309
      %v377 = vmul.f32 %v370, %v310
      %v378 = vmul.f32 %v370, %v311
      %v379 = vmul.f32 %v370, %v312
      %v380 = vmul.f32 %v370, %v313
      %v381 = vmul.f32 %v370, %v314
      %v382 = vmul.f32 %v370, %v315
      %v383 = vmul.f32 %v370, %v316
      %v384 = vmul.f32 %v370, %v317
      %v385 = vmul.f32 %v370, %v318
      %v386 = vmul.f32 %v370, %v319
      %v387 = vmul.f32 %v370, %v320
      %v388 = vmul.f32 %v370, %v321
      %v389 = vmul.f32 %v370, %v322
      %v390 = vmul.f32 %v370, %v323
      %v391 = vmul.f32 %v370, %v324
      %v392 = vmul.f32 %v370, %v325
      %v393 = vmul.f32 %v370, %v326
      %v394 = vmul.f32 %v370, %v327
      %v395 = vmul.f32 %v370, %v328
      %v396 = vmul.f32 %v370, %v329
      %v397 = vmul.f32 %v370, %v330
      %v398 = vmul.f32 %v370, %v331
      %v399 = vmul.f32 %v370, %v332
      %v400 = vmul.f32 %v370, %v333
      %v401 = vmul.f32 %v370, %v334
      %v402 = vmul.f32 %v370, %v335
      %v403 = vmul.f32 %v370, %v336
      %v404 = vsel %vm337, %v305, %v372
      %v405 = vsel %vm338, %v306, %v373
      %v406 = vsel %vm339, %v307, %v374
      %v407 = vsel %vm340, %v308, %v375
      %v408 = vsel %vm341, %v309, %v376
      %v409 = vsel %vm342, %v310, %v377
      %v410 = vsel %vm343, %v311, %v378
      %v411 = vsel %vm344, %v312, %v379
      %v412 = vsel %vm345, %v313, %v380
      %v413 = vsel %vm346, %v314, %v381
      %v414 = vsel %vm347, %v315, %v382
      %v415 = vsel %vm348, %v316, %v383
      %v416 = vsel %vm349, %v317, %v384
      %v417 = vsel %vm350, %v318, %v385
      %v418 = vsel %vm351, %v319, %v386
      %v419 = vsel %vm352, %v320, %v387
      %v420 = vsel %vm353, %v321, %v388
      %v421 = vsel %vm354, %v322, %v389
      %v422 = vsel %vm355, %v323, %v390
      %v423 = vsel %vm356, %v324, %v391
      %v424 = vsel %vm357, %v325, %v392
      %v425 = vsel %vm358, %v326, %v393
      %v426 = vsel %vm359, %v327, %v394
      %v427 = vsel %vm360, %v328, %v395
      %v428 = vsel %vm361, %v329, %v396
      %v429 = vsel %vm362, %v330, %v397
      %v430 = vsel %vm363, %v331, %v398
      %v431 = vsel %vm364, %v332, %v399
      %v432 = vsel %vm365, %v333, %v400
      %v433 = vsel %vm366, %v334, %v401
      %v434 = vsel %vm367, %v335, %v402
      %v435 = vsel %vm368, %v336, %v403
      %436 = vst [vmem:[#allocation2] sm:$0xff] 0.0
      %437 = vst [vmem:[#allocation2 + $0x8] sm:$0xff] 0.0
      %438 = vst [vmem:[#allocation2 + $0x10] sm:$0xff] 0.0
      %439 = vst [vmem:[#allocation2 + $0x18] sm:$0xff] 0.0
      %s440 = scalar_lea.vmem [#allocation2], 544
      %441 = vst [vmem:[%s440] sm:$0xff] 0.0
      %442 = vst [vmem:[%s440 + $0x8] sm:$0xff] 0.0
      %443 = vst [vmem:[%s440 + $0x10] sm:$0xff] 0.0
      %444 = vst [vmem:[%s440 + $0x18] sm:$0xff] 0.0
      %s445 = scalar_lea.vmem [#allocation2], 32
      %446 = vst [vmem:[%s445] sm:$0xff] 0.0
      %447 = vst [vmem:[%s445 + $0x20] sm:$0xff] 0.0
      %448 = vst [vmem:[%s445 + $0x40] sm:$0xff] 0.0
      %449 = vst [vmem:[%s445 + $0x60] sm:$0xff] 0.0
      %450 = vst [vmem:[%s445 + $0x80] sm:$0xff] 0.0
      %451 = vst [vmem:[%s445 + $0xa0] sm:$0xff] 0.0
      %452 = vst [vmem:[%s445 + $0xc0] sm:$0xff] 0.0
      %453 = vst [vmem:[%s445 + $0xe0] sm:$0xff] 0.0
      %454 = vst [vmem:[%s445 + $0x100] sm:$0xff] 0.0
      %455 = vst [vmem:[%s445 + $0x120] sm:$0xff] 0.0
      %456 = vst [vmem:[%s445 + $0x140] sm:$0xff] 0.0
      %457 = vst [vmem:[%s445 + $0x160] sm:$0xff] 0.0
      %458 = vst [vmem:[%s445 + $0x180] sm:$0xff] 0.0
      %459 = vst [vmem:[%s445 + $0x1a0] sm:$0xff] 0.0
      %460 = vst [vmem:[%s445 + $0x1c0] sm:$0xff] 0.0
      %461 = vst [vmem:[%s445 + $0x1e0] sm:$0xff] 0.0
      %462 = vst [vmem:[%s445 + $0x18] sm:$0xff] 0.0
      %463 = vst [vmem:[%s445 + $0x38] sm:$0xff] 0.0
      %464 = vst [vmem:[%s445 + $0x58] sm:$0xff] 0.0
      %465 = vst [vmem:[%s445 + $0x78] sm:$0xff] 0.0
      %466 = vst [vmem:[%s445 + $0x98] sm:$0xff] 0.0
      %467 = vst [vmem:[%s445 + $0xb8] sm:$0xff] 0.0
      %468 = vst [vmem:[%s445 + $0xd8] sm:$0xff] 0.0
      %469 = vst [vmem:[%s445 + $0xf8] sm:$0xff] 0.0
      %470 = vst [vmem:[%s445 + $0x118] sm:$0xff] 0.0
      %471 = vst [vmem:[%s445 + $0x138] sm:$0xff] 0.0
      %472 = vst [vmem:[%s445 + $0x158] sm:$0xff] 0.0
      %473 = vst [vmem:[%s445 + $0x178] sm:$0xff] 0.0
      %474 = vst [vmem:[%s445 + $0x198] sm:$0xff] 0.0
      %475 = vst [vmem:[%s445 + $0x1b8] sm:$0xff] 0.0
      %476 = vst [vmem:[%s445 + $0x1d8] sm:$0xff] 0.0
      %477 = vst [vmem:[%s445 + $0x1f8] sm:$0xff] 0.0
      %478 = vst [vmem:[%s445 + $0x8] sm:$0xff] %v404
      %479 = vst [vmem:[%s445 + $0x10] sm:$0xff] %v405
      %480 = vst [vmem:[%s445 + $0x28] sm:$0xff] %v406
      %481 = vst [vmem:[%s445 + $0x30] sm:$0xff] %v407
      %482 = vst [vmem:[%s445 + $0x48] sm:$0xff] %v408
      %483 = vst [vmem:[%s445 + $0x50] sm:$0xff] %v409
      %484 = vst [vmem:[%s445 + $0x68] sm:$0xff] %v410
      %485 = vst [vmem:[%s445 + $0x70] sm:$0xff] %v411
      %486 = vst [vmem:[%s445 + $0x88] sm:$0xff] %v412
      %487 = vst [vmem:[%s445 + $0x90] sm:$0xff] %v413
      %488 = vst [vmem:[%s445 + $0xa8] sm:$0xff] %v414
      %489 = vst [vmem:[%s445 + $0xb0] sm:$0xff] %v415
      %490 = vst [vmem:[%s445 + $0xc8] sm:$0xff] %v416
      %491 = vst [vmem:[%s445 + $0xd0] sm:$0xff] %v417
      %492 = vst [vmem:[%s445 + $0xe8] sm:$0xff] %v418
      %493 = vst [vmem:[%s445 + $0xf0] sm:$0xff] %v419
      %494 = vst [vmem:[%s445 + $0x108] sm:$0xff] %v420
      %495 = vst [vmem:[%s445 + $0x110] sm:$0xff] %v421
      %496 = vst [vmem:[%s445 + $0x128] sm:$0xff] %v422
      %497 = vst [vmem:[%s445 + $0x130] sm:$0xff] %v423
      %498 = vst [vmem:[%s445 + $0x148] sm:$0xff] %v424
      %499 = vst [vmem:[%s445 + $0x150] sm:$0xff] %v425
      %500 = vst [vmem:[%s445 + $0x168] sm:$0xff] %v426
      %501 = vst [vmem:[%s445 + $0x170] sm:$0xff] %v427
      %502 = vst [vmem:[%s445 + $0x188] sm:$0xff] %v428
      %503 = vst [vmem:[%s445 + $0x190] sm:$0xff] %v429
      %504 = vst [vmem:[%s445 + $0x1a8] sm:$0xff] %v430
      %505 = vst [vmem:[%s445 + $0x1b0] sm:$0xff] %v431
      %506 = vst [vmem:[%s445 + $0x1c8] sm:$0xff] %v432
      %507 = vst [vmem:[%s445 + $0x1d0] sm:$0xff] %v433
      %508 = vst [vmem:[%s445 + $0x1e8] sm:$0xff] %v434
      %509 = vst [vmem:[%s445 + $0x1f0] sm:$0xff] %v435
      %v510 = vld [vmem:[#allocation2 + $0x7] sm:$0xff]
      %v511 = vld [vmem:[#allocation2 + $0xf] sm:$0xff]
      %v512 = vld [vmem:[#allocation2 + $0x27] sm:$0xff]
      %v513 = vld [vmem:[#allocation2 + $0x2f] sm:$0xff]
      %v514 = vld [vmem:[#allocation2 + $0x47] sm:$0xff]
      %v515 = vld [vmem:[#allocation2 + $0x4f] sm:$0xff]
      %v516 = vld [vmem:[#allocation2 + $0x67] sm:$0xff]
      %v517 = vld [vmem:[#allocation2 + $0x6f] sm:$0xff]
      %v518 = vld [vmem:[#allocation2 + $0x87] sm:$0xff]
      %v519 = vld [vmem:[#allocation2 + $0x8f] sm:$0xff]
      %v520 = vld [vmem:[#allocation2 + $0xa7] sm:$0xff]
      %v521 = vld [vmem:[#allocation2 + $0xaf] sm:$0xff]
      %v522 = vld [vmem:[#allocation2 + $0xc7] sm:$0xff]
      %v523 = vld [vmem:[#allocation2 + $0xcf] sm:$0xff]
      %v524 = vld [vmem:[#allocation2 + $0xe7] sm:$0xff]
      %v525 = vld [vmem:[#allocation2 + $0xef] sm:$0xff]
      %v526 = vld [vmem:[#allocation2 + $0x8] sm:$0xff]
      %v527 = vld [vmem:[#allocation2 + $0x10] sm:$0xff]
      %v528 = vld [vmem:[#allocation2 + $0x28] sm:$0xff]
      %v529 = vld [vmem:[#allocation2 + $0x30] sm:$0xff]
      %v530 = vld [vmem:[#allocation2 + $0x48] sm:$0xff]
      %v531 = vld [vmem:[#allocation2 + $0x50] sm:$0xff]
      %v532 = vld [vmem:[#allocation2 + $0x68] sm:$0xff]
      %v533 = vld [vmem:[#allocation2 + $0x70] sm:$0xff]
      %v534 = vld [vmem:[#allocation2 + $0x88] sm:$0xff]
      %v535 = vld [vmem:[#allocation2 + $0x90] sm:$0xff]
      %v536 = vld [vmem:[#allocation2 + $0xa8] sm:$0xff]
      %v537 = vld [vmem:[#allocation2 + $0xb0] sm:$0xff]
      %v538 = vld [vmem:[#allocation2 + $0xc8] sm:$0xff]
      %v539 = vld [vmem:[#allocation2 + $0xd0] sm:$0xff]
      %v540 = vld [vmem:[#allocation2 + $0xe8] sm:$0xff]
      %v541 = vld [vmem:[#allocation2 + $0xf0] sm:$0xff]
      %v542 = vld [vmem:[#allocation2 + $0x9] sm:$0xff]
      %v543 = vld [vmem:[#allocation2 + $0x11] sm:$0xff]
      %v544 = vld [vmem:[#allocation2 + $0x29] sm:$0xff]
      %v545 = vld [vmem:[#allocation2 + $0x31] sm:$0xff]
      %v546 = vld [vmem:[#allocation2 + $0x49] sm:$0xff]
      %v547 = vld [vmem:[#allocation2 + $0x51] sm:$0xff]
      %v548 = vld [vmem:[#allocation2 + $0x69] sm:$0xff]
      %v549 = vld [vmem:[#allocation2 + $0x71] sm:$0xff]
      %v550 = vld [vmem:[#allocation2 + $0x89] sm:$0xff]
      %v551 = vld [vmem:[#allocation2 + $0x91] sm:$0xff]
      %v552 = vld [vmem:[#allocation2 + $0xa9] sm:$0xff]
      %v553 = vld [vmem:[#allocation2 + $0xb1] sm:$0xff]
      %v554 = vld [vmem:[#allocation2 + $0xc9] sm:$0xff]
      %v555 = vld [vmem:[#allocation2 + $0xd1] sm:$0xff]
      %v556 = vld [vmem:[#allocation2 + $0xe9] sm:$0xff]
      %v557 = vld [vmem:[#allocation2 + $0xf1] sm:$0xff]
      %v558 = vld [vmem:[%s3] sm:$0xff]
      %v559 = vld [vmem:[%s3 + $0x8] sm:$0xff]
      %v560 = vld [vmem:[%s3 + $0x10] sm:$0xff]
      %v561 = vld [vmem:[%s3 + $0x18] sm:$0xff]
      %v562 = vld [vmem:[%s3 + $0x20] sm:$0xff]
      %v563 = vld [vmem:[%s3 + $0x28] sm:$0xff]
      %v564 = vld [vmem:[%s3 + $0x30] sm:$0xff]
      %v565 = vld [vmem:[%s3 + $0x38] sm:$0xff]
      %v566 = vld [vmem:[%s3 + $0x40] sm:$0xff]
      %v567 = vld [vmem:[%s3 + $0x48] sm:$0xff]
      %v568 = vld [vmem:[%s3 + $0x50] sm:$0xff]
      %v569 = vld [vmem:[%s3 + $0x58] sm:$0xff]
      %v570 = vld [vmem:[%s3 + $0x60] sm:$0xff]
      %v571 = vld [vmem:[%s3 + $0x68] sm:$0xff]
      %v572 = vld [vmem:[%s3 + $0x70] sm:$0xff]
      %v573 = vld [vmem:[%s3 + $0x78] sm:$0xff]
      %v574 = vld [vmem:[%s3 + $0x80] sm:$0xff]
      %v575 = vld [vmem:[%s3 + $0x88] sm:$0xff]
      %v576 = vld [vmem:[%s3 + $0x90] sm:$0xff]
      %v577 = vld [vmem:[%s3 + $0x98] sm:$0xff]
      %v578 = vld [vmem:[%s3 + $0xa0] sm:$0xff]
      %v579 = vld [vmem:[%s3 + $0xa8] sm:$0xff]
      %v580 = vld [vmem:[%s3 + $0xb0] sm:$0xff]
      %v581 = vld [vmem:[%s3 + $0xb8] sm:$0xff]
      %v582 = vld [vmem:[%s3 + $0xc0] sm:$0xff]
      %v583 = vld [vmem:[%s3 + $0xc8] sm:$0xff]
      %v584 = vld [vmem:[%s3 + $0xd0] sm:$0xff]
      %v585 = vld [vmem:[%s3 + $0xd8] sm:$0xff]
      %v586 = vld [vmem:[%s3 + $0xe0] sm:$0xff]
      %v587 = vld [vmem:[%s3 + $0xe8] sm:$0xff]
      %v588 = vld [vmem:[%s3 + $0xf0] sm:$0xff]
      %v589 = vld [vmem:[%s3 + $0xf8] sm:$0xff]
      %v590 = vld [vmem:[%s3 + $0x100] sm:$0xff]
      %v591 = vld [vmem:[%s3 + $0x108] sm:$0xff]
      %v592 = vld [vmem:[%s3 + $0x110] sm:$0xff]
      %v593 = vld [vmem:[%s3 + $0x118] sm:$0xff]
      %v594 = vld [vmem:[%s3 + $0x120] sm:$0xff]
      %v595 = vld [vmem:[%s3 + $0x128] sm:$0xff]
      %v596 = vld [vmem:[%s3 + $0x130] sm:$0xff]
      %v597 = vld [vmem:[%s3 + $0x138] sm:$0xff]
      %v598 = vld [vmem:[%s3 + $0x140] sm:$0xff]
      %v599 = vld [vmem:[%s3 + $0x148] sm:$0xff]
      %v600 = vld [vmem:[%s3 + $0x150] sm:$0xff]
      %v601 = vld [vmem:[%s3 + $0x158] sm:$0xff]
      %v602 = vld [vmem:[%s3 + $0x160] sm:$0xff]
      %v603 = vld [vmem:[%s3 + $0x168] sm:$0xff]
      %v604 = vld [vmem:[%s3 + $0x170] sm:$0xff]
      %v605 = vld [vmem:[%s3 + $0x178] sm:$0xff]
      %v606 = vld [vmem:[%s445 + $0x7] sm:$0xff]
      %v607 = vld [vmem:[%s445 + $0xf] sm:$0xff]
      %v608 = vld [vmem:[%s445 + $0x27] sm:$0xff]
      %v609 = vld [vmem:[%s445 + $0x2f] sm:$0xff]
      %v610 = vld [vmem:[%s445 + $0x47] sm:$0xff]
      %v611 = vld [vmem:[%s445 + $0x4f] sm:$0xff]
      %v612 = vld [vmem:[%s445 + $0x67] sm:$0xff]
      %v613 = vld [vmem:[%s445 + $0x6f] sm:$0xff]
      %v614 = vld [vmem:[%s445 + $0x87] sm:$0xff]
      %v615 = vld [vmem:[%s445 + $0x8f] sm:$0xff]
      %v616 = vld [vmem:[%s445 + $0xa7] sm:$0xff]
      %v617 = vld [vmem:[%s445 + $0xaf] sm:$0xff]
      %v618 = vld [vmem:[%s445 + $0xc7] sm:$0xff]
      %v619 = vld [vmem:[%s445 + $0xcf] sm:$0xff]
      %v620 = vld [vmem:[%s445 + $0xe7] sm:$0xff]
      %v621 = vld [vmem:[%s445 + $0xef] sm:$0xff]
      %v622 = vld [vmem:[%s445 + $0x8] sm:$0xff]
      %v623 = vld [vmem:[%s445 + $0x10] sm:$0xff]
      %v624 = vld [vmem:[%s445 + $0x28] sm:$0xff]
      %v625 = vld [vmem:[%s445 + $0x30] sm:$0xff]
      %v626 = vld [vmem:[%s445 + $0x48] sm:$0xff]
      %v627 = vld [vmem:[%s445 + $0x50] sm:$0xff]
      %v628 = vld [vmem:[%s445 + $0x68] sm:$0xff]
      %v629 = vld [vmem:[%s445 + $0x70] sm:$0xff]
      %v630 = vld [vmem:[%s445 + $0x88] sm:$0xff]
      %v631 = vld [vmem:[%s445 + $0x90] sm:$0xff]
      %v632 = vld [vmem:[%s445 + $0xa8] sm:$0xff]
      %v633 = vld [vmem:[%s445 + $0xb0] sm:$0xff]
      %v634 = vld [vmem:[%s445 + $0xc8] sm:$0xff]
      %v635 = vld [vmem:[%s445 + $0xd0] sm:$0xff]
      %v636 = vld [vmem:[%s445 + $0xe8] sm:$0xff]
      %v637 = vld [vmem:[%s445 + $0xf0] sm:$0xff]
      %v638 = vld [vmem:[%s445 + $0x9] sm:$0xff]
      %v639 = vld [vmem:[%s445 + $0x11] sm:$0xff]
      %v640 = vld [vmem:[%s445 + $0x29] sm:$0xff]
      %v641 = vld [vmem:[%s445 + $0x31] sm:$0xff]
      %v642 = vld [vmem:[%s445 + $0x49] sm:$0xff]
      %v643 = vld [vmem:[%s445 + $0x51] sm:$0xff]
      %v644 = vld [vmem:[%s445 + $0x69] sm:$0xff]
      %v645 = vld [vmem:[%s445 + $0x71] sm:$0xff]
      %v646 = vld [vmem:[%s445 + $0x89] sm:$0xff]
      %v647 = vld [vmem:[%s445 + $0x91] sm:$0xff]
      %v648 = vld [vmem:[%s445 + $0xa9] sm:$0xff]
      %v649 = vld [vmem:[%s445 + $0xb1] sm:$0xff]
      %v650 = vld [vmem:[%s445 + $0xc9] sm:$0xff]
      %v651 = vld [vmem:[%s445 + $0xd1] sm:$0xff]
      %v652 = vld [vmem:[%s445 + $0xe9] sm:$0xff]
      %v653 = vld [vmem:[%s445 + $0xf1] sm:$0xff]
      %s654 = scalar_lea.vmem %s3, 384
      %v655 = vld [vmem:[%s654] sm:$0xff]
      %v656 = vld [vmem:[%s654 + $0x8] sm:$0xff]
      %v657 = vld [vmem:[%s654 + $0x10] sm:$0xff]
      %v658 = vld [vmem:[%s654 + $0x18] sm:$0xff]
      %v659 = vld [vmem:[%s654 + $0x20] sm:$0xff]
      %v660 = vld [vmem:[%s654 + $0x28] sm:$0xff]
      %v661 = vld [vmem:[%s654 + $0x30] sm:$0xff]
      %v662 = vld [vmem:[%s654 + $0x38] sm:$0xff]
      %v663 = vld [vmem:[%s654 + $0x40] sm:$0xff]
      %v664 = vld [vmem:[%s654 + $0x48] sm:$0xff]
      %v665 = vld [vmem:[%s654 + $0x50] sm:$0xff]
      %v666 = vld [vmem:[%s654 + $0x58] sm:$0xff]
      %v667 = vld [vmem:[%s654 + $0x60] sm:$0xff]
      %v668 = vld [vmem:[%s654 + $0x68] sm:$0xff]
      %v669 = vld [vmem:[%s654 + $0x70] sm:$0xff]
      %v670 = vld [vmem:[%s654 + $0x78] sm:$0xff]
      %v671 = vld [vmem:[%s654 + $0x80] sm:$0xff]
      %v672 = vld [vmem:[%s654 + $0x88] sm:$0xff]
      %v673 = vld [vmem:[%s654 + $0x90] sm:$0xff]
      %v674 = vld [vmem:[%s654 + $0x98] sm:$0xff]
      %v675 = vld [vmem:[%s654 + $0xa0] sm:$0xff]
      %v676 = vld [vmem:[%s654 + $0xa8] sm:$0xff]
      %v677 = vld [vmem:[%s654 + $0xb0] sm:$0xff]
      %v678 = vld [vmem:[%s654 + $0xb8] sm:$0xff]
      %v679 = vld [vmem:[%s654 + $0xc0] sm:$0xff]
      %v680 = vld [vmem:[%s654 + $0xc8] sm:$0xff]
      %v681 = vld [vmem:[%s654 + $0xd0] sm:$0xff]
      %v682 = vld [vmem:[%s654 + $0xd8] sm:$0xff]
      %v683 = vld [vmem:[%s654 + $0xe0] sm:$0xff]
      %v684 = vld [vmem:[%s654 + $0xe8] sm:$0xff]
      %v685 = vld [vmem:[%s654 + $0xf0] sm:$0xff]
      %v686 = vld [vmem:[%s654 + $0xf8] sm:$0xff]
      %v687 = vld [vmem:[%s654 + $0x100] sm:$0xff]
      %v688 = vld [vmem:[%s654 + $0x108] sm:$0xff]
      %v689 = vld [vmem:[%s654 + $0x110] sm:$0xff]
      %v690 = vld [vmem:[%s654 + $0x118] sm:$0xff]
      %v691 = vld [vmem:[%s654 + $0x120] sm:$0xff]
      %v692 = vld [vmem:[%s654 + $0x128] sm:$0xff]
      %v693 = vld [vmem:[%s654 + $0x130] sm:$0xff]
      %v694 = vld [vmem:[%s654 + $0x138] sm:$0xff]
      %v695 = vld [vmem:[%s654 + $0x140] sm:$0xff]
      %v696 = vld [vmem:[%s654 + $0x148] sm:$0xff]
      %v697 = vld [vmem:[%s654 + $0x150] sm:$0xff]
      %v698 = vld [vmem:[%s654 + $0x158] sm:$0xff]
      %v699 = vld [vmem:[%s654 + $0x160] sm:$0xff]
      %v700 = vld [vmem:[%s654 + $0x168] sm:$0xff]
      %v701 = vld [vmem:[%s654 + $0x170] sm:$0xff]
      %v702 = vld [vmem:[%s654 + $0x178] sm:$0xff]
      %703 = vmatpush.msra.mxu0 %v670
      %704 = vmatpush.msra.mxu0 %v669
      %705 = vmatpush.msra.mxu0 %v668
      %706 = vmatpush.msra.mxu0 %v667
      %707 = vmatpush.msra.mxu0 %v666
      %708 = vmatpush.msra.mxu0 %v665
      %709 = vmatpush.msra.mxu0 %v664
      %710 = vmatpush.msra.mxu0 %v663
      %711 = vmatpush.msra.mxu0 %v662
      %712 = vmatpush.msra.mxu0 %v661
      %713 = vmatpush.msra.mxu0 %v660
      %714 = vmatpush.msra.mxu0 %v659
      %715 = vmatpush.msra.mxu0 %v658
      %716 = vmatpush.msra.mxu0 %v657
      %717 = vmatpush.msra.mxu0 %v656
      %718 = vmatpush.msra.mxu0 %v655
      %719 = vmatmul.f32.gmra.mxu0 %v606
      %v720 = vpop.f32.mrf.mxu0
      %v721 = vadd.f32 0.0, %v720
      %722 = vmatmul.f32.gmra.mxu0 %v607
      %v723 = vpop.f32.mrf.mxu0
      %v724 = vadd.f32 0.0, %v723
      %725 = vmatmul.f32.gmra.mxu0 %v608
      %v726 = vpop.f32.mrf.mxu0
      %v727 = vadd.f32 0.0, %v726
      %728 = vmatmul.f32.gmra.mxu0 %v609
      %v729 = vpop.f32.mrf.mxu0
      %v730 = vadd.f32 0.0, %v729
      %731 = vmatmul.f32.gmra.mxu0 %v610
      %v732 = vpop.f32.mrf.mxu0
      %v733 = vadd.f32 0.0, %v732
      %734 = vmatmul.f32.gmra.mxu0 %v611
      %v735 = vpop.f32.mrf.mxu0
      %v736 = vadd.f32 0.0, %v735
      %737 = vmatmul.f32.gmra.mxu0 %v612
      %v738 = vpop.f32.mrf.mxu0
      %v739 = vadd.f32 0.0, %v738
      %740 = vmatmul.f32.gmra.mxu0 %v613
      %v741 = vpop.f32.mrf.mxu0
      %v742 = vadd.f32 0.0, %v741
      %743 = vmatmul.f32.gmra.mxu0 %v614
      %v744 = vpop.f32.mrf.mxu0
      %v745 = vadd.f32 0.0, %v744
      %746 = vmatmul.f32.gmra.mxu0 %v615
      %v747 = vpop.f32.mrf.mxu0
      %v748 = vadd.f32 0.0, %v747
      %749 = vmatmul.f32.gmra.mxu0 %v616
      %v750 = vpop.f32.mrf.mxu0
      %v751 = vadd.f32 0.0, %v750
      %752 = vmatmul.f32.gmra.mxu0 %v617
      %v753 = vpop.f32.mrf.mxu0
      %v754 = vadd.f32 0.0, %v753
      %755 = vmatmul.f32.gmra.mxu0 %v618
      %v756 = vpop.f32.mrf.mxu0
      %v757 = vadd.f32 0.0, %v756
      %758 = vmatmul.f32.gmra.mxu0 %v619
      %v759 = vpop.f32.mrf.mxu0
      %v760 = vadd.f32 0.0, %v759
      %761 = vmatmul.f32.gmra.mxu0 %v620
      %v762 = vpop.f32.mrf.mxu0
      %v763 = vadd.f32 0.0, %v762
      %764 = vmatmul.f32.gmra.mxu0 %v621
      %v765 = vpop.f32.mrf.mxu0
      %v766 = vadd.f32 0.0, %v765
      %767 = vdwg.mxu0
      %768 = vmatpush.msra.mxu0 %v686
      %769 = vmatpush.msra.mxu0 %v685
      %770 = vmatpush.msra.mxu0 %v684
      %771 = vmatpush.msra.mxu0 %v683
      %772 = vmatpush.msra.mxu0 %v682
      %773 = vmatpush.msra.mxu0 %v681
      %774 = vmatpush.msra.mxu0 %v680
      %775 = vmatpush.msra.mxu0 %v679
      %776 = vmatpush.msra.mxu0 %v678
      %777 = vmatpush.msra.mxu0 %v677
      %778 = vmatpush.msra.mxu0 %v676
      %779 = vmatpush.msra.mxu0 %v675
      %780 = vmatpush.msra.mxu0 %v674
      %781 = vmatpush.msra.mxu0 %v673
      %782 = vmatpush.msra.mxu0 %v672
      %783 = vmatpush.msra.mxu0 %v671
      %784 = vmatmul.f32.gmra.mxu0 %v622
      %v785 = vpop.f32.mrf.mxu0
      %v786 = vadd.f32 %v721, %v785
      %787 = vmatmul.f32.gmra.mxu0 %v623
      %v788 = vpop.f32.mrf.mxu0
      %v789 = vadd.f32 %v724, %v788
      %790 = vmatmul.f32.gmra.mxu0 %v624
      %v791 = vpop.f32.mrf.mxu0
      %v792 = vadd.f32 %v727, %v791
      %793 = vmatmul.f32.gmra.mxu0 %v625
      %v794 = vpop.f32.mrf.mxu0
      %v795 = vadd.f32 %v730, %v794
      %796 = vmatmul.f32.gmra.mxu0 %v626
      %v797 = vpop.f32.mrf.mxu0
      %v798 = vadd.f32 %v733, %v797
      %799 = vmatmul.f32.gmra.mxu0 %v627
      %v800 = vpop.f32.mrf.mxu0
      %v801 = vadd.f32 %v736, %v800
      %802 = vmatmul.f32.gmra.mxu0 %v628
      %v803 = vpop.f32.mrf.mxu0
      %v804 = vadd.f32 %v739, %v803
      %805 = vmatmul.f32.gmra.mxu0 %v629
      %v806 = vpop.f32.mrf.mxu0
      %v807 = vadd.f32 %v742, %v806
      %808 = vmatmul.f32.gmra.mxu0 %v630
      %v809 = vpop.f32.mrf.mxu0
      %v810 = vadd.f32 %v745, %v809
      %811 = vmatmul.f32.gmra.mxu0 %v631
      %v812 = vpop.f32.mrf.mxu0
      %v813 = vadd.f32 %v748, %v812
      %814 = vmatmul.f32.gmra.mxu0 %v632
      %v815 = vpop.f32.mrf.mxu0
      %v816 = vadd.f32 %v751, %v815
      %817 = vmatmul.f32.gmra.mxu0 %v633
      %v818 = vpop.f32.mrf.mxu0
      %v819 = vadd.f32 %v754, %v818
      %820 = vmatmul.f32.gmra.mxu0 %v634
      %v821 = vpop.f32.mrf.mxu0
      %v822 = vadd.f32 %v757, %v821
      %823 = vmatmul.f32.gmra.mxu0 %v635
      %v824 = vpop.f32.mrf.mxu0
      %v825 = vadd.f32 %v760, %v824
      %826 = vmatmul.f32.gmra.mxu0 %v636
      %v827 = vpop.f32.mrf.mxu0
      %v828 = vadd.f32 %v763, %v827
      %829 = vmatmul.f32.gmra.mxu0 %v637
      %v830 = vpop.f32.mrf.mxu0
      %v831 = vadd.f32 %v766, %v830
      %832 = vdwg.mxu0
      %833 = vmatpush.msra.mxu0 %v702
      %834 = vmatpush.msra.mxu0 %v701
      %835 = vmatpush.msra.mxu0 %v700
      %836 = vmatpush.msra.mxu0 %v699
      %837 = vmatpush.msra.mxu0 %v698
      %838 = vmatpush.msra.mxu0 %v697
      %839 = vmatpush.msra.mxu0 %v696
      %840 = vmatpush.msra.mxu0 %v695
      %841 = vmatpush.msra.mxu0 %v694
      %842 = vmatpush.msra.mxu0 %v693
      %843 = vmatpush.msra.mxu0 %v692
      %844 = vmatpush.msra.mxu0 %v691
      %845 = vmatpush.msra.mxu0 %v690
      %846 = vmatpush.msra.mxu0 %v689
      %847 = vmatpush.msra.mxu0 %v688
      %848 = vmatpush.msra.mxu0 %v687
      %849 = vmatmul.f32.gmra.mxu0 %v638
      %v850 = vpop.f32.mrf.mxu0
      %v851 = vadd.f32 %v786, %v850
      %852 = vmatmul.f32.gmra.mxu0 %v639
      %v853 = vpop.f32.mrf.mxu0
      %v854 = vadd.f32 %v789, %v853
      %855 = vmatmul.f32.gmra.mxu0 %v640
      %v856 = vpop.f32.mrf.mxu0
      %v857 = vadd.f32 %v792, %v856
      %858 = vmatmul.f32.gmra.mxu0 %v641
      %v859 = vpop.f32.mrf.mxu0
      %v860 = vadd.f32 %v795, %v859
      %861 = vmatmul.f32.gmra.mxu0 %v642
      %v862 = vpop.f32.mrf.mxu0
      %v863 = vadd.f32 %v798, %v862
      %864 = vmatmul.f32.gmra.mxu0 %v643
      %v865 = vpop.f32.mrf.mxu0
      %v866 = vadd.f32 %v801, %v865
      %867 = vmatmul.f32.gmra.mxu0 %v644
      %v868 = vpop.f32.mrf.mxu0
      %v869 = vadd.f32 %v804, %v868
      %870 = vmatmul.f32.gmra.mxu0 %v645
      %v871 = vpop.f32.mrf.mxu0
      %v872 = vadd.f32 %v807, %v871
      %873 = vmatmul.f32.gmra.mxu0 %v646
      %v874 = vpop.f32.mrf.mxu0
      %v875 = vadd.f32 %v810, %v874
      %876 = vmatmul.f32.gmra.mxu0 %v647
      %v877 = vpop.f32.mrf.mxu0
      %v878 = vadd.f32 %v813, %v877
      %879 = vmatmul.f32.gmra.mxu0 %v648
      %v880 = vpop.f32.mrf.mxu0
      %v881 = vadd.f32 %v816, %v880
      %882 = vmatmul.f32.gmra.mxu0 %v649
      %v883 = vpop.f32.mrf.mxu0
      %v884 = vadd.f32 %v819, %v883
      %885 = vmatmul.f32.gmra.mxu0 %v650
      %v886 = vpop.f32.mrf.mxu0
      %v887 = vadd.f32 %v822, %v886
      %888 = vmatmul.f32.gmra.mxu0 %v651
      %v889 = vpop.f32.mrf.mxu0
      %v890 = vadd.f32 %v825, %v889
      %891 = vmatmul.f32.gmra.mxu0 %v652
      %v892 = vpop.f32.mrf.mxu0
      %v893 = vadd.f32 %v828, %v892
      %894 = vmatmul.f32.gmra.mxu0 %v653
      %v895 = vpop.f32.mrf.mxu0
      %v896 = vadd.f32 %v831, %v895
      %897 = vdwg.mxu0
      %898 = vmatpush.msra.mxu0 %v573
      %899 = vmatpush.msra.mxu0 %v572
      %900 = vmatpush.msra.mxu0 %v571
      %901 = vmatpush.msra.mxu0 %v570
      %902 = vmatpush.msra.mxu0 %v569
      %903 = vmatpush.msra.mxu0 %v568
      %904 = vmatpush.msra.mxu0 %v567
      %905 = vmatpush.msra.mxu0 %v566
      %906 = vmatpush.msra.mxu0 %v565
      %907 = vmatpush.msra.mxu0 %v564
      %908 = vmatpush.msra.mxu0 %v563
      %909 = vmatpush.msra.mxu0 %v562
      %910 = vmatpush.msra.mxu0 %v561
      %911 = vmatpush.msra.mxu0 %v560
      %912 = vmatpush.msra.mxu0 %v559
      %913 = vmatpush.msra.mxu0 %v558
      %914 = vmatmul.f32.gmra.mxu0 %v510
      %v915 = vpop.f32.mrf.mxu0
      %v916 = vadd.f32 %v851, %v915
      %917 = vmatmul.f32.gmra.mxu0 %v511
      %v918 = vpop.f32.mrf.mxu0
      %v919 = vadd.f32 %v854, %v918
      %920 = vmatmul.f32.gmra.mxu0 %v512
      %v921 = vpop.f32.mrf.mxu0
      %v922 = vadd.f32 %v857, %v921
      %923 = vmatmul.f32.gmra.mxu0 %v513
      %v924 = vpop.f32.mrf.mxu0
      %v925 = vadd.f32 %v860, %v924
      %926 = vmatmul.f32.gmra.mxu0 %v514
      %v927 = vpop.f32.mrf.mxu0
      %v928 = vadd.f32 %v863, %v927
      %929 = vmatmul.f32.gmra.mxu0 %v515
      %v930 = vpop.f32.mrf.mxu0
      %v931 = vadd.f32 %v866, %v930
      %932 = vmatmul.f32.gmra.mxu0 %v516
      %v933 = vpop.f32.mrf.mxu0
      %v934 = vadd.f32 %v869, %v933
      %935 = vmatmul.f32.gmra.mxu0 %v517
      %v936 = vpop.f32.mrf.mxu0
      %v937 = vadd.f32 %v872, %v936
      %938 = vmatmul.f32.gmra.mxu0 %v518
      %v939 = vpop.f32.mrf.mxu0
      %v940 = vadd.f32 %v875, %v939
      %941 = vmatmul.f32.gmra.mxu0 %v519
      %v942 = vpop.f32.mrf.mxu0
      %v943 = vadd.f32 %v878, %v942
      %944 = vmatmul.f32.gmra.mxu0 %v520
      %v945 = vpop.f32.mrf.mxu0
      %v946 = vadd.f32 %v881, %v945
      %947 = vmatmul.f32.gmra.mxu0 %v521
      %v948 = vpop.f32.mrf.mxu0
      %v949 = vadd.f32 %v884, %v948
      %950 = vmatmul.f32.gmra.mxu0 %v522
      %v951 = vpop.f32.mrf.mxu0
      %v952 = vadd.f32 %v887, %v951
      %953 = vmatmul.f32.gmra.mxu0 %v523
      %v954 = vpop.f32.mrf.mxu0
      %v955 = vadd.f32 %v890, %v954
      %956 = vmatmul.f32.gmra.mxu0 %v524
      %v957 = vpop.f32.mrf.mxu0
      %v958 = vadd.f32 %v893, %v957
      %959 = vmatmul.f32.gmra.mxu0 %v525
      %v960 = vpop.f32.mrf.mxu0
      %v961 = vadd.f32 %v896, %v960
      %962 = vdwg.mxu0
      %963 = vmatpush.msra.mxu0 %v589
      %964 = vmatpush.msra.mxu0 %v588
      %965 = vmatpush.msra.mxu0 %v587
      %966 = vmatpush.msra.mxu0 %v586
      %967 = vmatpush.msra.mxu0 %v585
      %968 = vmatpush.msra.mxu0 %v584
      %969 = vmatpush.msra.mxu0 %v583
      %970 = vmatpush.msra.mxu0 %v582
      %971 = vmatpush.msra.mxu0 %v581
      %972 = vmatpush.msra.mxu0 %v580
      %973 = vmatpush.msra.mxu0 %v579
      %974 = vmatpush.msra.mxu0 %v578
      %975 = vmatpush.msra.mxu0 %v577
      %976 = vmatpush.msra.mxu0 %v576
      %977 = vmatpush.msra.mxu0 %v575
      %978 = vmatpush.msra.mxu0 %v574
      %979 = vmatmul.f32.gmra.mxu0 %v526
      %v980 = vpop.f32.mrf.mxu0
      %v981 = vadd.f32 %v916, %v980
      %982 = vmatmul.f32.gmra.mxu0 %v527
      %v983 = vpop.f32.mrf.mxu0
      %v984 = vadd.f32 %v919, %v983
      %985 = vmatmul.f32.gmra.mxu0 %v528
      %v986 = vpop.f32.mrf.mxu0
      %v987 = vadd.f32 %v922, %v986
      %988 = vmatmul.f32.gmra.mxu0 %v529
      %v989 = vpop.f32.mrf.mxu0
      %v990 = vadd.f32 %v925, %v989
      %991 = vmatmul.f32.gmra.mxu0 %v530
      %v992 = vpop.f32.mrf.mxu0
      %v993 = vadd.f32 %v928, %v992
      %994 = vmatmul.f32.gmra.mxu0 %v531
      %v995 = vpop.f32.mrf.mxu0
      %v996 = vadd.f32 %v931, %v995
      %997 = vmatmul.f32.gmra.mxu0 %v532
      %v998 = vpop.f32.mrf.mxu0
      %v999 = vadd.f32 %v934, %v998
      %1000 = vmatmul.f32.gmra.mxu0 %v533
      %v1001 = vpop.f32.mrf.mxu0
      %v1002 = vadd.f32 %v937, %v1001
      %1003 = vmatmul.f32.gmra.mxu0 %v534
      %v1004 = vpop.f32.mrf.mxu0
      %v1005 = vadd.f32 %v940, %v1004
      %1006 = vmatmul.f32.gmra.mxu0 %v535
      %v1007 = vpop.f32.mrf.mxu0
      %v1008 = vadd.f32 %v943, %v1007
      %1009 = vmatmul.f32.gmra.mxu0 %v536
      %v1010 = vpop.f32.mrf.mxu0
      %v1011 = vadd.f32 %v946, %v1010
      %1012 = vmatmul.f32.gmra.mxu0 %v537
      %v1013 = vpop.f32.mrf.mxu0
      %v1014 = vadd.f32 %v949, %v1013
      %1015 = vmatmul.f32.gmra.mxu0 %v538
      %v1016 = vpop.f32.mrf.mxu0
      %v1017 = vadd.f32 %v952, %v1016
      %1018 = vmatmul.f32.gmra.mxu0 %v539
      %v1019 = vpop.f32.mrf.mxu0
      %v1020 = vadd.f32 %v955, %v1019
      %1021 = vmatmul.f32.gmra.mxu0 %v540
      %v1022 = vpop.f32.mrf.mxu0
      %v1023 = vadd.f32 %v958, %v1022
      %1024 = vmatmul.f32.gmra.mxu0 %v541
      %v1025 = vpop.f32.mrf.mxu0
      %v1026 = vadd.f32 %v961, %v1025
      %1027 = vdwg.mxu0
      %1028 = vmatpush.msra.mxu0 %v605
      %1029 = vmatpush.msra.mxu0 %v604
      %1030 = vmatpush.msra.mxu0 %v603
      %1031 = vmatpush.msra.mxu0 %v602
      %1032 = vmatpush.msra.mxu0 %v601
      %1033 = vmatpush.msra.mxu0 %v600
      %1034 = vmatpush.msra.mxu0 %v599
      %1035 = vmatpush.msra.mxu0 %v598
      %1036 = vmatpush.msra.mxu0 %v597
      %1037 = vmatpush.msra.mxu0 %v596
      %1038 = vmatpush.msra.mxu0 %v595
      %1039 = vmatpush.msra.mxu0 %v594
      %1040 = vmatpush.msra.mxu0 %v593
      %1041 = vmatpush.msra.mxu0 %v592
      %1042 = vmatpush.msra.mxu0 %v591
      %1043 = vmatpush.msra.mxu0 %v590
      %1044 = vmatmul.f32.gmra.mxu0 %v542
      %v1045 = vpop.f32.mrf.mxu0
      %v1046 = vadd.f32 %v981, %v1045
      %1047 = vmatmul.f32.gmra.mxu0 %v543
      %v1048 = vpop.f32.mrf.mxu0
      %v1049 = vadd.f32 %v984, %v1048
      %1050 = vmatmul.f32.gmra.mxu0 %v544
      %v1051 = vpop.f32.mrf.mxu0
      %v1052 = vadd.f32 %v987, %v1051
      %1053 = vmatmul.f32.gmra.mxu0 %v545
      %v1054 = vpop.f32.mrf.mxu0
      %v1055 = vadd.f32 %v990, %v1054
      %1056 = vmatmul.f32.gmra.mxu0 %v546
      %v1057 = vpop.f32.mrf.mxu0
      %v1058 = vadd.f32 %v993, %v1057
      %1059 = vmatmul.f32.gmra.mxu0 %v547
      %v1060 = vpop.f32.mrf.mxu0
      %v1061 = vadd.f32 %v996, %v1060
      %1062 = vmatmul.f32.gmra.mxu0 %v548
      %v1063 = vpop.f32.mrf.mxu0
      %v1064 = vadd.f32 %v999, %v1063
      %1065 = vmatmul.f32.gmra.mxu0 %v549
      %v1066 = vpop.f32.mrf.mxu0
      %v1067 = vadd.f32 %v1002, %v1066
      %1068 = vmatmul.f32.gmra.mxu0 %v550
      %v1069 = vpop.f32.mrf.mxu0
      %v1070 = vadd.f32 %v1005, %v1069
      %1071 = vmatmul.f32.gmra.mxu0 %v551
      %v1072 = vpop.f32.mrf.mxu0
      %v1073 = vadd.f32 %v1008, %v1072
      %1074 = vmatmul.f32.gmra.mxu0 %v552
      %v1075 = vpop.f32.mrf.mxu0
      %v1076 = vadd.f32 %v1011, %v1075
      %1077 = vmatmul.f32.gmra.mxu0 %v553
      %v1078 = vpop.f32.mrf.mxu0
      %v1079 = vadd.f32 %v1014, %v1078
      %1080 = vmatmul.f32.gmra.mxu0 %v554
      %v1081 = vpop.f32.mrf.mxu0
      %v1082 = vadd.f32 %v1017, %v1081
      %1083 = vmatmul.f32.gmra.mxu0 %v555
      %v1084 = vpop.f32.mrf.mxu0
      %v1085 = vadd.f32 %v1020, %v1084
      %1086 = vmatmul.f32.gmra.mxu0 %v556
      %v1087 = vpop.f32.mrf.mxu0
      %v1088 = vadd.f32 %v1023, %v1087
      %1089 = vmatmul.f32.gmra.mxu0 %v557
      %v1090 = vpop.f32.mrf.mxu0
      %v1091 = vadd.f32 %v1026, %v1090
      %1092 = vdwg.mxu0
      %s1093 = scalar_lea.vmem [#allocation2], 64
      %v1094 = vld [vmem:[%s1093 + $0x7] sm:$0xff]
      %v1095 = vld [vmem:[%s1093 + $0xf] sm:$0xff]
      %v1096 = vld [vmem:[%s1093 + $0x27] sm:$0xff]
      %v1097 = vld [vmem:[%s1093 + $0x2f] sm:$0xff]
      %v1098 = vld [vmem:[%s1093 + $0x47] sm:$0xff]
      %v1099 = vld [vmem:[%s1093 + $0x4f] sm:$0xff]
      %v1100 = vld [vmem:[%s1093 + $0x67] sm:$0xff]
      %v1101 = vld [vmem:[%s1093 + $0x6f] sm:$0xff]
      %v1102 = vld [vmem:[%s1093 + $0x87] sm:$0xff]
      %v1103 = vld [vmem:[%s1093 + $0x8f] sm:$0xff]
      %v1104 = vld [vmem:[%s1093 + $0xa7] sm:$0xff]
      %v1105 = vld [vmem:[%s1093 + $0xaf] sm:$0xff]
      %v1106 = vld [vmem:[%s1093 + $0xc7] sm:$0xff]
      %v1107 = vld [vmem:[%s1093 + $0xcf] sm:$0xff]
      %v1108 = vld [vmem:[%s1093 + $0xe7] sm:$0xff]
      %v1109 = vld [vmem:[%s1093 + $0xef] sm:$0xff]
      %v1110 = vld [vmem:[%s1093 + $0x8] sm:$0xff]
      %v1111 = vld [vmem:[%s1093 + $0x10] sm:$0xff]
      %v1112 = vld [vmem:[%s1093 + $0x28] sm:$0xff]
      %v1113 = vld [vmem:[%s1093 + $0x30] sm:$0xff]
      %v1114 = vld [vmem:[%s1093 + $0x48] sm:$0xff]
      %v1115 = vld [vmem:[%s1093 + $0x50] sm:$0xff]
      %v1116 = vld [vmem:[%s1093 + $0x68] sm:$0xff]
      %v1117 = vld [vmem:[%s1093 + $0x70] sm:$0xff]
      %v1118 = vld [vmem:[%s1093 + $0x88] sm:$0xff]
      %v1119 = vld [vmem:[%s1093 + $0x90] sm:$0xff]
      %v1120 = vld [vmem:[%s1093 + $0xa8] sm:$0xff]
      %v1121 = vld [vmem:[%s1093 + $0xb0] sm:$0xff]
      %v1122 = vld [vmem:[%s1093 + $0xc8] sm:$0xff]
      %v1123 = vld [vmem:[%s1093 + $0xd0] sm:$0xff]
      %v1124 = vld [vmem:[%s1093 + $0xe8] sm:$0xff]
      %v1125 = vld [vmem:[%s1093 + $0xf0] sm:$0xff]
      %v1126 = vld [vmem:[%s1093 + $0x9] sm:$0xff]
      %v1127 = vld [vmem:[%s1093 + $0x11] sm:$0xff]
      %v1128 = vld [vmem:[%s1093 + $0x29] sm:$0xff]
      %v1129 = vld [vmem:[%s1093 + $0x31] sm:$0xff]
      %v1130 = vld [vmem:[%s1093 + $0x49] sm:$0xff]
      %v1131 = vld [vmem:[%s1093 + $0x51] sm:$0xff]
      %v1132 = vld [vmem:[%s1093 + $0x69] sm:$0xff]
      %v1133 = vld [vmem:[%s1093 + $0x71] sm:$0xff]
      %v1134 = vld [vmem:[%s1093 + $0x89] sm:$0xff]
      %v1135 = vld [vmem:[%s1093 + $0x91] sm:$0xff]
      %v1136 = vld [vmem:[%s1093 + $0xa9] sm:$0xff]
      %v1137 = vld [vmem:[%s1093 + $0xb1] sm:$0xff]
      %v1138 = vld [vmem:[%s1093 + $0xc9] sm:$0xff]
      %v1139 = vld [vmem:[%s1093 + $0xd1] sm:$0xff]
      %v1140 = vld [vmem:[%s1093 + $0xe9] sm:$0xff]
      %v1141 = vld [vmem:[%s1093 + $0xf1] sm:$0xff]
      %s1142 = scalar_lea.vmem %s3, 768
      %v1143 = vld [vmem:[%s1142] sm:$0xff]
      %v1144 = vld [vmem:[%s1142 + $0x8] sm:$0xff]
      %v1145 = vld [vmem:[%s1142 + $0x10] sm:$0xff]
      %v1146 = vld [vmem:[%s1142 + $0x18] sm:$0xff]
      %v1147 = vld [vmem:[%s1142 + $0x20] sm:$0xff]
      %v1148 = vld [vmem:[%s1142 + $0x28] sm:$0xff]
      %v1149 = vld [vmem:[%s1142 + $0x30] sm:$0xff]
      %v1150 = vld [vmem:[%s1142 + $0x38] sm:$0xff]
      %v1151 = vld [vmem:[%s1142 + $0x40] sm:$0xff]
      %v1152 = vld [vmem:[%s1142 + $0x48] sm:$0xff]
      %v1153 = vld [vmem:[%s1142 + $0x50] sm:$0xff]
      %v1154 = vld [vmem:[%s1142 + $0x58] sm:$0xff]
      %v1155 = vld [vmem:[%s1142 + $0x60] sm:$0xff]
      %v1156 = vld [vmem:[%s1142 + $0x68] sm:$0xff]
      %v1157 = vld [vmem:[%s1142 + $0x70] sm:$0xff]
      %v1158 = vld [vmem:[%s1142 + $0x78] sm:$0xff]
      %v1159 = vld [vmem:[%s1142 + $0x80] sm:$0xff]
      %v1160 = vld [vmem:[%s1142 + $0x88] sm:$0xff]
      %v1161 = vld [vmem:[%s1142 + $0x90] sm:$0xff]
      %v1162 = vld [vmem:[%s1142 + $0x98] sm:$0xff]
      %v1163 = vld [vmem:[%s1142 + $0xa0] sm:$0xff]
      %v1164 = vld [vmem:[%s1142 + $0xa8] sm:$0xff]
      %v1165 = vld [vmem:[%s1142 + $0xb0] sm:$0xff]
      %v1166 = vld [vmem:[%s1142 + $0xb8] sm:$0xff]
      %v1167 = vld [vmem:[%s1142 + $0xc0] sm:$0xff]
      %v1168 = vld [vmem:[%s1142 + $0xc8] sm:$0xff]
      %v1169 = vld [vmem:[%s1142 + $0xd0] sm:$0xff]
      %v1170 = vld [vmem:[%s1142 + $0xd8] sm:$0xff]
      %v1171 = vld [vmem:[%s1142 + $0xe0] sm:$0xff]
      %v1172 = vld [vmem:[%s1142 + $0xe8] sm:$0xff]
      %v1173 = vld [vmem:[%s1142 + $0xf0] sm:$0xff]
      %v1174 = vld [vmem:[%s1142 + $0xf8] sm:$0xff]
      %v1175 = vld [vmem:[%s1142 + $0x100] sm:$0xff]
      %v1176 = vld [vmem:[%s1142 + $0x108] sm:$0xff]
      %v1177 = vld [vmem:[%s1142 + $0x110] sm:$0xff]
      %v1178 = vld [vmem:[%s1142 + $0x118] sm:$0xff]
      %v1179 = vld [vmem:[%s1142 + $0x120] sm:$0xff]
      %v1180 = vld [vmem:[%s1142 + $0x128] sm:$0xff]
      %v1181 = vld [vmem:[%s1142 + $0x130] sm:$0xff]
      %v1182 = vld [vmem:[%s1142 + $0x138] sm:$0xff]
      %v1183 = vld [vmem:[%s1142 + $0x140] sm:$0xff]
      %v1184 = vld [vmem:[%s1142 + $0x148] sm:$0xff]
      %v1185 = vld [vmem:[%s1142 + $0x150] sm:$0xff]
      %v1186 = vld [vmem:[%s1142 + $0x158] sm:$0xff]
      %v1187 = vld [vmem:[%s1142 + $0x160] sm:$0xff]
      %v1188 = vld [vmem:[%s1142 + $0x168] sm:$0xff]
      %v1189 = vld [vmem:[%s1142 + $0x170] sm:$0xff]
      %v1190 = vld [vmem:[%s1142 + $0x178] sm:$0xff]
      %1191 = vmatpush.msra.mxu0 %v1158
      %1192 = vmatpush.msra.mxu0 %v1157
      %1193 = vmatpush.msra.mxu0 %v1156
      %1194 = vmatpush.msra.mxu0 %v1155
      %1195 = vmatpush.msra.mxu0 %v1154
      %1196 = vmatpush.msra.mxu0 %v1153
      %1197 = vmatpush.msra.mxu0 %v1152
      %1198 = vmatpush.msra.mxu0 %v1151
      %1199 = vmatpush.msra.mxu0 %v1150
      %1200 = vmatpush.msra.mxu0 %v1149
      %1201 = vmatpush.msra.mxu0 %v1148
      %1202 = vmatpush.msra.mxu0 %v1147
      %1203 = vmatpush.msra.mxu0 %v1146
      %1204 = vmatpush.msra.mxu0 %v1145
      %1205 = vmatpush.msra.mxu0 %v1144
      %1206 = vmatpush.msra.mxu0 %v1143
      %1207 = vmatmul.f32.gmra.mxu0 %v1094
      %v1208 = vpop.f32.mrf.mxu0
      %v1209 = vadd.f32 0.0, %v1208
      %1210 = vmatmul.f32.gmra.mxu0 %v1095
      %v1211 = vpop.f32.mrf.mxu0
      %v1212 = vadd.f32 0.0, %v1211
      %1213 = vmatmul.f32.gmra.mxu0 %v1096
      %v1214 = vpop.f32.mrf.mxu0
      %v1215 = vadd.f32 0.0, %v1214
      %1216 = vmatmul.f32.gmra.mxu0 %v1097
      %v1217 = vpop.f32.mrf.mxu0
      %v1218 = vadd.f32 0.0, %v1217
      %1219 = vmatmul.f32.gmra.mxu0 %v1098
      %v1220 = vpop.f32.mrf.mxu0
      %v1221 = vadd.f32 0.0, %v1220
      %1222 = vmatmul.f32.gmra.mxu0 %v1099
      %v1223 = vpop.f32.mrf.mxu0
      %v1224 = vadd.f32 0.0, %v1223
      %1225 = vmatmul.f32.gmra.mxu0 %v1100
      %v1226 = vpop.f32.mrf.mxu0
      %v1227 = vadd.f32 0.0, %v1226
      %1228 = vmatmul.f32.gmra.mxu0 %v1101
      %v1229 = vpop.f32.mrf.mxu0
      %v1230 = vadd.f32 0.0, %v1229
      %1231 = vmatmul.f32.gmra.mxu0 %v1102
      %v1232 = vpop.f32.mrf.mxu0
      %v1233 = vadd.f32 0.0, %v1232
      %1234 = vmatmul.f32.gmra.mxu0 %v1103
      %v1235 = vpop.f32.mrf.mxu0
      %v1236 = vadd.f32 0.0, %v1235
      %1237 = vmatmul.f32.gmra.mxu0 %v1104
      %v1238 = vpop.f32.mrf.mxu0
      %v1239 = vadd.f32 0.0, %v1238
      %1240 = vmatmul.f32.gmra.mxu0 %v1105
      %v1241 = vpop.f32.mrf.mxu0
      %v1242 = vadd.f32 0.0, %v1241
      %1243 = vmatmul.f32.gmra.mxu0 %v1106
      %v1244 = vpop.f32.mrf.mxu0
      %v1245 = vadd.f32 0.0, %v1244
      %1246 = vmatmul.f32.gmra.mxu0 %v1107
      %v1247 = vpop.f32.mrf.mxu0
      %v1248 = vadd.f32 0.0, %v1247
      %1249 = vmatmul.f32.gmra.mxu0 %v1108
      %v1250 = vpop.f32.mrf.mxu0
      %v1251 = vadd.f32 0.0, %v1250
      %1252 = vmatmul.f32.gmra.mxu0 %v1109
      %v1253 = vpop.f32.mrf.mxu0
      %v1254 = vadd.f32 0.0, %v1253
      %1255 = vdwg.mxu0
      %1256 = vmatpush.msra.mxu0 %v1174
      %1257 = vmatpush.msra.mxu0 %v1173
      %1258 = vmatpush.msra.mxu0 %v1172
      %1259 = vmatpush.msra.mxu0 %v1171
      %1260 = vmatpush.msra.mxu0 %v1170
      %1261 = vmatpush.msra.mxu0 %v1169
      %1262 = vmatpush.msra.mxu0 %v1168
      %1263 = vmatpush.msra.mxu0 %v1167
      %1264 = vmatpush.msra.mxu0 %v1166
      %1265 = vmatpush.msra.mxu0 %v1165
      %1266 = vmatpush.msra.mxu0 %v1164
      %1267 = vmatpush.msra.mxu0 %v1163
      %1268 = vmatpush.msra.mxu0 %v1162
      %1269 = vmatpush.msra.mxu0 %v1161
      %1270 = vmatpush.msra.mxu0 %v1160
      %1271 = vmatpush.msra.mxu0 %v1159
      %1272 = vmatmul.f32.gmra.mxu0 %v1110
      %v1273 = vpop.f32.mrf.mxu0
      %v1274 = vadd.f32 %v1209, %v1273
      %1275 = vmatmul.f32.gmra.mxu0 %v1111
      %v1276 = vpop.f32.mrf.mxu0
      %v1277 = vadd.f32 %v1212, %v1276
      %1278 = vmatmul.f32.gmra.mxu0 %v1112
      %v1279 = vpop.f32.mrf.mxu0
      %v1280 = vadd.f32 %v1215, %v1279
      %1281 = vmatmul.f32.gmra.mxu0 %v1113
      %v1282 = vpop.f32.mrf.mxu0
      %v1283 = vadd.f32 %v1218, %v1282
      %1284 = vmatmul.f32.gmra.mxu0 %v1114
      %v1285 = vpop.f32.mrf.mxu0
      %v1286 = vadd.f32 %v1221, %v1285
      %1287 = vmatmul.f32.gmra.mxu0 %v1115
      %v1288 = vpop.f32.mrf.mxu0
      %v1289 = vadd.f32 %v1224, %v1288
      %1290 = vmatmul.f32.gmra.mxu0 %v1116
      %v1291 = vpop.f32.mrf.mxu0
      %v1292 = vadd.f32 %v1227, %v1291
      %1293 = vmatmul.f32.gmra.mxu0 %v1117
      %v1294 = vpop.f32.mrf.mxu0
      %v1295 = vadd.f32 %v1230, %v1294
      %1296 = vmatmul.f32.gmra.mxu0 %v1118
      %v1297 = vpop.f32.mrf.mxu0
      %v1298 = vadd.f32 %v1233, %v1297
      %1299 = vmatmul.f32.gmra.mxu0 %v1119
      %v1300 = vpop.f32.mrf.mxu0
      %v1301 = vadd.f32 %v1236, %v1300
      %1302 = vmatmul.f32.gmra.mxu0 %v1120
      %v1303 = vpop.f32.mrf.mxu0
      %v1304 = vadd.f32 %v1239, %v1303
      %1305 = vmatmul.f32.gmra.mxu0 %v1121
      %v1306 = vpop.f32.mrf.mxu0
      %v1307 = vadd.f32 %v1242, %v1306
      %1308 = vmatmul.f32.gmra.mxu0 %v1122
      %v1309 = vpop.f32.mrf.mxu0
      %v1310 = vadd.f32 %v1245, %v1309
      %1311 = vmatmul.f32.gmra.mxu0 %v1123
      %v1312 = vpop.f32.mrf.mxu0
      %v1313 = vadd.f32 %v1248, %v1312
      %1314 = vmatmul.f32.gmra.mxu0 %v1124
      %v1315 = vpop.f32.mrf.mxu0
      %v1316 = vadd.f32 %v1251, %v1315
      %1317 = vmatmul.f32.gmra.mxu0 %v1125
      %v1318 = vpop.f32.mrf.mxu0
      %v1319 = vadd.f32 %v1254, %v1318
      %1320 = vdwg.mxu0
      %1321 = vmatpush.msra.mxu0 %v1190
      %1322 = vmatpush.msra.mxu0 %v1189
      %1323 = vmatpush.msra.mxu0 %v1188
      %1324 = vmatpush.msra.mxu0 %v1187
      %1325 = vmatpush.msra.mxu0 %v1186
      %1326 = vmatpush.msra.mxu0 %v1185
      %1327 = vmatpush.msra.mxu0 %v1184
      %1328 = vmatpush.msra.mxu0 %v1183
      %1329 = vmatpush.msra.mxu0 %v1182
      %1330 = vmatpush.msra.mxu0 %v1181
      %1331 = vmatpush.msra.mxu0 %v1180
      %1332 = vmatpush.msra.mxu0 %v1179
      %1333 = vmatpush.msra.mxu0 %v1178
      %1334 = vmatpush.msra.mxu0 %v1177
      %1335 = vmatpush.msra.mxu0 %v1176
      %1336 = vmatpush.msra.mxu0 %v1175
      %1337 = vmatmul.f32.gmra.mxu0 %v1126
      %v1338 = vpop.f32.mrf.mxu0
      %v1339 = vadd.f32 %v1274, %v1338
      %1340 = vmatmul.f32.gmra.mxu0 %v1127
      %v1341 = vpop.f32.mrf.mxu0
      %v1342 = vadd.f32 %v1277, %v1341
      %1343 = vmatmul.f32.gmra.mxu0 %v1128
      %v1344 = vpop.f32.mrf.mxu0
      %v1345 = vadd.f32 %v1280, %v1344
      %1346 = vmatmul.f32.gmra.mxu0 %v1129
      %v1347 = vpop.f32.mrf.mxu0
      %v1348 = vadd.f32 %v1283, %v1347
      %1349 = vmatmul.f32.gmra.mxu0 %v1130
      %v1350 = vpop.f32.mrf.mxu0
      %v1351 = vadd.f32 %v1286, %v1350
      %1352 = vmatmul.f32.gmra.mxu0 %v1131
      %v1353 = vpop.f32.mrf.mxu0
      %v1354 = vadd.f32 %v1289, %v1353
      %1355 = vmatmul.f32.gmra.mxu0 %v1132
      %v1356 = vpop.f32.mrf.mxu0
      %v1357 = vadd.f32 %v1292, %v1356
      %1358 = vmatmul.f32.gmra.mxu0 %v1133
      %v1359 = vpop.f32.mrf.mxu0
      %v1360 = vadd.f32 %v1295, %v1359
      %1361 = vmatmul.f32.gmra.mxu0 %v1134
      %v1362 = vpop.f32.mrf.mxu0
      %v1363 = vadd.f32 %v1298, %v1362
      %1364 = vmatmul.f32.gmra.mxu0 %v1135
      %v1365 = vpop.f32.mrf.mxu0
      %v1366 = vadd.f32 %v1301, %v1365
      %1367 = vmatmul.f32.gmra.mxu0 %v1136
      %v1368 = vpop.f32.mrf.mxu0
      %v1369 = vadd.f32 %v1304, %v1368
      %1370 = vmatmul.f32.gmra.mxu0 %v1137
      %v1371 = vpop.f32.mrf.mxu0
      %v1372 = vadd.f32 %v1307, %v1371
      %1373 = vmatmul.f32.gmra.mxu0 %v1138
      %v1374 = vpop.f32.mrf.mxu0
      %v1375 = vadd.f32 %v1310, %v1374
      %1376 = vmatmul.f32.gmra.mxu0 %v1139
      %v1377 = vpop.f32.mrf.mxu0
      %v1378 = vadd.f32 %v1313, %v1377
      %1379 = vmatmul.f32.gmra.mxu0 %v1140
      %v1380 = vpop.f32.mrf.mxu0
      %v1381 = vadd.f32 %v1316, %v1380
      %1382 = vmatmul.f32.gmra.mxu0 %v1141
      %v1383 = vpop.f32.mrf.mxu0
      %v1384 = vadd.f32 %v1319, %v1383
      %1385 = vdwg.mxu0
      %v1386 = vadd.f32 %v1046, %v1339
      %v1387 = vadd.f32 %v1049, %v1342
      %v1388 = vadd.f32 %v1052, %v1345
      %v1389 = vadd.f32 %v1055, %v1348
      %v1390 = vadd.f32 %v1058, %v1351
      %v1391 = vadd.f32 %v1061, %v1354
      %v1392 = vadd.f32 %v1064, %v1357
      %v1393 = vadd.f32 %v1067, %v1360
      %v1394 = vadd.f32 %v1070, %v1363
      %v1395 = vadd.f32 %v1073, %v1366
      %v1396 = vadd.f32 %v1076, %v1369
      %v1397 = vadd.f32 %v1079, %v1372
      %v1398 = vadd.f32 %v1082, %v1375
      %v1399 = vadd.f32 %v1085, %v1378
      %v1400 = vadd.f32 %v1088, %v1381
      %v1401 = vadd.f32 %v1091, %v1384
      %1402 = vst [vmem:[%s231] sm:$0xff] %v1386
      %1403 = vst [vmem:[%s231 + $0x8] sm:$0xff] %v1387
      %1404 = vst [vmem:[%s231 + $0x10] sm:$0xff] %v1388
      %1405 = vst [vmem:[%s231 + $0x18] sm:$0xff] %v1389
      %1406 = vst [vmem:[%s231 + $0x20] sm:$0xff] %v1390
      %1407 = vst [vmem:[%s231 + $0x28] sm:$0xff] %v1391
      %1408 = vst [vmem:[%s231 + $0x30] sm:$0xff] %v1392
      %1409 = vst [vmem:[%s231 + $0x38] sm:$0xff] %v1393
      %1410 = vst [vmem:[%s231 + $0x40] sm:$0xff] %v1394
      %1411 = vst [vmem:[%s231 + $0x48] sm:$0xff] %v1395
      %1412 = vst [vmem:[%s231 + $0x50] sm:$0xff] %v1396
      %1413 = vst [vmem:[%s231 + $0x58] sm:$0xff] %v1397
      %1414 = vst [vmem:[%s231 + $0x60] sm:$0xff] %v1398
      %1415 = vst [vmem:[%s231 + $0x68] sm:$0xff] %v1399
      %1416 = vst [vmem:[%s231 + $0x70] sm:$0xff] %v1400
      %1417 = vst [vmem:[%s231 + $0x78] sm:$0xff] %v1401
      %v1418 = vadd.f32 %v1386, %v1387
      %v1419 = vadd.f32 %v1418, %v1388
      %v1420 = vadd.f32 %v1419, %v1389
      %v1421 = vadd.f32 %v1420, %v1390
      %v1422 = vadd.f32 %v1421, %v1391
      %v1423 = vadd.f32 %v1422, %v1392
      %v1424 = vadd.f32 %v1423, %v1393
      %v1425 = vadd.f32 %v1424, %v1394
      %v1426 = vadd.f32 %v1425, %v1395
      %v1427 = vadd.f32 %v1426, %v1396
      %v1428 = vadd.f32 %v1427, %v1397
      %v1429 = vadd.f32 %v1428, %v1398
      %v1430 = vadd.f32 %v1429, %v1399
      %v1431 = vadd.f32 %v1430, %v1400
      %v1432 = vadd.f32 %v1431, %v1401
      %v1433 = vrot.slane %v1432, 4
      %v1434 = vadd.f32 %v1432, %v1433
      %v1435 = vrot.slane %v1434, 2
      %v1436 = vadd.f32 %v1434, %v1435
      %v1437 = vrot.slane %v1436, 1
      %v1438 = vadd.f32 %v1436, %v1437
      %v1439 = vadd.f32 %v1438, 0.0
      %v1440 = vmul.f32 %v1386, %v1386
      %v1441 = vmul.f32 %v1387, %v1387
      %v1442 = vmul.f32 %v1388, %v1388
      %v1443 = vmul.f32 %v1389, %v1389
      %v1444 = vmul.f32 %v1390, %v1390
      %v1445 = vmul.f32 %v1391, %v1391
      %v1446 = vmul.f32 %v1392, %v1392
      %v1447 = vmul.f32 %v1393, %v1393
      %v1448 = vmul.f32 %v1394, %v1394
      %v1449 = vmul.f32 %v1395, %v1395
      %v1450 = vmul.f32 %v1396, %v1396
      %v1451 = vmul.f32 %v1397, %v1397
      %v1452 = vmul.f32 %v1398, %v1398
      %v1453 = vmul.f32 %v1399, %v1399
      %v1454 = vmul.f32 %v1400, %v1400
      %v1455 = vmul.f32 %v1401, %v1401
      %v1456 = vadd.f32 %v1440, %v1441
      %v1457 = vadd.f32 %v1456, %v1442
      %v1458 = vadd.f32 %v1457, %v1443
      %v1459 = vadd.f32 %v1458, %v1444
      %v1460 = vadd.f32 %v1459, %v1445
      %v1461 = vadd.f32 %v1460, %v1446
      %v1462 = vadd.f32 %v1461, %v1447
      %v1463 = vadd.f32 %v1462, %v1448
      %v1464 = vadd.f32 %v1463, %v1449
      %v1465 = vadd.f32 %v1464, %v1450
      %v1466 = vadd.f32 %v1465, %v1451
      %v1467 = vadd.f32 %v1466, %v1452
      %v1468 = vadd.f32 %v1467, %v1453
      %v1469 = vadd.f32 %v1468, %v1454
      %v1470 = vadd.f32 %v1469, %v1455
      %v1471 = vrot.slane %v1470, 4
      %v1472 = vadd.f32 %v1470, %v1471
      %v1473 = vrot.slane %v1472, 2
      %v1474 = vadd.f32 %v1472, %v1473
      %v1475 = vrot.slane %v1474, 1
      %v1476 = vadd.f32 %v1474, %v1475
      %v1477 = vadd.f32 %v1476, 0.0
      %s1478 = scalar_lea.vmem [#allocation2], 256
      %v1479 = vld [vmem:[%s1478 + $0x7] sm:$0xff]
      %v1480 = vld [vmem:[%s1478 + $0xf] sm:$0xff]
      %v1481 = vld [vmem:[%s1478 + $0x27] sm:$0xff]
      %v1482 = vld [vmem:[%s1478 + $0x2f] sm:$0xff]
      %v1483 = vld [vmem:[%s1478 + $0x47] sm:$0xff]
      %v1484 = vld [vmem:[%s1478 + $0x4f] sm:$0xff]
      %v1485 = vld [vmem:[%s1478 + $0x67] sm:$0xff]
      %v1486 = vld [vmem:[%s1478 + $0x6f] sm:$0xff]
      %v1487 = vld [vmem:[%s1478 + $0x87] sm:$0xff]
      %v1488 = vld [vmem:[%s1478 + $0x8f] sm:$0xff]
      %v1489 = vld [vmem:[%s1478 + $0xa7] sm:$0xff]
      %v1490 = vld [vmem:[%s1478 + $0xaf] sm:$0xff]
      %v1491 = vld [vmem:[%s1478 + $0xc7] sm:$0xff]
      %v1492 = vld [vmem:[%s1478 + $0xcf] sm:$0xff]
      %v1493 = vld [vmem:[%s1478 + $0xe7] sm:$0xff]
      %v1494 = vld [vmem:[%s1478 + $0xef] sm:$0xff]
      %v1495 = vld [vmem:[%s1478 + $0x8] sm:$0xff]
      %v1496 = vld [vmem:[%s1478 + $0x10] sm:$0xff]
      %v1497 = vld [vmem:[%s1478 + $0x28] sm:$0xff]
      %v1498 = vld [vmem:[%s1478 + $0x30] sm:$0xff]
      %v1499 = vld [vmem:[%s1478 + $0x48] sm:$0xff]
      %v1500 = vld [vmem:[%s1478 + $0x50] sm:$0xff]
      %v1501 = vld [vmem:[%s1478 + $0x68] sm:$0xff]
      %v1502 = vld [vmem:[%s1478 + $0x70] sm:$0xff]
      %v1503 = vld [vmem:[%s1478 + $0x88] sm:$0xff]
      %v1504 = vld [vmem:[%s1478 + $0x90] sm:$0xff]
      %v1505 = vld [vmem:[%s1478 + $0xa8] sm:$0xff]
      %v1506 = vld [vmem:[%s1478 + $0xb0] sm:$0xff]
      %v1507 = vld [vmem:[%s1478 + $0xc8] sm:$0xff]
      %v1508 = vld [vmem:[%s1478 + $0xd0] sm:$0xff]
      %v1509 = vld [vmem:[%s1478 + $0xe8] sm:$0xff]
      %v1510 = vld [vmem:[%s1478 + $0xf0] sm:$0xff]
      %v1511 = vld [vmem:[%s1478 + $0x9] sm:$0xff]
      %v1512 = vld [vmem:[%s1478 + $0x11] sm:$0xff]
      %v1513 = vld [vmem:[%s1478 + $0x29] sm:$0xff]
      %v1514 = vld [vmem:[%s1478 + $0x31] sm:$0xff]
      %v1515 = vld [vmem:[%s1478 + $0x49] sm:$0xff]
      %v1516 = vld [vmem:[%s1478 + $0x51] sm:$0xff]
      %v1517 = vld [vmem:[%s1478 + $0x69] sm:$0xff]
      %v1518 = vld [vmem:[%s1478 + $0x71] sm:$0xff]
      %v1519 = vld [vmem:[%s1478 + $0x89] sm:$0xff]
      %v1520 = vld [vmem:[%s1478 + $0x91] sm:$0xff]
      %v1521 = vld [vmem:[%s1478 + $0xa9] sm:$0xff]
      %v1522 = vld [vmem:[%s1478 + $0xb1] sm:$0xff]
      %v1523 = vld [vmem:[%s1478 + $0xc9] sm:$0xff]
      %v1524 = vld [vmem:[%s1478 + $0xd1] sm:$0xff]
      %v1525 = vld [vmem:[%s1478 + $0xe9] sm:$0xff]
      %v1526 = vld [vmem:[%s1478 + $0xf1] sm:$0xff]
      %v1527 = vld [vmem:[%s3] sm:$0xff]
      %v1528 = vld [vmem:[%s3 + $0x8] sm:$0xff]
      %v1529 = vld [vmem:[%s3 + $0x10] sm:$0xff]
      %v1530 = vld [vmem:[%s3 + $0x18] sm:$0xff]
      %v1531 = vld [vmem:[%s3 + $0x20] sm:$0xff]
      %v1532 = vld [vmem:[%s3 + $0x28] sm:$0xff]
      %v1533 = vld [vmem:[%s3 + $0x30] sm:$0xff]
      %v1534 = vld [vmem:[%s3 + $0x38] sm:$0xff]
      %v1535 = vld [vmem:[%s3 + $0x40] sm:$0xff]
      %v1536 = vld [vmem:[%s3 + $0x48] sm:$0xff]
      %v1537 = vld [vmem:[%s3 + $0x50] sm:$0xff]
      %v1538 = vld [vmem:[%s3 + $0x58] sm:$0xff]
      %v1539 = vld [vmem:[%s3 + $0x60] sm:$0xff]
      %v1540 = vld [vmem:[%s3 + $0x68] sm:$0xff]
      %v1541 = vld [vmem:[%s3 + $0x70] sm:$0xff]
      %v1542 = vld [vmem:[%s3 + $0x78] sm:$0xff]
      %v1543 = vld [vmem:[%s3 + $0x80] sm:$0xff]
      %v1544 = vld [vmem:[%s3 + $0x88] sm:$0xff]
      %v1545 = vld [vmem:[%s3 + $0x90] sm:$0xff]
      %v1546 = vld [vmem:[%s3 + $0x98] sm:$0xff]
      %v1547 = vld [vmem:[%s3 + $0xa0] sm:$0xff]
      %v1548 = vld [vmem:[%s3 + $0xa8] sm:$0xff]
      %v1549 = vld [vmem:[%s3 + $0xb0] sm:$0xff]
      %v1550 = vld [vmem:[%s3 + $0xb8] sm:$0xff]
      %v1551 = vld [vmem:[%s3 + $0xc0] sm:$0xff]
      %v1552 = vld [vmem:[%s3 + $0xc8] sm:$0xff]
      %v1553 = vld [vmem:[%s3 + $0xd0] sm:$0xff]
      %v1554 = vld [vmem:[%s3 + $0xd8] sm:$0xff]
      %v1555 = vld [vmem:[%s3 + $0xe0] sm:$0xff]
      %v1556 = vld [vmem:[%s3 + $0xe8] sm:$0xff]
      %v1557 = vld [vmem:[%s3 + $0xf0] sm:$0xff]
      %v1558 = vld [vmem:[%s3 + $0xf8] sm:$0xff]
      %v1559 = vld [vmem:[%s3 + $0x100] sm:$0xff]
      %v1560 = vld [vmem:[%s3 + $0x108] sm:$0xff]
      %v1561 = vld [vmem:[%s3 + $0x110] sm:$0xff]
      %v1562 = vld [vmem:[%s3 + $0x118] sm:$0xff]
      %v1563 = vld [vmem:[%s3 + $0x120] sm:$0xff]
      %v1564 = vld [vmem:[%s3 + $0x128] sm:$0xff]
      %v1565 = vld [vmem:[%s3 + $0x130] sm:$0xff]
      %v1566 = vld [vmem:[%s3 + $0x138] sm:$0xff]
      %v1567 = vld [vmem:[%s3 + $0x140] sm:$0xff]
      %v1568 = vld [vmem:[%s3 + $0x148] sm:$0xff]
      %v1569 = vld [vmem:[%s3 + $0x150] sm:$0xff]
      %v1570 = vld [vmem:[%s3 + $0x158] sm:$0xff]
      %v1571 = vld [vmem:[%s3 + $0x160] sm:$0xff]
      %v1572 = vld [vmem:[%s3 + $0x168] sm:$0xff]
      %v1573 = vld [vmem:[%s3 + $0x170] sm:$0xff]
      %v1574 = vld [vmem:[%s3 + $0x178] sm:$0xff]
      %s1575 = scalar_lea.vmem [#allocation2], 288
      %v1576 = vld [vmem:[%s1575 + $0x7] sm:$0xff]
      %v1577 = vld [vmem:[%s1575 + $0xf] sm:$0xff]
      %v1578 = vld [vmem:[%s1575 + $0x27] sm:$0xff]
      %v1579 = vld [vmem:[%s1575 + $0x2f] sm:$0xff]
      %v1580 = vld [vmem:[%s1575 + $0x47] sm:$0xff]
      %v1581 = vld [vmem:[%s1575 + $0x4f] sm:$0xff]
      %v1582 = vld [vmem:[%s1575 + $0x67] sm:$0xff]
      %v1583 = vld [vmem:[%s1575 + $0x6f] sm:$0xff]
      %v1584 = vld [vmem:[%s1575 + $0x87] sm:$0xff]
      %v1585 = vld [vmem:[%s1575 + $0x8f] sm:$0xff]
      %v1586 = vld [vmem:[%s1575 + $0xa7] sm:$0xff]
      %v1587 = vld [vmem:[%s1575 + $0xaf] sm:$0xff]
      %v1588 = vld [vmem:[%s1575 + $0xc7] sm:$0xff]
      %v1589 = vld [vmem:[%s1575 + $0xcf] sm:$0xff]
      %v1590 = vld [vmem:[%s1575 + $0xe7] sm:$0xff]
      %v1591 = vld [vmem:[%s1575 + $0xef] sm:$0xff]
      %v1592 = vld [vmem:[%s1575 + $0x8] sm:$0xff]
      %v1593 = vld [vmem:[%s1575 + $0x10] sm:$0xff]
      %v1594 = vld [vmem:[%s1575 + $0x28] sm:$0xff]
      %v1595 = vld [vmem:[%s1575 + $0x30] sm:$0xff]
      %v1596 = vld [vmem:[%s1575 + $0x48] sm:$0xff]
      %v1597 = vld [vmem:[%s1575 + $0x50] sm:$0xff]
      %v1598 = vld [vmem:[%s1575 + $0x68] sm:$0xff]
      %v1599 = vld [vmem:[%s1575 + $0x70] sm:$0xff]
      %v1600 = vld [vmem:[%s1575 + $0x88] sm:$0xff]
      %v1601 = vld [vmem:[%s1575 + $0x90] sm:$0xff]
      %v1602 = vld [vmem:[%s1575 + $0xa8] sm:$0xff]
      %v1603 = vld [vmem:[%s1575 + $0xb0] sm:$0xff]
      %v1604 = vld [vmem:[%s1575 + $0xc8] sm:$0xff]
      %v1605 = vld [vmem:[%s1575 + $0xd0] sm:$0xff]
      %v1606 = vld [vmem:[%s1575 + $0xe8] sm:$0xff]
      %v1607 = vld [vmem:[%s1575 + $0xf0] sm:$0xff]
      %v1608 = vld [vmem:[%s1575 + $0x9] sm:$0xff]
      %v1609 = vld [vmem:[%s1575 + $0x11] sm:$0xff]
      %v1610 = vld [vmem:[%s1575 + $0x29] sm:$0xff]
      %v1611 = vld [vmem:[%s1575 + $0x31] sm:$0xff]
      %v1612 = vld [vmem:[%s1575 + $0x49] sm:$0xff]
      %v1613 = vld [vmem:[%s1575 + $0x51] sm:$0xff]
      %v1614 = vld [vmem:[%s1575 + $0x69] sm:$0xff]
      %v1615 = vld [vmem:[%s1575 + $0x71] sm:$0xff]
      %v1616 = vld [vmem:[%s1575 + $0x89] sm:$0xff]
      %v1617 = vld [vmem:[%s1575 + $0x91] sm:$0xff]
      %v1618 = vld [vmem:[%s1575 + $0xa9] sm:$0xff]
      %v1619 = vld [vmem:[%s1575 + $0xb1] sm:$0xff]
      %v1620 = vld [vmem:[%s1575 + $0xc9] sm:$0xff]
      %v1621 = vld [vmem:[%s1575 + $0xd1] sm:$0xff]
      %v1622 = vld [vmem:[%s1575 + $0xe9] sm:$0xff]
      %v1623 = vld [vmem:[%s1575 + $0xf1] sm:$0xff]
      %v1624 = vld [vmem:[%s654] sm:$0xff]
      %v1625 = vld [vmem:[%s654 + $0x8] sm:$0xff]
      %v1626 = vld [vmem:[%s654 + $0x10] sm:$0xff]
      %v1627 = vld [vmem:[%s654 + $0x18] sm:$0xff]
      %v1628 = vld [vmem:[%s654 + $0x20] sm:$0xff]
      %v1629 = vld [vmem:[%s654 + $0x28] sm:$0xff]
      %v1630 = vld [vmem:[%s654 + $0x30] sm:$0xff]
      %v1631 = vld [vmem:[%s654 + $0x38] sm:$0xff]
      %v1632 = vld [vmem:[%s654 + $0x40] sm:$0xff]
      %v1633 = vld [vmem:[%s654 + $0x48] sm:$0xff]
      %v1634 = vld [vmem:[%s654 + $0x50] sm:$0xff]
      %v1635 = vld [vmem:[%s654 + $0x58] sm:$0xff]
      %v1636 = vld [vmem:[%s654 + $0x60] sm:$0xff]
      %v1637 = vld [vmem:[%s654 + $0x68] sm:$0xff]
      %v1638 = vld [vmem:[%s654 + $0x70] sm:$0xff]
      %v1639 = vld [vmem:[%s654 + $0x78] sm:$0xff]
      %v1640 = vld [vmem:[%s654 + $0x80] sm:$0xff]
      %v1641 = vld [vmem:[%s654 + $0x88] sm:$0xff]
      %v1642 = vld [vmem:[%s654 + $0x90] sm:$0xff]
      %v1643 = vld [vmem:[%s654 + $0x98] sm:$0xff]
      %v1644 = vld [vmem:[%s654 + $0xa0] sm:$0xff]
      %v1645 = vld [vmem:[%s654 + $0xa8] sm:$0xff]
      %v1646 = vld [vmem:[%s654 + $0xb0] sm:$0xff]
      %v1647 = vld [vmem:[%s654 + $0xb8] sm:$0xff]
      %v1648 = vld [vmem:[%s654 + $0xc0] sm:$0xff]
      %v1649 = vld [vmem:[%s654 + $0xc8] sm:$0xff]
      %v1650 = vld [vmem:[%s654 + $0xd0] sm:$0xff]
      %v1651 = vld [vmem:[%s654 + $0xd8] sm:$0xff]
      %v1652 = vld [vmem:[%s654 + $0xe0] sm:$0xff]
      %v1653 = vld [vmem:[%s654 + $0xe8] sm:$0xff]
      %v1654 = vld [vmem:[%s654 + $0xf0] sm:$0xff]
      %v1655 = vld [vmem:[%s654 + $0xf8] sm:$0xff]
      %v1656 = vld [vmem:[%s654 + $0x100] sm:$0xff]
      %v1657 = vld [vmem:[%s654 + $0x108] sm:$0xff]
      %v1658 = vld [vmem:[%s654 + $0x110] sm:$0xff]
      %v1659 = vld [vmem:[%s654 + $0x118] sm:$0xff]
      %v1660 = vld [vmem:[%s654 + $0x120] sm:$0xff]
      %v1661 = vld [vmem:[%s654 + $0x128] sm:$0xff]
      %v1662 = vld [vmem:[%s654 + $0x130] sm:$0xff]
      %v1663 = vld [vmem:[%s654 + $0x138] sm:$0xff]
      %v1664 = vld [vmem:[%s654 + $0x140] sm:$0xff]
      %v1665 = vld [vmem:[%s654 + $0x148] sm:$0xff]
      %v1666 = vld [vmem:[%s654 + $0x150] sm:$0xff]
      %v1667 = vld [vmem:[%s654 + $0x158] sm:$0xff]
      %v1668 = vld [vmem:[%s654 + $0x160] sm:$0xff]
      %v1669 = vld [vmem:[%s654 + $0x168] sm:$0xff]
      %v1670 = vld [vmem:[%s654 + $0x170] sm:$0xff]
      %v1671 = vld [vmem:[%s654 + $0x178] sm:$0xff]
      %1672 = vmatpush.msra.mxu0 %v1639
      %1673 = vmatpush.msra.mxu0 %v1638
      %1674 = vmatpush.msra.mxu0 %v1637
      %1675 = vmatpush.msra.mxu0 %v1636
      %1676 = vmatpush.msra.mxu0 %v1635
      %1677 = vmatpush.msra.mxu0 %v1634
      %1678 = vmatpush.msra.mxu0 %v1633
      %1679 = vmatpush.msra.mxu0 %v1632
      %1680 = vmatpush.msra.mxu0 %v1631
      %1681 = vmatpush.msra.mxu0 %v1630
      %1682 = vmatpush.msra.mxu0 %v1629
      %1683 = vmatpush.msra.mxu0 %v1628
      %1684 = vmatpush.msra.mxu0 %v1627
      %1685 = vmatpush.msra.mxu0 %v1626
      %1686 = vmatpush.msra.mxu0 %v1625
      %1687 = vmatpush.msra.mxu0 %v1624
      %1688 = vmatmul.f32.gmra.mxu0 %v1576
      %v1689 = vpop.f32.mrf.mxu0
      %v1690 = vadd.f32 0.0, %v1689
      %1691 = vmatmul.f32.gmra.mxu0 %v1577
      %v1692 = vpop.f32.mrf.mxu0
      %v1693 = vadd.f32 0.0, %v1692
      %1694 = vmatmul.f32.gmra.mxu0 %v1578
      %v1695 = vpop.f32.mrf.mxu0
      %v1696 = vadd.f32 0.0, %v1695
      %1697 = vmatmul.f32.gmra.mxu0 %v1579
      %v1698 = vpop.f32.mrf.mxu0
      %v1699 = vadd.f32 0.0, %v1698
      %1700 = vmatmul.f32.gmra.mxu0 %v1580
      %v1701 = vpop.f32.mrf.mxu0
      %v1702 = vadd.f32 0.0, %v1701
      %1703 = vmatmul.f32.gmra.mxu0 %v1581
      %v1704 = vpop.f32.mrf.mxu0
      %v1705 = vadd.f32 0.0, %v1704
      %1706 = vmatmul.f32.gmra.mxu0 %v1582
      %v1707 = vpop.f32.mrf.mxu0
      %v1708 = vadd.f32 0.0, %v1707
      %1709 = vmatmul.f32.gmra.mxu0 %v1583
      %v1710 = vpop.f32.mrf.mxu0
      %v1711 = vadd.f32 0.0, %v1710
      %1712 = vmatmul.f32.gmra.mxu0 %v1584
      %v1713 = vpop.f32.mrf.mxu0
      %v1714 = vadd.f32 0.0, %v1713
      %1715 = vmatmul.f32.gmra.mxu0 %v1585
      %v1716 = vpop.f32.mrf.mxu0
      %v1717 = vadd.f32 0.0, %v1716
      %1718 = vmatmul.f32.gmra.mxu0 %v1586
      %v1719 = vpop.f32.mrf.mxu0
      %v1720 = vadd.f32 0.0, %v1719
      %1721 = vmatmul.f32.gmra.mxu0 %v1587
      %v1722 = vpop.f32.mrf.mxu0
      %v1723 = vadd.f32 0.0, %v1722
      %1724 = vmatmul.f32.gmra.mxu0 %v1588
      %v1725 = vpop.f32.mrf.mxu0
      %v1726 = vadd.f32 0.0, %v1725
      %1727 = vmatmul.f32.gmra.mxu0 %v1589
      %v1728 = vpop.f32.mrf.mxu0
      %v1729 = vadd.f32 0.0, %v1728
      %1730 = vmatmul.f32.gmra.mxu0 %v1590
      %v1731 = vpop.f32.mrf.mxu0
      %v1732 = vadd.f32 0.0, %v1731
      %1733 = vmatmul.f32.gmra.mxu0 %v1591
      %v1734 = vpop.f32.mrf.mxu0
      %v1735 = vadd.f32 0.0, %v1734
      %1736 = vdwg.mxu0
      %1737 = vmatpush.msra.mxu0 %v1655
      %1738 = vmatpush.msra.mxu0 %v1654
      %1739 = vmatpush.msra.mxu0 %v1653
      %1740 = vmatpush.msra.mxu0 %v1652
      %1741 = vmatpush.msra.mxu0 %v1651
      %1742 = vmatpush.msra.mxu0 %v1650
      %1743 = vmatpush.msra.mxu0 %v1649
      %1744 = vmatpush.msra.mxu0 %v1648
      %1745 = vmatpush.msra.mxu0 %v1647
      %1746 = vmatpush.msra.mxu0 %v1646
      %1747 = vmatpush.msra.mxu0 %v1645
      %1748 = vmatpush.msra.mxu0 %v1644
      %1749 = vmatpush.msra.mxu0 %v1643
      %1750 = vmatpush.msra.mxu0 %v1642
      %1751 = vmatpush.msra.mxu0 %v1641
      %1752 = vmatpush.msra.mxu0 %v1640
      %1753 = vmatmul.f32.gmra.mxu0 %v1592
      %v1754 = vpop.f32.mrf.mxu0
      %v1755 = vadd.f32 %v1690, %v1754
      %1756 = vmatmul.f32.gmra.mxu0 %v1593
      %v1757 = vpop.f32.mrf.mxu0
      %v1758 = vadd.f32 %v1693, %v1757
      %1759 = vmatmul.f32.gmra.mxu0 %v1594
      %v1760 = vpop.f32.mrf.mxu0
      %v1761 = vadd.f32 %v1696, %v1760
      %1762 = vmatmul.f32.gmra.mxu0 %v1595
      %v1763 = vpop.f32.mrf.mxu0
      %v1764 = vadd.f32 %v1699, %v1763
      %1765 = vmatmul.f32.gmra.mxu0 %v1596
      %v1766 = vpop.f32.mrf.mxu0
      %v1767 = vadd.f32 %v1702, %v1766
      %1768 = vmatmul.f32.gmra.mxu0 %v1597
      %v1769 = vpop.f32.mrf.mxu0
      %v1770 = vadd.f32 %v1705, %v1769
      %1771 = vmatmul.f32.gmra.mxu0 %v1598
      %v1772 = vpop.f32.mrf.mxu0
      %v1773 = vadd.f32 %v1708, %v1772
      %1774 = vmatmul.f32.gmra.mxu0 %v1599
      %v1775 = vpop.f32.mrf.mxu0
      %v1776 = vadd.f32 %v1711, %v1775
      %1777 = vmatmul.f32.gmra.mxu0 %v1600
      %v1778 = vpop.f32.mrf.mxu0
      %v1779 = vadd.f32 %v1714, %v1778
      %1780 = vmatmul.f32.gmra.mxu0 %v1601
      %v1781 = vpop.f32.mrf.mxu0
      %v1782 = vadd.f32 %v1717, %v1781
      %1783 = vmatmul.f32.gmra.mxu0 %v1602
      %v1784 = vpop.f32.mrf.mxu0
      %v1785 = vadd.f32 %v1720, %v1784
      %1786 = vmatmul.f32.gmra.mxu0 %v1603
      %v1787 = vpop.f32.mrf.mxu0
      %v1788 = vadd.f32 %v1723, %v1787
      %1789 = vmatmul.f32.gmra.mxu0 %v1604
      %v1790 = vpop.f32.mrf.mxu0
      %v1791 = vadd.f32 %v1726, %v1790
      %1792 = vmatmul.f32.gmra.mxu0 %v1605
      %v1793 = vpop.f32.mrf.mxu0
      %v1794 = vadd.f32 %v1729, %v1793
      %1795 = vmatmul.f32.gmra.mxu0 %v1606
      %v1796 = vpop.f32.mrf.mxu0
      %v1797 = vadd.f32 %v1732, %v1796
      %1798 = vmatmul.f32.gmra.mxu0 %v1607
      %v1799 = vpop.f32.mrf.mxu0
      %v1800 = vadd.f32 %v1735, %v1799
      %1801 = vdwg.mxu0
      %1802 = vmatpush.msra.mxu0 %v1671
      %1803 = vmatpush.msra.mxu0 %v1670
      %1804 = vmatpush.msra.mxu0 %v1669
      %1805 = vmatpush.msra.mxu0 %v1668
      %1806 = vmatpush.msra.mxu0 %v1667
      %1807 = vmatpush.msra.mxu0 %v1666
      %1808 = vmatpush.msra.mxu0 %v1665
      %1809 = vmatpush.msra.mxu0 %v1664
      %1810 = vmatpush.msra.mxu0 %v1663
      %1811 = vmatpush.msra.mxu0 %v1662
      %1812 = vmatpush.msra.mxu0 %v1661
      %1813 = vmatpush.msra.mxu0 %v1660
      %1814 = vmatpush.msra.mxu0 %v1659
      %1815 = vmatpush.msra.mxu0 %v1658
      %1816 = vmatpush.msra.mxu0 %v1657
      %1817 = vmatpush.msra.mxu0 %v1656
      %1818 = vmatmul.f32.gmra.mxu0 %v1608
      %v1819 = vpop.f32.mrf.mxu0
      %v1820 = vadd.f32 %v1755, %v1819
      %1821 = vmatmul.f32.gmra.mxu0 %v1609
      %v1822 = vpop.f32.mrf.mxu0
      %v1823 = vadd.f32 %v1758, %v1822
      %1824 = vmatmul.f32.gmra.mxu0 %v1610
      %v1825 = vpop.f32.mrf.mxu0
      %v1826 = vadd.f32 %v1761, %v1825
      %1827 = vmatmul.f32.gmra.mxu0 %v1611
      %v1828 = vpop.f32.mrf.mxu0
      %v1829 = vadd.f32 %v1764, %v1828
      %1830 = vmatmul.f32.gmra.mxu0 %v1612
      %v1831 = vpop.f32.mrf.mxu0
      %v1832 = vadd.f32 %v1767, %v1831
      %1833 = vmatmul.f32.gmra.mxu0 %v1613
      %v1834 = vpop.f32.mrf.mxu0
      %v1835 = vadd.f32 %v1770, %v1834
      %1836 = vmatmul.f32.gmra.mxu0 %v1614
      %v1837 = vpop.f32.mrf.mxu0
      %v1838 = vadd.f32 %v1773, %v1837
      %1839 = vmatmul.f32.gmra.mxu0 %v1615
      %v1840 = vpop.f32.mrf.mxu0
      %v1841 = vadd.f32 %v1776, %v1840
      %1842 = vmatmul.f32.gmra.mxu0 %v1616
      %v1843 = vpop.f32.mrf.mxu0
      %v1844 = vadd.f32 %v1779, %v1843
      %1845 = vmatmul.f32.gmra.mxu0 %v1617
      %v1846 = vpop.f32.mrf.mxu0
      %v1847 = vadd.f32 %v1782, %v1846
      %1848 = vmatmul.f32.gmra.mxu0 %v1618
      %v1849 = vpop.f32.mrf.mxu0
      %v1850 = vadd.f32 %v1785, %v1849
      %1851 = vmatmul.f32.gmra.mxu0 %v1619
      %v1852 = vpop.f32.mrf.mxu0
      %v1853 = vadd.f32 %v1788, %v1852
      %1854 = vmatmul.f32.gmra.mxu0 %v1620
      %v1855 = vpop.f32.mrf.mxu0
      %v1856 = vadd.f32 %v1791, %v1855
      %1857 = vmatmul.f32.gmra.mxu0 %v1621
      %v1858 = vpop.f32.mrf.mxu0
      %v1859 = vadd.f32 %v1794, %v1858
      %1860 = vmatmul.f32.gmra.mxu0 %v1622
      %v1861 = vpop.f32.mrf.mxu0
      %v1862 = vadd.f32 %v1797, %v1861
      %1863 = vmatmul.f32.gmra.mxu0 %v1623
      %v1864 = vpop.f32.mrf.mxu0
      %v1865 = vadd.f32 %v1800, %v1864
      %1866 = vdwg.mxu0
      %1867 = vmatpush.msra.mxu0 %v1542
      %1868 = vmatpush.msra.mxu0 %v1541
      %1869 = vmatpush.msra.mxu0 %v1540
      %1870 = vmatpush.msra.mxu0 %v1539
      %1871 = vmatpush.msra.mxu0 %v1538
      %1872 = vmatpush.msra.mxu0 %v1537
      %1873 = vmatpush.msra.mxu0 %v1536
      %1874 = vmatpush.msra.mxu0 %v1535
      %1875 = vmatpush.msra.mxu0 %v1534
      %1876 = vmatpush.msra.mxu0 %v1533
      %1877 = vmatpush.msra.mxu0 %v1532
      %1878 = vmatpush.msra.mxu0 %v1531
      %1879 = vmatpush.msra.mxu0 %v1530
      %1880 = vmatpush.msra.mxu0 %v1529
      %1881 = vmatpush.msra.mxu0 %v1528
      %1882 = vmatpush.msra.mxu0 %v1527
      %1883 = vmatmul.f32.gmra.mxu0 %v1479
      %v1884 = vpop.f32.mrf.mxu0
      %v1885 = vadd.f32 %v1820, %v1884
      %1886 = vmatmul.f32.gmra.mxu0 %v1480
      %v1887 = vpop.f32.mrf.mxu0
      %v1888 = vadd.f32 %v1823, %v1887
      %1889 = vmatmul.f32.gmra.mxu0 %v1481
      %v1890 = vpop.f32.mrf.mxu0
      %v1891 = vadd.f32 %v1826, %v1890
      %1892 = vmatmul.f32.gmra.mxu0 %v1482
      %v1893 = vpop.f32.mrf.mxu0
      %v1894 = vadd.f32 %v1829, %v1893
      %1895 = vmatmul.f32.gmra.mxu0 %v1483
      %v1896 = vpop.f32.mrf.mxu0
      %v1897 = vadd.f32 %v1832, %v1896
      %1898 = vmatmul.f32.gmra.mxu0 %v1484
      %v1899 = vpop.f32.mrf.mxu0
      %v1900 = vadd.f32 %v1835, %v1899
      %1901 = vmatmul.f32.gmra.mxu0 %v1485
      %v1902 = vpop.f32.mrf.mxu0
      %v1903 = vadd.f32 %v1838, %v1902
      %1904 = vmatmul.f32.gmra.mxu0 %v1486
      %v1905 = vpop.f32.mrf.mxu0
      %v1906 = vadd.f32 %v1841, %v1905
      %1907 = vmatmul.f32.gmra.mxu0 %v1487
      %v1908 = vpop.f32.mrf.mxu0
      %v1909 = vadd.f32 %v1844, %v1908
      %1910 = vmatmul.f32.gmra.mxu0 %v1488
      %v1911 = vpop.f32.mrf.mxu0
      %v1912 = vadd.f32 %v1847, %v1911
      %1913 = vmatmul.f32.gmra.mxu0 %v1489
      %v1914 = vpop.f32.mrf.mxu0
      %v1915 = vadd.f32 %v1850, %v1914
      %1916 = vmatmul.f32.gmra.mxu0 %v1490
      %v1917 = vpop.f32.mrf.mxu0
      %v1918 = vadd.f32 %v1853, %v1917
      %1919 = vmatmul.f32.gmra.mxu0 %v1491
      %v1920 = vpop.f32.mrf.mxu0
      %v1921 = vadd.f32 %v1856, %v1920
      %1922 = vmatmul.f32.gmra.mxu0 %v1492
      %v1923 = vpop.f32.mrf.mxu0
      %v1924 = vadd.f32 %v1859, %v1923
      %1925 = vmatmul.f32.gmra.mxu0 %v1493
      %v1926 = vpop.f32.mrf.mxu0
      %v1927 = vadd.f32 %v1862, %v1926
      %1928 = vmatmul.f32.gmra.mxu0 %v1494
      %v1929 = vpop.f32.mrf.mxu0
      %v1930 = vadd.f32 %v1865, %v1929
      %1931 = vdwg.mxu0
      %1932 = vmatpush.msra.mxu0 %v1558
      %1933 = vmatpush.msra.mxu0 %v1557
      %1934 = vmatpush.msra.mxu0 %v1556
      %1935 = vmatpush.msra.mxu0 %v1555
      %1936 = vmatpush.msra.mxu0 %v1554
      %1937 = vmatpush.msra.mxu0 %v1553
      %1938 = vmatpush.msra.mxu0 %v1552
      %1939 = vmatpush.msra.mxu0 %v1551
      %1940 = vmatpush.msra.mxu0 %v1550
      %1941 = vmatpush.msra.mxu0 %v1549
      %1942 = vmatpush.msra.mxu0 %v1548
      %1943 = vmatpush.msra.mxu0 %v1547
      %1944 = vmatpush.msra.mxu0 %v1546
      %1945 = vmatpush.msra.mxu0 %v1545
      %1946 = vmatpush.msra.mxu0 %v1544
      %1947 = vmatpush.msra.mxu0 %v1543
      %1948 = vmatmul.f32.gmra.mxu0 %v1495
      %v1949 = vpop.f32.mrf.mxu0
      %v1950 = vadd.f32 %v1885, %v1949
      %1951 = vmatmul.f32.gmra.mxu0 %v1496
      %v1952 = vpop.f32.mrf.mxu0
      %v1953 = vadd.f32 %v1888, %v1952
      %1954 = vmatmul.f32.gmra.mxu0 %v1497
      %v1955 = vpop.f32.mrf.mxu0
      %v1956 = vadd.f32 %v1891, %v1955
      %1957 = vmatmul.f32.gmra.mxu0 %v1498
      %v1958 = vpop.f32.mrf.mxu0
      %v1959 = vadd.f32 %v1894, %v1958
      %1960 = vmatmul.f32.gmra.mxu0 %v1499
      %v1961 = vpop.f32.mrf.mxu0
      %v1962 = vadd.f32 %v1897, %v1961
      %1963 = vmatmul.f32.gmra.mxu0 %v1500
      %v1964 = vpop.f32.mrf.mxu0
      %v1965 = vadd.f32 %v1900, %v1964
      %1966 = vmatmul.f32.gmra.mxu0 %v1501
      %v1967 = vpop.f32.mrf.mxu0
      %v1968 = vadd.f32 %v1903, %v1967
      %1969 = vmatmul.f32.gmra.mxu0 %v1502
      %v1970 = vpop.f32.mrf.mxu0
      %v1971 = vadd.f32 %v1906, %v1970
      %1972 = vmatmul.f32.gmra.mxu0 %v1503
      %v1973 = vpop.f32.mrf.mxu0
      %v1974 = vadd.f32 %v1909, %v1973
      %1975 = vmatmul.f32.gmra.mxu0 %v1504
      %v1976 = vpop.f32.mrf.mxu0
      %v1977 = vadd.f32 %v1912, %v1976
      %1978 = vmatmul.f32.gmra.mxu0 %v1505
      %v1979 = vpop.f32.mrf.mxu0
      %v1980 = vadd.f32 %v1915, %v1979
      %1981 = vmatmul.f32.gmra.mxu0 %v1506
      %v1982 = vpop.f32.mrf.mxu0
      %v1983 = vadd.f32 %v1918, %v1982
      %1984 = vmatmul.f32.gmra.mxu0 %v1507
      %v1985 = vpop.f32.mrf.mxu0
      %v1986 = vadd.f32 %v1921, %v1985
      %1987 = vmatmul.f32.gmra.mxu0 %v1508
      %v1988 = vpop.f32.mrf.mxu0
      %v1989 = vadd.f32 %v1924, %v1988
      %1990 = vmatmul.f32.gmra.mxu0 %v1509
      %v1991 = vpop.f32.mrf.mxu0
      %v1992 = vadd.f32 %v1927, %v1991
      %1993 = vmatmul.f32.gmra.mxu0 %v1510
      %v1994 = vpop.f32.mrf.mxu0
      %v1995 = vadd.f32 %v1930, %v1994
      %1996 = vdwg.mxu0
      %1997 = vmatpush.msra.mxu0 %v1574
      %1998 = vmatpush.msra.mxu0 %v1573
      %1999 = vmatpush.msra.mxu0 %v1572
      %2000 = vmatpush.msra.mxu0 %v1571
      %2001 = vmatpush.msra.mxu0 %v1570
      %2002 = vmatpush.msra.mxu0 %v1569
      %2003 = vmatpush.msra.mxu0 %v1568
      %2004 = vmatpush.msra.mxu0 %v1567
      %2005 = vmatpush.msra.mxu0 %v1566
      %2006 = vmatpush.msra.mxu0 %v1565
      %2007 = vmatpush.msra.mxu0 %v1564
      %2008 = vmatpush.msra.mxu0 %v1563
      %2009 = vmatpush.msra.mxu0 %v1562
      %2010 = vmatpush.msra.mxu0 %v1561
      %2011 = vmatpush.msra.mxu0 %v1560
      %2012 = vmatpush.msra.mxu0 %v1559
      %2013 = vmatmul.f32.gmra.mxu0 %v1511
      %v2014 = vpop.f32.mrf.mxu0
      %v2015 = vadd.f32 %v1950, %v2014
      %2016 = vmatmul.f32.gmra.mxu0 %v1512
      %v2017 = vpop.f32.mrf.mxu0
      %v2018 = vadd.f32 %v1953, %v2017
      %2019 = vmatmul.f32.gmra.mxu0 %v1513
      %v2020 = vpop.f32.mrf.mxu0
      %v2021 = vadd.f32 %v1956, %v2020
      %2022 = vmatmul.f32.gmra.mxu0 %v1514
      %v2023 = vpop.f32.mrf.mxu0
      %v2024 = vadd.f32 %v1959, %v2023
      %2025 = vmatmul.f32.gmra.mxu0 %v1515
      %v2026 = vpop.f32.mrf.mxu0
      %v2027 = vadd.f32 %v1962, %v2026
      %2028 = vmatmul.f32.gmra.mxu0 %v1516
      %v2029 = vpop.f32.mrf.mxu0
      %v2030 = vadd.f32 %v1965, %v2029
      %2031 = vmatmul.f32.gmra.mxu0 %v1517
      %v2032 = vpop.f32.mrf.mxu0
      %v2033 = vadd.f32 %v1968, %v2032
      %2034 = vmatmul.f32.gmra.mxu0 %v1518
      %v2035 = vpop.f32.mrf.mxu0
      %v2036 = vadd.f32 %v1971, %v2035
      %2037 = vmatmul.f32.gmra.mxu0 %v1519
      %v2038 = vpop.f32.mrf.mxu0
      %v2039 = vadd.f32 %v1974, %v2038
      %2040 = vmatmul.f32.gmra.mxu0 %v1520
      %v2041 = vpop.f32.mrf.mxu0
      %v2042 = vadd.f32 %v1977, %v2041
      %2043 = vmatmul.f32.gmra.mxu0 %v1521
      %v2044 = vpop.f32.mrf.mxu0
      %v2045 = vadd.f32 %v1980, %v2044
      %2046 = vmatmul.f32.gmra.mxu0 %v1522
      %v2047 = vpop.f32.mrf.mxu0
      %v2048 = vadd.f32 %v1983, %v2047
      %2049 = vmatmul.f32.gmra.mxu0 %v1523
      %v2050 = vpop.f32.mrf.mxu0
      %v2051 = vadd.f32 %v1986, %v2050
      %2052 = vmatmul.f32.gmra.mxu0 %v1524
      %v2053 = vpop.f32.mrf.mxu0
      %v2054 = vadd.f32 %v1989, %v2053
      %2055 = vmatmul.f32.gmra.mxu0 %v1525
      %v2056 = vpop.f32.mrf.mxu0
      %v2057 = vadd.f32 %v1992, %v2056
      %2058 = vmatmul.f32.gmra.mxu0 %v1526
      %v2059 = vpop.f32.mrf.mxu0
      %v2060 = vadd.f32 %v1995, %v2059
      %2061 = vdwg.mxu0
      %s2062 = scalar_lea.vmem [#allocation2], 320
      %v2063 = vld [vmem:[%s2062 + $0x7] sm:$0xff]
      %v2064 = vld [vmem:[%s2062 + $0xf] sm:$0xff]
      %v2065 = vld [vmem:[%s2062 + $0x27] sm:$0xff]
      %v2066 = vld [vmem:[%s2062 + $0x2f] sm:$0xff]
      %v2067 = vld [vmem:[%s2062 + $0x47] sm:$0xff]
      %v2068 = vld [vmem:[%s2062 + $0x4f] sm:$0xff]
      %v2069 = vld [vmem:[%s2062 + $0x67] sm:$0xff]
      %v2070 = vld [vmem:[%s2062 + $0x6f] sm:$0xff]
      %v2071 = vld [vmem:[%s2062 + $0x87] sm:$0xff]
      %v2072 = vld [vmem:[%s2062 + $0x8f] sm:$0xff]
      %v2073 = vld [vmem:[%s2062 + $0xa7] sm:$0xff]
      %v2074 = vld [vmem:[%s2062 + $0xaf] sm:$0xff]
      %v2075 = vld [vmem:[%s2062 + $0xc7] sm:$0xff]
      %v2076 = vld [vmem:[%s2062 + $0xcf] sm:$0xff]
      %v2077 = vld [vmem:[%s2062 + $0xe7] sm:$0xff]
      %v2078 = vld [vmem:[%s2062 + $0xef] sm:$0xff]
      %v2079 = vld [vmem:[%s2062 + $0x8] sm:$0xff]
      %v2080 = vld [vmem:[%s2062 + $0x10] sm:$0xff]
      %v2081 = vld [vmem:[%s2062 + $0x28] sm:$0xff]
      %v2082 = vld [vmem:[%s2062 + $0x30] sm:$0xff]
      %v2083 = vld [vmem:[%s2062 + $0x48] sm:$0xff]
      %v2084 = vld [vmem:[%s2062 + $0x50] sm:$0xff]
      %v2085 = vld [vmem:[%s2062 + $0x68] sm:$0xff]
      %v2086 = vld [vmem:[%s2062 + $0x70] sm:$0xff]
      %v2087 = vld [vmem:[%s2062 + $0x88] sm:$0xff]
      %v2088 = vld [vmem:[%s2062 + $0x90] sm:$0xff]
      %v2089 = vld [vmem:[%s2062 + $0xa8] sm:$0xff]
      %v2090 = vld [vmem:[%s2062 + $0xb0] sm:$0xff]
      %v2091 = vld [vmem:[%s2062 + $0xc8] sm:$0xff]
      %v2092 = vld [vmem:[%s2062 + $0xd0] sm:$0xff]
      %v2093 = vld [vmem:[%s2062 + $0xe8] sm:$0xff]
      %v2094 = vld [vmem:[%s2062 + $0xf0] sm:$0xff]
      %v2095 = vld [vmem:[%s2062 + $0x9] sm:$0xff]
      %v2096 = vld [vmem:[%s2062 + $0x11] sm:$0xff]
      %v2097 = vld [vmem:[%s2062 + $0x29] sm:$0xff]
      %v2098 = vld [vmem:[%s2062 + $0x31] sm:$0xff]
      %v2099 = vld [vmem:[%s2062 + $0x49] sm:$0xff]
      %v2100 = vld [vmem:[%s2062 + $0x51] sm:$0xff]
      %v2101 = vld [vmem:[%s2062 + $0x69] sm:$0xff]
      %v2102 = vld [vmem:[%s2062 + $0x71] sm:$0xff]
      %v2103 = vld [vmem:[%s2062 + $0x89] sm:$0xff]
      %v2104 = vld [vmem:[%s2062 + $0x91] sm:$0xff]
      %v2105 = vld [vmem:[%s2062 + $0xa9] sm:$0xff]
      %v2106 = vld [vmem:[%s2062 + $0xb1] sm:$0xff]
      %v2107 = vld [vmem:[%s2062 + $0xc9] sm:$0xff]
      %v2108 = vld [vmem:[%s2062 + $0xd1] sm:$0xff]
      %v2109 = vld [vmem:[%s2062 + $0xe9] sm:$0xff]
      %v2110 = vld [vmem:[%s2062 + $0xf1] sm:$0xff]
      %v2111 = vld [vmem:[%s1142] sm:$0xff]
      %v2112 = vld [vmem:[%s1142 + $0x8] sm:$0xff]
      %v2113 = vld [vmem:[%s1142 + $0x10] sm:$0xff]
      %v2114 = vld [vmem:[%s1142 + $0x18] sm:$0xff]
      %v2115 = vld [vmem:[%s1142 + $0x20] sm:$0xff]
      %v2116 = vld [vmem:[%s1142 + $0x28] sm:$0xff]
      %v2117 = vld [vmem:[%s1142 + $0x30] sm:$0xff]
      %v2118 = vld [vmem:[%s1142 + $0x38] sm:$0xff]
      %v2119 = vld [vmem:[%s1142 + $0x40] sm:$0xff]
      %v2120 = vld [vmem:[%s1142 + $0x48] sm:$0xff]
      %v2121 = vld [vmem:[%s1142 + $0x50] sm:$0xff]
      %v2122 = vld [vmem:[%s1142 + $0x58] sm:$0xff]
      %v2123 = vld [vmem:[%s1142 + $0x60] sm:$0xff]
      %v2124 = vld [vmem:[%s1142 + $0x68] sm:$0xff]
      %v2125 = vld [vmem:[%s1142 + $0x70] sm:$0xff]
      %v2126 = vld [vmem:[%s1142 + $0x78] sm:$0xff]
      %v2127 = vld [vmem:[%s1142 + $0x80] sm:$0xff]
      %v2128 = vld [vmem:[%s1142 + $0x88] sm:$0xff]
      %v2129 = vld [vmem:[%s1142 + $0x90] sm:$0xff]
      %v2130 = vld [vmem:[%s1142 + $0x98] sm:$0xff]
      %v2131 = vld [vmem:[%s1142 + $0xa0] sm:$0xff]
      %v2132 = vld [vmem:[%s1142 + $0xa8] sm:$0xff]
      %v2133 = vld [vmem:[%s1142 + $0xb0] sm:$0xff]
      %v2134 = vld [vmem:[%s1142 + $0xb8] sm:$0xff]
      %v2135 = vld [vmem:[%s1142 + $0xc0] sm:$0xff]
      %v2136 = vld [vmem:[%s1142 + $0xc8] sm:$0xff]
      %v2137 = vld [vmem:[%s1142 + $0xd0] sm:$0xff]
      %v2138 = vld [vmem:[%s1142 + $0xd8] sm:$0xff]
      %v2139 = vld [vmem:[%s1142 + $0xe0] sm:$0xff]
      %v2140 = vld [vmem:[%s1142 + $0xe8] sm:$0xff]
      %v2141 = vld [vmem:[%s1142 + $0xf0] sm:$0xff]
      %v2142 = vld [vmem:[%s1142 + $0xf8] sm:$0xff]
      %v2143 = vld [vmem:[%s1142 + $0x100] sm:$0xff]
      %v2144 = vld [vmem:[%s1142 + $0x108] sm:$0xff]
      %v2145 = vld [vmem:[%s1142 + $0x110] sm:$0xff]
      %v2146 = vld [vmem:[%s1142 + $0x118] sm:$0xff]
      %v2147 = vld [vmem:[%s1142 + $0x120] sm:$0xff]
      %v2148 = vld [vmem:[%s1142 + $0x128] sm:$0xff]
      %v2149 = vld [vmem:[%s1142 + $0x130] sm:$0xff]
      %v2150 = vld [vmem:[%s1142 + $0x138] sm:$0xff]
      %v2151 = vld [vmem:[%s1142 + $0x140] sm:$0xff]
      %v2152 = vld [vmem:[%s1142 + $0x148] sm:$0xff]
      %v2153 = vld [vmem:[%s1142 + $0x150] sm:$0xff]
      %v2154 = vld [vmem:[%s1142 + $0x158] sm:$0xff]
      %v2155 = vld [vmem:[%s1142 + $0x160] sm:$0xff]
      %v2156 = vld [vmem:[%s1142 + $0x168] sm:$0xff]
      %v2157 = vld [vmem:[%s1142 + $0x170] sm:$0xff]
      %v2158 = vld [vmem:[%s1142 + $0x178] sm:$0xff]
      %2159 = vmatpush.msra.mxu0 %v2126
      %2160 = vmatpush.msra.mxu0 %v2125
      %2161 = vmatpush.msra.mxu0 %v2124
      %2162 = vmatpush.msra.mxu0 %v2123
      %2163 = vmatpush.msra.mxu0 %v2122
      %2164 = vmatpush.msra.mxu0 %v2121
      %2165 = vmatpush.msra.mxu0 %v2120
      %2166 = vmatpush.msra.mxu0 %v2119
      %2167 = vmatpush.msra.mxu0 %v2118
      %2168 = vmatpush.msra.mxu0 %v2117
      %2169 = vmatpush.msra.mxu0 %v2116
      %2170 = vmatpush.msra.mxu0 %v2115
      %2171 = vmatpush.msra.mxu0 %v2114
      %2172 = vmatpush.msra.mxu0 %v2113
      %2173 = vmatpush.msra.mxu0 %v2112
      %2174 = vmatpush.msra.mxu0 %v2111
      %2175 = vmatmul.f32.gmra.mxu0 %v2063
      %v2176 = vpop.f32.mrf.mxu0
      %v2177 = vadd.f32 0.0, %v2176
      %2178 = vmatmul.f32.gmra.mxu0 %v2064
      %v2179 = vpop.f32.mrf.mxu0
      %v2180 = vadd.f32 0.0, %v2179
      %2181 = vmatmul.f32.gmra.mxu0 %v2065
      %v2182 = vpop.f32.mrf.mxu0
      %v2183 = vadd.f32 0.0, %v2182
      %2184 = vmatmul.f32.gmra.mxu0 %v2066
      %v2185 = vpop.f32.mrf.mxu0
      %v2186 = vadd.f32 0.0, %v2185
      %2187 = vmatmul.f32.gmra.mxu0 %v2067
      %v2188 = vpop.f32.mrf.mxu0
      %v2189 = vadd.f32 0.0, %v2188
      %2190 = vmatmul.f32.gmra.mxu0 %v2068
      %v2191 = vpop.f32.mrf.mxu0
      %v2192 = vadd.f32 0.0, %v2191
      %2193 = vmatmul.f32.gmra.mxu0 %v2069
      %v2194 = vpop.f32.mrf.mxu0
      %v2195 = vadd.f32 0.0, %v2194
      %2196 = vmatmul.f32.gmra.mxu0 %v2070
      %v2197 = vpop.f32.mrf.mxu0
      %v2198 = vadd.f32 0.0, %v2197
      %2199 = vmatmul.f32.gmra.mxu0 %v2071
      %v2200 = vpop.f32.mrf.mxu0
      %v2201 = vadd.f32 0.0, %v2200
      %2202 = vmatmul.f32.gmra.mxu0 %v2072
      %v2203 = vpop.f32.mrf.mxu0
      %v2204 = vadd.f32 0.0, %v2203
      %2205 = vmatmul.f32.gmra.mxu0 %v2073
      %v2206 = vpop.f32.mrf.mxu0
      %v2207 = vadd.f32 0.0, %v2206
      %2208 = vmatmul.f32.gmra.mxu0 %v2074
      %v2209 = vpop.f32.mrf.mxu0
      %v2210 = vadd.f32 0.0, %v2209
      %2211 = vmatmul.f32.gmra.mxu0 %v2075
      %v2212 = vpop.f32.mrf.mxu0
      %v2213 = vadd.f32 0.0, %v2212
      %2214 = vmatmul.f32.gmra.mxu0 %v2076
      %v2215 = vpop.f32.mrf.mxu0
      %v2216 = vadd.f32 0.0, %v2215
      %2217 = vmatmul.f32.gmra.mxu0 %v2077
      %v2218 = vpop.f32.mrf.mxu0
      %v2219 = vadd.f32 0.0, %v2218
      %2220 = vmatmul.f32.gmra.mxu0 %v2078
      %v2221 = vpop.f32.mrf.mxu0
      %v2222 = vadd.f32 0.0, %v2221
      %2223 = vdwg.mxu0
      %2224 = vmatpush.msra.mxu0 %v2142
      %2225 = vmatpush.msra.mxu0 %v2141
      %2226 = vmatpush.msra.mxu0 %v2140
      %2227 = vmatpush.msra.mxu0 %v2139
      %2228 = vmatpush.msra.mxu0 %v2138
      %2229 = vmatpush.msra.mxu0 %v2137
      %2230 = vmatpush.msra.mxu0 %v2136
      %2231 = vmatpush.msra.mxu0 %v2135
      %2232 = vmatpush.msra.mxu0 %v2134
      %2233 = vmatpush.msra.mxu0 %v2133
      %2234 = vmatpush.msra.mxu0 %v2132
      %2235 = vmatpush.msra.mxu0 %v2131
      %2236 = vmatpush.msra.mxu0 %v2130
      %2237 = vmatpush.msra.mxu0 %v2129
      %2238 = vmatpush.msra.mxu0 %v2128
      %2239 = vmatpush.msra.mxu0 %v2127
      %2240 = vmatmul.f32.gmra.mxu0 %v2079
      %v2241 = vpop.f32.mrf.mxu0
      %v2242 = vadd.f32 %v2177, %v2241
      %2243 = vmatmul.f32.gmra.mxu0 %v2080
      %v2244 = vpop.f32.mrf.mxu0
      %v2245 = vadd.f32 %v2180, %v2244
      %2246 = vmatmul.f32.gmra.mxu0 %v2081
      %v2247 = vpop.f32.mrf.mxu0
      %v2248 = vadd.f32 %v2183, %v2247
      %2249 = vmatmul.f32.gmra.mxu0 %v2082
      %v2250 = vpop.f32.mrf.mxu0
      %v2251 = vadd.f32 %v2186, %v2250
      %2252 = vmatmul.f32.gmra.mxu0 %v2083
      %v2253 = vpop.f32.mrf.mxu0
      %v2254 = vadd.f32 %v2189, %v2253
      %2255 = vmatmul.f32.gmra.mxu0 %v2084
      %v2256 = vpop.f32.mrf.mxu0
      %v2257 = vadd.f32 %v2192, %v2256
      %2258 = vmatmul.f32.gmra.mxu0 %v2085
      %v2259 = vpop.f32.mrf.mxu0
      %v2260 = vadd.f32 %v2195, %v2259
      %2261 = vmatmul.f32.gmra.mxu0 %v2086
      %v2262 = vpop.f32.mrf.mxu0
      %v2263 = vadd.f32 %v2198, %v2262
      %2264 = vmatmul.f32.gmra.mxu0 %v2087
      %v2265 = vpop.f32.mrf.mxu0
      %v2266 = vadd.f32 %v2201, %v2265
      %2267 = vmatmul.f32.gmra.mxu0 %v2088
      %v2268 = vpop.f32.mrf.mxu0
      %v2269 = vadd.f32 %v2204, %v2268
      %2270 = vmatmul.f32.gmra.mxu0 %v2089
      %v2271 = vpop.f32.mrf.mxu0
      %v2272 = vadd.f32 %v2207, %v2271
      %2273 = vmatmul.f32.gmra.mxu0 %v2090
      %v2274 = vpop.f32.mrf.mxu0
      %v2275 = vadd.f32 %v2210, %v2274
      %2276 = vmatmul.f32.gmra.mxu0 %v2091
      %v2277 = vpop.f32.mrf.mxu0
      %v2278 = vadd.f32 %v2213, %v2277
      %2279 = vmatmul.f32.gmra.mxu0 %v2092
      %v2280 = vpop.f32.mrf.mxu0
      %v2281 = vadd.f32 %v2216, %v2280
      %2282 = vmatmul.f32.gmra.mxu0 %v2093
      %v2283 = vpop.f32.mrf.mxu0
      %v2284 = vadd.f32 %v2219, %v2283
      %2285 = vmatmul.f32.gmra.mxu0 %v2094
      %v2286 = vpop.f32.mrf.mxu0
      %v2287 = vadd.f32 %v2222, %v2286
      %2288 = vdwg.mxu0
      %2289 = vmatpush.msra.mxu0 %v2158
      %2290 = vmatpush.msra.mxu0 %v2157
      %2291 = vmatpush.msra.mxu0 %v2156
      %2292 = vmatpush.msra.mxu0 %v2155
      %2293 = vmatpush.msra.mxu0 %v2154
      %2294 = vmatpush.msra.mxu0 %v2153
      %2295 = vmatpush.msra.mxu0 %v2152
      %2296 = vmatpush.msra.mxu0 %v2151
      %2297 = vmatpush.msra.mxu0 %v2150
      %2298 = vmatpush.msra.mxu0 %v2149
      %2299 = vmatpush.msra.mxu0 %v2148
      %2300 = vmatpush.msra.mxu0 %v2147
      %2301 = vmatpush.msra.mxu0 %v2146
      %2302 = vmatpush.msra.mxu0 %v2145
      %2303 = vmatpush.msra.mxu0 %v2144
      %2304 = vmatpush.msra.mxu0 %v2143
      %2305 = vmatmul.f32.gmra.mxu0 %v2095
      %v2306 = vpop.f32.mrf.mxu0
      %v2307 = vadd.f32 %v2242, %v2306
      %2308 = vmatmul.f32.gmra.mxu0 %v2096
      %v2309 = vpop.f32.mrf.mxu0
      %v2310 = vadd.f32 %v2245, %v2309
      %2311 = vmatmul.f32.gmra.mxu0 %v2097
      %v2312 = vpop.f32.mrf.mxu0
      %v2313 = vadd.f32 %v2248, %v2312
      %2314 = vmatmul.f32.gmra.mxu0 %v2098
      %v2315 = vpop.f32.mrf.mxu0
      %v2316 = vadd.f32 %v2251, %v2315
      %2317 = vmatmul.f32.gmra.mxu0 %v2099
      %v2318 = vpop.f32.mrf.mxu0
      %v2319 = vadd.f32 %v2254, %v2318
      %2320 = vmatmul.f32.gmra.mxu0 %v2100
      %v2321 = vpop.f32.mrf.mxu0
      %v2322 = vadd.f32 %v2257, %v2321
      %2323 = vmatmul.f32.gmra.mxu0 %v2101
      %v2324 = vpop.f32.mrf.mxu0
      %v2325 = vadd.f32 %v2260, %v2324
      %2326 = vmatmul.f32.gmra.mxu0 %v2102
      %v2327 = vpop.f32.mrf.mxu0
      %v2328 = vadd.f32 %v2263, %v2327
      %2329 = vmatmul.f32.gmra.mxu0 %v2103
      %v2330 = vpop.f32.mrf.mxu0
      %v2331 = vadd.f32 %v2266, %v2330
      %2332 = vmatmul.f32.gmra.mxu0 %v2104
      %v2333 = vpop.f32.mrf.mxu0
      %v2334 = vadd.f32 %v2269, %v2333
      %2335 = vmatmul.f32.gmra.mxu0 %v2105
      %v2336 = vpop.f32.mrf.mxu0
      %v2337 = vadd.f32 %v2272, %v2336
      %2338 = vmatmul.f32.gmra.mxu0 %v2106
      %v2339 = vpop.f32.mrf.mxu0
      %v2340 = vadd.f32 %v2275, %v2339
      %2341 = vmatmul.f32.gmra.mxu0 %v2107
      %v2342 = vpop.f32.mrf.mxu0
      %v2343 = vadd.f32 %v2278, %v2342
      %2344 = vmatmul.f32.gmra.mxu0 %v2108
      %v2345 = vpop.f32.mrf.mxu0
      %v2346 = vadd.f32 %v2281, %v2345
      %2347 = vmatmul.f32.gmra.mxu0 %v2109
      %v2348 = vpop.f32.mrf.mxu0
      %v2349 = vadd.f32 %v2284, %v2348
      %2350 = vmatmul.f32.gmra.mxu0 %v2110
      %v2351 = vpop.f32.mrf.mxu0
      %v2352 = vadd.f32 %v2287, %v2351
      %2353 = vdwg.mxu0
      %v2354 = vadd.f32 %v2015, %v2307
      %v2355 = vadd.f32 %v2018, %v2310
      %v2356 = vadd.f32 %v2021, %v2313
      %v2357 = vadd.f32 %v2024, %v2316
      %v2358 = vadd.f32 %v2027, %v2319
      %v2359 = vadd.f32 %v2030, %v2322
      %v2360 = vadd.f32 %v2033, %v2325
      %v2361 = vadd.f32 %v2036, %v2328
      %v2362 = vadd.f32 %v2039, %v2331
      %v2363 = vadd.f32 %v2042, %v2334
      %v2364 = vadd.f32 %v2045, %v2337
      %v2365 = vadd.f32 %v2048, %v2340
      %v2366 = vadd.f32 %v2051, %v2343
      %v2367 = vadd.f32 %v2054, %v2346
      %v2368 = vadd.f32 %v2057, %v2349
      %v2369 = vadd.f32 %v2060, %v2352
      %s2370 = scalar_lea.vmem %s231, 128
      %2371 = vst [vmem:[%s2370] sm:$0xff] %v2354
      %2372 = vst [vmem:[%s2370 + $0x8] sm:$0xff] %v2355
      %2373 = vst [vmem:[%s2370 + $0x10] sm:$0xff] %v2356
      %2374 = vst [vmem:[%s2370 + $0x18] sm:$0xff] %v2357
      %2375 = vst [vmem:[%s2370 + $0x20] sm:$0xff] %v2358
      %2376 = vst [vmem:[%s2370 + $0x28] sm:$0xff] %v2359
      %2377 = vst [vmem:[%s2370 + $0x30] sm:$0xff] %v2360
      %2378 = vst [vmem:[%s2370 + $0x38] sm:$0xff] %v2361
      %2379 = vst [vmem:[%s2370 + $0x40] sm:$0xff] %v2362
      %2380 = vst [vmem:[%s2370 + $0x48] sm:$0xff] %v2363
      %2381 = vst [vmem:[%s2370 + $0x50] sm:$0xff] %v2364
      %2382 = vst [vmem:[%s2370 + $0x58] sm:$0xff] %v2365
      %2383 = vst [vmem:[%s2370 + $0x60] sm:$0xff] %v2366
      %2384 = vst [vmem:[%s2370 + $0x68] sm:$0xff] %v2367
      %2385 = vst [vmem:[%s2370 + $0x70] sm:$0xff] %v2368
      %2386 = vst [vmem:[%s2370 + $0x78] sm:$0xff] %v2369
      %v2387 = vadd.f32 %v2354, %v2355
      %v2388 = vadd.f32 %v2387, %v2356
      %v2389 = vadd.f32 %v2388, %v2357
      %v2390 = vadd.f32 %v2389, %v2358
      %v2391 = vadd.f32 %v2390, %v2359
      %v2392 = vadd.f32 %v2391, %v2360
      %v2393 = vadd.f32 %v2392, %v2361
      %v2394 = vadd.f32 %v2393, %v2362
      %v2395 = vadd.f32 %v2394, %v2363
      %v2396 = vadd.f32 %v2395, %v2364
      %v2397 = vadd.f32 %v2396, %v2365
      %v2398 = vadd.f32 %v2397, %v2366
      %v2399 = vadd.f32 %v2398, %v2367
      %v2400 = vadd.f32 %v2399, %v2368
      %v2401 = vadd.f32 %v2400, %v2369
      %v2402 = vrot.slane %v2401, 4
      %v2403 = vadd.f32 %v2401, %v2402
      %v2404 = vrot.slane %v2403, 2
      %v2405 = vadd.f32 %v2403, %v2404
      %v2406 = vrot.slane %v2405, 1
      %v2407 = vadd.f32 %v2405, %v2406
      %v2408 = vadd.f32 %v1439, %v2407
      %v2409 = vmul.f32 %v2354, %v2354
      %v2410 = vmul.f32 %v2355, %v2355
      %v2411 = vmul.f32 %v2356, %v2356
      %v2412 = vmul.f32 %v2357, %v2357
      %v2413 = vmul.f32 %v2358, %v2358
      %v2414 = vmul.f32 %v2359, %v2359
      %v2415 = vmul.f32 %v2360, %v2360
      %v2416 = vmul.f32 %v2361, %v2361
      %v2417 = vmul.f32 %v2362, %v2362
      %v2418 = vmul.f32 %v2363, %v2363
      %v2419 = vmul.f32 %v2364, %v2364
      %v2420 = vmul.f32 %v2365, %v2365
      %v2421 = vmul.f32 %v2366, %v2366
      %v2422 = vmul.f32 %v2367, %v2367
      %v2423 = vmul.f32 %v2368, %v2368
      %v2424 = vmul.f32 %v2369, %v2369
      %v2425 = vadd.f32 %v2409, %v2410
      %v2426 = vadd.f32 %v2425, %v2411
      %v2427 = vadd.f32 %v2426, %v2412
      %v2428 = vadd.f32 %v2427, %v2413
      %v2429 = vadd.f32 %v2428, %v2414
      %v2430 = vadd.f32 %v2429, %v2415
      %v2431 = vadd.f32 %v2430, %v2416
      %v2432 = vadd.f32 %v2431, %v2417
      %v2433 = vadd.f32 %v2432, %v2418
      %v2434 = vadd.f32 %v2433, %v2419
      %v2435 = vadd.f32 %v2434, %v2420
      %v2436 = vadd.f32 %v2435, %v2421
      %v2437 = vadd.f32 %v2436, %v2422
      %v2438 = vadd.f32 %v2437, %v2423
      %v2439 = vadd.f32 %v2438, %v2424
      %v2440 = vrot.slane %v2439, 4
      %v2441 = vadd.f32 %v2439, %v2440
      %v2442 = vrot.slane %v2441, 2
      %v2443 = vadd.f32 %v2441, %v2442
      %v2444 = vrot.slane %v2443, 1
      %v2445 = vadd.f32 %v2443, %v2444
      %v2446 = vadd.f32 %v1477, %v2445
      %vm2447 = vcmask 1040384
      %v2448 = vsel %vm2447, %v2408, %v2446
      %2449 = vst [vmem:[%s235] sm:$0x3] %v2448
      %p2450 = scmp.lt.s32.totalorder %s17, 1
      %s2451 = scalar_select %p2450, %s17, 1
      %s2452 = smul.addr %s2451, 32
      %s2453 = smul.addr %s2452, 8
      %s2454 = scalar_lea.vmem %s4, %s2453
      %p2455 = scmp.lt.s32.totalorder %s17, 1
      %s2456 = scalar_select %p2455, %s17, 1
      %s2457 = smul.addr %s2456, 2
      %s2458 = scalar_lea.vmem %s5, %s2457
      // Predicated region
      $region37: #{residual_block.3} parent=35 // pred_check
        %p2459 = pneg %p124
      $region38: #{residual_block.3} parent=35 // pred_check_branch
        %2461 = sbr.rel (%p2459) target = $region40
      $region39: #{residual_block.3} parent=35 // pred_region
        _
      $region40: #{residual_block.3} parent=35 // pred_fallthru
        _
      // Predicated region
      $region41: #{residual_block.3} parent=35 // pred_check
        %p2462 = pneg %p150
      $region42: #{residual_block.3} parent=35 // pred_check_branch
        %2464 = sbr.rel (%p2462) target = $region44
      $region43: #{residual_block.3} parent=35 // pred_region
        _
      $region44: #{residual_block.3} parent=35 // pred_fallthru
        _
    $region36: #{residual_block.3} parent=5 // pred_fallthru
      _
    %p2465 = scmp.le.s32.totalorder 2, %s12
    // Predicated region
    $region45: #{residual_block.3} parent=5 // pred_check
      %p2466 = pneg %p2465
    $region46: #{residual_block.3} parent=5 // pred_check_branch
      %2468 = sbr.rel (%p2466) target = $region48
    $region47: #{residual_block.3} parent=5 // pred_region
      %s2469 = ssub.s32 %s12, 2
      // Predicated region
      $region49: #{residual_block.3} parent=47 // pred_check
        %p2470 = pneg %p130
      $region50: #{residual_block.3} parent=47 // pred_check_branch
        %2472 = sbr.rel (%p2470) target = $region52
      $region51: #{residual_block.3} parent=47 // pred_region
        %p2473 = scmp.lt.s32.totalorder %s18, 1
        %s2474 = scalar_select %p2473, %s18, 1
        %s2475 = smul.addr %s2474, 32
        %s2476 = smul.addr %s2475, 8
        %s2477 = scalar_lea.vmem %s4, %s2476
      $region52: #{residual_block.3} parent=47 // pred_fallthru
        _
      // Predicated region
      $region53: #{residual_block.3} parent=47 // pred_check
        %p2478 = pneg %p156
      $region54: #{residual_block.3} parent=47 // pred_check_branch
        %2480 = sbr.rel (%p2478) target = $region56
      $region55: #{residual_block.3} parent=47 // pred_region
        %p2481 = scmp.lt.s32.totalorder %s18, 1
        %s2482 = scalar_select %p2481, %s18, 1
        %s2483 = smul.addr %s2482, 2
        %s2484 = scalar_lea.vmem %s5, %s2483
      $region56: #{residual_block.3} parent=47 // pred_fallthru
        _
    $region48: #{residual_block.3} parent=5 // pred_fallthru
      _
  $region6: #{residual_block.3} parent=0 // loop_footer
    %s16 = sadd.s32 1, %s12
  $region7: #{residual_block.3} parent=0 // loop_footer_branch
    %11 = sbr.rel target = $region3
  $region8: #{residual_block.3} parent=0 // loop_exit
    _

</llo_original>
